<compile_context>
chip_gen: v7x
topology: tpu7x:2x2x1
jax: 0.10.0
libtpu: 0.0.40
codegen_flags: <defaults>
</compile_context>

<pallas_src>
import functools

import jax
import jax.numpy as jnp
from jax.experimental import pallas as pl
from jax.experimental.pallas import tpu as pltpu

BN_EPS = 1e-5
LANE = 128


def _round_up(x, m):
    return (x + m - 1) // m * m


# ---------------------------------------------------------------------------
# Fused BasicBlock kernel (one grid step == one batch element)
# ---------------------------------------------------------------------------
def _basic_block_kernel(x_ref, w1_ref, b1_ref, w2_ref, b2_ref, *rest,
                        stride, has_sc_conv):
    """conv1(3x3,s)+bn1+relu -> conv2(3x3,1)+bn2 + shortcut + relu, all fused.

    x_ref  : (1, s*s*Hq, Wq, Cin_p) phase-split, halo- and channel-padded input
    w1_ref : (9*Cin_p, Cout_p)  conv1 weights, BN1 scale folded, im2col (ky,kx,ci) order
    b1_ref : (1, Cout_p)        folded BN1 bias (f32)
    w2_ref : (9*Cout_p, Cout_p) conv2 weights, BN2 scale folded
    b2_ref : (1, Cout_p)        folded BN2 bias (f32)
    rest   : [wsc_ref (Cin_p,Cout_p), bsc_ref (1,Cout_p),]  o_ref, out1_scratch
    """
    if has_sc_conv:
        wsc_ref, bsc_ref, o_ref, out1_ref = rest
    else:
        o_ref, out1_ref = rest

    _, Ho, Wo, Cp = o_ref.shape
    Cin_p = x_ref.shape[-1]
    s = stride
    Hq = x_ref.shape[1] // (s * s)

    def tap(ky, kx):
        # padded-x element (s*i + ky, s*j + kx) lives in phase (ky % s, kx % s) at
        # (i + ky // s, j + kx // s); phases are stacked along the row axis, so every
        # tap is a contiguous unit-stride window (no strided slicing in-kernel).
        base = ((ky % s) * s + (kx % s)) * Hq + ky // s
        c0 = kx // s
        return x_ref[0, base:base + Ho, c0:c0 + Wo, :].reshape(Ho * Wo, Cin_p)

    # ---- conv1 (3x3, stride s) + bn1 + relu : single im2col MXU matmul ----
    patch1 = jnp.concatenate([tap(ky, kx) for ky in range(3) for kx in range(3)],
                             axis=-1)                            # (Ho*Wo, 9*Cin_p)
    acc1 = jnp.dot(patch1, w1_ref[...], preferred_element_type=jnp.float32)
    out1 = jnp.maximum(acc1 + b1_ref[...], 0.0)

    # stash out1 in a zero-haloed VMEM scratch (stays on-chip)
    out1_ref[...] = jnp.zeros_like(out1_ref)
    out1_ref[1:Ho + 1, 1:Wo + 1, :] = out1.reshape(Ho, Wo, Cp).astype(out1_ref.dtype)

    # ---- shortcut : strided x (= x[::s, ::s]) is exactly tap (1, 1) of padded x ----
    xs = tap(1, 1)
    if has_sc_conv:
        res = jnp.dot(xs, wsc_ref[...], preferred_element_type=jnp.float32) + bsc_ref[...]
    else:
        res = xs.astype(jnp.float32)        # identity (stride 1, Cin == Cout)

    # ---- conv2 (3x3, stride 1) + bn2 + residual add + relu ----
    patch2 = jnp.concatenate(
        [out1_ref[ky:ky + Ho, kx:kx + Wo, :].reshape(Ho * Wo, Cp)
         for ky in range(3) for kx in range(3)], axis=-1)        # (Ho*Wo, 9*Cout_p)
    acc2 = jnp.dot(patch2, w2_ref[...], preferred_element_type=jnp.float32)
    out = jnp.maximum(acc2 + b2_ref[...] + res, 0.0)
    o_ref[...] = out.reshape(1, Ho, Wo, Cp).astype(o_ref.dtype)


# ---------------------------------------------------------------------------
# Wrapper: BN folding, channel/halo padding, phase split, pallas_call
# ---------------------------------------------------------------------------
def _fold_bn(p):
    scale = p["gamma"] / jnp.sqrt(p["var"] + BN_EPS)
    bias = p["beta"] - p["mean"] * scale
    return scale, bias


def basic_block_forward(x_nchw, params, stride, *, compute_dtype=jnp.bfloat16):
    """Forward pass of the PyTorch BasicBlock (eval-mode BN). NCHW in / NCHW out."""
    s = int(stride)
    x = jnp.transpose(x_nchw, (0, 2, 3, 1))                      # NCHW -> NHWC
    N, H, W, Cin = x.shape
    Cout = params["w1"].shape[-1]
    assert H % s == 0 and W % s == 0 and (H + 2) % s == 0 and (W + 2) % s == 0
    Ho, Wo = H // s, W // s

    has_sc = "w_sc" in params
    if not has_sc:
        assert s == 1 and Cin == Cout, "identity shortcut needs stride=1 and Cin==Cout"

    Cin_p = _round_up(Cin, LANE)
    Cout_p = _round_up(Cout, LANE)

    # fold BN scales into conv weights; pad channels to lane multiples; cast
    s1, b1 = _fold_bn(params["bn1"])
    s2, b2 = _fold_bn(params["bn2"])

    def prep_w3x3(w, scale, cin_p):
        w = w * scale[None, None, None, :]                       # fold BN scale (f32)
        w = jnp.pad(w, ((0, 0), (0, 0),
                        (0, cin_p - w.shape[2]), (0, Cout_p - w.shape[3])))
        return w.reshape(9 * cin_p, Cout_p).astype(compute_dtype)

    def prep_b(b):
        return jnp.pad(b, (0, Cout_p - b.shape[0])).reshape(1, Cout_p).astype(jnp.float32)

    w1f, b1p = prep_w3x3(params["w1"], s1, Cin_p), prep_b(b1)
    w2f, b2p = prep_w3x3(params["w2"], s2, Cout_p), prep_b(b2)

    # single pad pass: 1-px spatial halo + channel pad, then split spatial phases so
    # stride-s conv taps become contiguous windows inside the kernel
    xpad = jnp.pad(x, ((0, 0), (1, 1), (1, 1), (0, Cin_p - Cin))).astype(compute_dtype)
    Hp, Wp = H + 2, W + 2
    Hq, Wq = Hp // s, Wp // s
    xprep = (xpad.reshape(N, Hq, s, Wq, s, Cin_p)
                 .transpose(0, 2, 4, 1, 3, 5)                    # (N, s, s, Hq, Wq, C)
                 .reshape(N, s * s * Hq, Wq, Cin_p))             # phases stacked on rows

    extra_in, extra_specs = [], []
    if has_sc:
        ssc, bsc = _fold_bn(params["bn_sc"])
        wsc = params["w_sc"] * ssc[None, :]
        wsc = jnp.pad(wsc, ((0, Cin_p - Cin), (0, Cout_p - Cout))).astype(compute_dtype)
        extra_in = [wsc, prep_b(bsc)]
        extra_specs = [pl.BlockSpec((Cin_p, Cout_p), lambda n: (0, 0)),
                       pl.BlockSpec((1, Cout_p), lambda n: (0, 0))]

    kern = functools.partial(_basic_block_kernel, stride=s, has_sc_conv=has_sc)
    out = pl.pallas_call(
        kern,
        out_shape=jax.ShapeDtypeStruct((N, Ho, Wo, Cout_p), jnp.float32),
        grid=(N,),
        in_specs=[
            pl.BlockSpec((1, s * s * Hq, Wq, Cin_p), lambda n: (n, 0, 0, 0)),
            pl.BlockSpec((9 * Cin_p, Cout_p), lambda n: (0, 0)),
            pl.BlockSpec((1, Cout_p), lambda n: (0, 0)),
            pl.BlockSpec((9 * Cout_p, Cout_p), lambda n: (0, 0)),
            pl.BlockSpec((1, Cout_p), lambda n: (0, 0)),
        ] + extra_specs,
        out_specs=pl.BlockSpec((1, Ho, Wo, Cout_p), lambda n: (n, 0, 0, 0)),
        scratch_shapes=[pltpu.VMEM((Ho + 2, Wo + 2, Cout_p), compute_dtype)],
        compiler_params=pltpu.CompilerParams(dimension_semantics=("parallel",)),
    )(xprep, w1f, b1p, w2f, b2p, *extra_in)

    out = out[..., :Cout]                                        # drop lane padding
    return jnp.transpose(out, (0, 3, 1, 2)).astype(x_nchw.dtype)  # NHWC -> NCHW


# ---------------------------------------------------------------------------
# Pure-JAX reference (for correctness check)
# ---------------------------------------------------------------------------
def reference_forward(x_nchw, params, stride):
    dn = ("NHWC", "HWIO", "NHWC")
    prec = jax.lax.Precision.HIGHEST
    x = jnp.transpose(x_nchw, (0, 2, 3, 1))

    def bn(v, p):
        scale = p["gamma"] / jnp.sqrt(p["var"] + BN_EPS)
        return v * scale + (p["beta"] - p["mean"] * scale)

    out = jax.lax.conv_general_dilated(x, params["w1"], (stride, stride),
                                       ((1, 1), (1, 1)), dimension_numbers=dn,
                                       precision=prec)
    out = jax.nn.relu(bn(out, params["bn1"]))
    out = jax.lax.conv_general_dilated(out, params["w2"], (1, 1),
                                       ((1, 1), (1, 1)), dimension_numbers=dn,
                                       precision=prec)
    out = bn(out, params["bn2"])
    if "w_sc" in params:
        w_sc = params["w_sc"][None, None]                        # (1,1,Cin,Cout)
        sc = jax.lax.conv_general_dilated(x, w_sc, (stride, stride),
                                          ((0, 0), (0, 0)), dimension_numbers=dn,
                                          precision=prec)
        sc = bn(sc, params["bn_sc"])
    else:
        sc = x
    out = jax.nn.relu(out + sc)
    return jnp.transpose(out, (0, 3, 1, 2))


# ---------------------------------------------------------------------------
if __name__ == "__main__":
    root = jax.random.PRNGKey(0)
    N, H, W = 2, 16, 16

    def bn_params(k, c):
        k0, k1, k2, k3 = jax.random.split(k, 4)
        return {
            "gamma": jax.random.uniform(k0, (c,), jnp.float32, 0.5, 1.5),
            "beta": jax.random.normal(k1, (c,), jnp.float32) * 0.1,
            "mean": jax.random.normal(k2, (c,), jnp.float32) * 0.1,
            "var": jax.random.uniform(k3, (c,), jnp.float32, 0.5, 1.5),
        }

    def make_params(k, cin, cout, stride):
        ks = jax.random.split(k, 6)
        p = {
            "w1": jax.random.normal(ks[0], (3, 3, cin, cout), jnp.float32) * 0.1,
            "bn1": bn_params(ks[1], cout),
            "w2": jax.random.normal(ks[2], (3, 3, cout, cout), jnp.float32) * 0.1,
            "bn2": bn_params(ks[3], cout),
        }
        if stride != 1 or cin != cout:
            p["w_sc"] = jax.random.normal(ks[4], (cin, cout), jnp.float32) * 0.1
            p["bn_sc"] = bn_params(ks[5], cout)
        return p

    # (in_planes, planes, stride, compute dtype, abs tolerance vs f32 reference)
    configs = [
        (4, 8, 2, jnp.bfloat16, 1e-1),   # strided block, 1x1-conv+bn shortcut (fast path)
        (8, 8, 1, jnp.bfloat16, 1e-1),   # identity shortcut
        (4, 8, 2, jnp.float32, 3e-2),    # f32 path, tighter check of conv indexing
    ]
    for idx, (cin, cout, stride, cdt, tol) in enumerate(configs):
        kp, kx = jax.random.split(jax.random.fold_in(root, idx))
        params = make_params(kp, cin, cout, stride)
        x = jax.random.normal(kx, (N, cin, H, W), jnp.float32)

        out = jax.block_until_ready(
            basic_block_forward(x, params, stride, compute_dtype=cdt))
        ref = jax.block_until_ready(reference_forward(x, params, stride))

        assert out.shape == (N, cout, H // stride, W // stride), out.shape
        max_err = float(jnp.max(jnp.abs(out - ref)))
        assert max_err < tol, f"config {idx}: max err {max_err} >= {tol}"

    print("KERNEL_OK")
</pallas_src>

<mosaic_0001>
module attributes {stable_mosaic.version = 11 : i64} {
  func.func @_basic_block_kernel(%arg0: i32, %arg1: memref<1x36x9x128xbf16, #tpu.memory_space<vmem>>, %arg2: memref<1152x128xbf16, #tpu.memory_space<vmem>>, %arg3: memref<1x128xf32, #tpu.memory_space<vmem>>, %arg4: memref<1152x128xbf16, #tpu.memory_space<vmem>>, %arg5: memref<1x128xf32, #tpu.memory_space<vmem>>, %arg6: memref<128x128xbf16, #tpu.memory_space<vmem>>, %arg7: memref<1x128xf32, #tpu.memory_space<vmem>>, %arg8: memref<1x8x8x128xf32, #tpu.memory_space<vmem>>, %arg9: memref<10x10x128xbf16, #tpu.memory_space<vmem>>) attributes {dimension_semantics = [#tpu.dimension_semantics<parallel>], iteration_bounds = array<i64: 2>, scalar_prefetch = 0 : i64, scratch_operands = 1 : i64, tpu.core_type = #tpu.core_type<tc>, window_params = [{transform_indices = @transform_0, window_bounds = array<i64: 1, 36, 9, 128>}, {pipeline_mode = #tpu.pipeline_mode<synchronous>, transform_indices = @transform_1, window_bounds = array<i64: 1152, 128>}, {pipeline_mode = #tpu.pipeline_mode<synchronous>, transform_indices = @transform_2, window_bounds = array<i64: 1, 128>}, {pipeline_mode = #tpu.pipeline_mode<synchronous>, transform_indices = @transform_3, window_bounds = array<i64: 1152, 128>}, {pipeline_mode = #tpu.pipeline_mode<synchronous>, transform_indices = @transform_4, window_bounds = array<i64: 1, 128>}, {pipeline_mode = #tpu.pipeline_mode<synchronous>, transform_indices = @transform_5, window_bounds = array<i64: 128, 128>}, {pipeline_mode = #tpu.pipeline_mode<synchronous>, transform_indices = @transform_6, window_bounds = array<i64: 1, 128>}, {transform_indices = @transform_7, window_bounds = array<i64: 1, 8, 8, 128>}]} {
    %c0 = arith.constant 0 : index
    %c0_0 = arith.constant 0 : index
    %c0_1 = arith.constant 0 : index
    %c0_2 = arith.constant 0 : index
    %0 = vector.load %arg1[%c0, %c0_0, %c0_1, %c0_2] : memref<1x36x9x128xbf16, #tpu.memory_space<vmem>>, vector<1x8x8x128xbf16>
    %1 = vector.shape_cast %0 : vector<1x8x8x128xbf16> to vector<8x8x128xbf16>
    %2 = vector.shape_cast %1 : vector<8x8x128xbf16> to vector<64x128xbf16>
    %c0_3 = arith.constant 0 : index
    %c9 = arith.constant 9 : index
    %c0_4 = arith.constant 0 : index
    %c0_5 = arith.constant 0 : index
    %3 = vector.load %arg1[%c0_3, %c9, %c0_4, %c0_5] : memref<1x36x9x128xbf16, #tpu.memory_space<vmem>>, vector<1x8x8x128xbf16>
    %4 = vector.shape_cast %3 : vector<1x8x8x128xbf16> to vector<8x8x128xbf16>
    %5 = vector.shape_cast %4 : vector<8x8x128xbf16> to vector<64x128xbf16>
    %c0_6 = arith.constant 0 : index
    %c0_7 = arith.constant 0 : index
    %c1 = arith.constant 1 : index
    %c0_8 = arith.constant 0 : index
    %6 = vector.load %arg1[%c0_6, %c0_7, %c1, %c0_8] : memref<1x36x9x128xbf16, #tpu.memory_space<vmem>>, vector<1x8x8x128xbf16>
    %7 = vector.shape_cast %6 : vector<1x8x8x128xbf16> to vector<8x8x128xbf16>
    %8 = vector.shape_cast %7 : vector<8x8x128xbf16> to vector<64x128xbf16>
    %c0_9 = arith.constant 0 : index
    %c18 = arith.constant 18 : index
    %c0_10 = arith.constant 0 : index
    %c0_11 = arith.constant 0 : index
    %9 = vector.load %arg1[%c0_9, %c18, %c0_10, %c0_11] : memref<1x36x9x128xbf16, #tpu.memory_space<vmem>>, vector<1x8x8x128xbf16>
    %10 = vector.shape_cast %9 : vector<1x8x8x128xbf16> to vector<8x8x128xbf16>
    %11 = vector.shape_cast %10 : vector<8x8x128xbf16> to vector<64x128xbf16>
    %c0_12 = arith.constant 0 : index
    %c27 = arith.constant 27 : index
    %c0_13 = arith.constant 0 : index
    %c0_14 = arith.constant 0 : index
    %12 = vector.load %arg1[%c0_12, %c27, %c0_13, %c0_14] : memref<1x36x9x128xbf16, #tpu.memory_space<vmem>>, vector<1x8x8x128xbf16>
    %13 = vector.shape_cast %12 : vector<1x8x8x128xbf16> to vector<8x8x128xbf16>
    %14 = vector.shape_cast %13 : vector<8x8x128xbf16> to vector<64x128xbf16>
    %c0_15 = arith.constant 0 : index
    %c18_16 = arith.constant 18 : index
    %c1_17 = arith.constant 1 : index
    %c0_18 = arith.constant 0 : index
    %15 = vector.load %arg1[%c0_15, %c18_16, %c1_17, %c0_18] : memref<1x36x9x128xbf16, #tpu.memory_space<vmem>>, vector<1x8x8x128xbf16>
    %16 = vector.shape_cast %15 : vector<1x8x8x128xbf16> to vector<8x8x128xbf16>
    %17 = vector.shape_cast %16 : vector<8x8x128xbf16> to vector<64x128xbf16>
    %c0_19 = arith.constant 0 : index
    %c1_20 = arith.constant 1 : index
    %c0_21 = arith.constant 0 : index
    %c0_22 = arith.constant 0 : index
    %18 = vector.load %arg1[%c0_19, %c1_20, %c0_21, %c0_22] : memref<1x36x9x128xbf16, #tpu.memory_space<vmem>>, vector<1x8x8x128xbf16>
    %19 = vector.shape_cast %18 : vector<1x8x8x128xbf16> to vector<8x8x128xbf16>
    %20 = vector.shape_cast %19 : vector<8x8x128xbf16> to vector<64x128xbf16>
    %c0_23 = arith.constant 0 : index
    %c10 = arith.constant 10 : index
    %c0_24 = arith.constant 0 : index
    %c0_25 = arith.constant 0 : index
    %21 = vector.load %arg1[%c0_23, %c10, %c0_24, %c0_25] : memref<1x36x9x128xbf16, #tpu.memory_space<vmem>>, vector<1x8x8x128xbf16>
    %22 = vector.shape_cast %21 : vector<1x8x8x128xbf16> to vector<8x8x128xbf16>
    %23 = vector.shape_cast %22 : vector<8x8x128xbf16> to vector<64x128xbf16>
    %c0_26 = arith.constant 0 : index
    %c1_27 = arith.constant 1 : index
    %c1_28 = arith.constant 1 : index
    %c0_29 = arith.constant 0 : index
    %24 = vector.load %arg1[%c0_26, %c1_27, %c1_28, %c0_29] : memref<1x36x9x128xbf16, #tpu.memory_space<vmem>>, vector<1x8x8x128xbf16>
    %25 = vector.shape_cast %24 : vector<1x8x8x128xbf16> to vector<8x8x128xbf16>
    %26 = vector.shape_cast %25 : vector<8x8x128xbf16> to vector<64x128xbf16>
    %27 = tpu.concatenate %2, %5, %8, %11, %14, %17, %20, %23, %26 in 1 : vector<64x128xbf16>, vector<64x128xbf16>, vector<64x128xbf16>, vector<64x128xbf16>, vector<64x128xbf16>, vector<64x128xbf16>, vector<64x128xbf16>, vector<64x128xbf16>, vector<64x128xbf16> -> vector<64x1152xbf16>
    %c0_30 = arith.constant 0 : index
    %c0_31 = arith.constant 0 : index
    %28 = vector.load %arg2[%c0_30, %c0_31] : memref<1152x128xbf16, #tpu.memory_space<vmem>>, vector<1152x128xbf16>
    %cst = arith.constant dense<0.000000e+00> : vector<64x128xf32>
    %29 = tpu.matmul %27, %28, %cst {dimension_numbers = #tpu.dot_dimension_numbers<[1], [0], [0], [1], [0, 0, 1, 1], [], []>} : vector<64x1152xbf16>, vector<1152x128xbf16>, vector<64x128xf32> -> vector<64x128xf32>
    %c0_32 = arith.constant 0 : index
    %c0_33 = arith.constant 0 : index
    %30 = vector.load %arg3[%c0_32, %c0_33] : memref<1x128xf32, #tpu.memory_space<vmem>>, vector<1x128xf32>
    %31 = vector.broadcast %30 : vector<1x128xf32> to vector<64x128xf32>
    %32 = arith.addf %29, %31 : vector<64x128xf32>
    %cst_34 = arith.constant 0.000000e+00 : f32
    %33 = vector.broadcast %cst_34 : f32 to vector<64x128xf32>
    %34 = arith.maximumf %32, %33 : vector<64x128xf32>
    %cst_35 = arith.constant 0.000000e+00 : bf16
    %35 = vector.broadcast %cst_35 : bf16 to vector<10x10x128xbf16>
    %c0_36 = arith.constant 0 : index
    %c0_37 = arith.constant 0 : index
    %c0_38 = arith.constant 0 : index
    %36 = vector.load %arg9[%c0_36, %c0_37, %c0_38] : memref<10x10x128xbf16, #tpu.memory_space<vmem>>, vector<10x10x128xbf16>
    tpu.vector_store %arg9[%c0_36, %c0_37, %c0_38], %35 {strides = array<i32>} : memref<10x10x128xbf16, #tpu.memory_space<vmem>>, vector<10x10x128xbf16>,
    %37 = vector.shape_cast %34 : vector<64x128xf32> to vector<8x8x128xf32>
    %38 = arith.truncf %37 : vector<8x8x128xf32> to vector<8x8x128xbf16>
    %c1_39 = arith.constant 1 : index
    %c1_40 = arith.constant 1 : index
    %c0_41 = arith.constant 0 : index
    %39 = vector.load %arg9[%c1_39, %c1_40, %c0_41] : memref<10x10x128xbf16, #tpu.memory_space<vmem>>, vector<8x8x128xbf16>
    tpu.vector_store %arg9[%c1_39, %c1_40, %c0_41], %38 {strides = array<i32>} : memref<10x10x128xbf16, #tpu.memory_space<vmem>>, vector<8x8x128xbf16>,
    %c0_42 = arith.constant 0 : index
    %c27_43 = arith.constant 27 : index
    %c0_44 = arith.constant 0 : index
    %c0_45 = arith.constant 0 : index
    %40 = vector.load %arg1[%c0_42, %c27_43, %c0_44, %c0_45] : memref<1x36x9x128xbf16, #tpu.memory_space<vmem>>, vector<1x8x8x128xbf16>
    %41 = vector.shape_cast %40 : vector<1x8x8x128xbf16> to vector<8x8x128xbf16>
    %42 = vector.shape_cast %41 : vector<8x8x128xbf16> to vector<64x128xbf16>
    %c0_46 = arith.constant 0 : index
    %c0_47 = arith.constant 0 : index
    %43 = vector.load %arg6[%c0_46, %c0_47] : memref<128x128xbf16, #tpu.memory_space<vmem>>, vector<128x128xbf16>
    %cst_48 = arith.constant dense<0.000000e+00> : vector<64x128xf32>
    %44 = tpu.matmul %42, %43, %cst_48 {dimension_numbers = #tpu.dot_dimension_numbers<[1], [0], [0], [1], [0, 0, 1, 1], [], []>} : vector<64x128xbf16>, vector<128x128xbf16>, vector<64x128xf32> -> vector<64x128xf32>
    %c0_49 = arith.constant 0 : index
    %c0_50 = arith.constant 0 : index
    %45 = vector.load %arg7[%c0_49, %c0_50] : memref<1x128xf32, #tpu.memory_space<vmem>>, vector<1x128xf32>
    %46 = vector.broadcast %45 : vector<1x128xf32> to vector<64x128xf32>
    %47 = arith.addf %44, %46 : vector<64x128xf32>
    %c0_51 = arith.constant 0 : index
    %c0_52 = arith.constant 0 : index
    %c0_53 = arith.constant 0 : index
    %48 = vector.load %arg9[%c0_51, %c0_52, %c0_53] : memref<10x10x128xbf16, #tpu.memory_space<vmem>>, vector<8x8x128xbf16>
    %49 = vector.shape_cast %48 : vector<8x8x128xbf16> to vector<64x128xbf16>
    %c0_54 = arith.constant 0 : index
    %c1_55 = arith.constant 1 : index
    %c0_56 = arith.constant 0 : index
    %50 = vector.load %arg9[%c0_54, %c1_55, %c0_56] : memref<10x10x128xbf16, #tpu.memory_space<vmem>>, vector<8x8x128xbf16>
    %51 = vector.shape_cast %50 : vector<8x8x128xbf16> to vector<64x128xbf16>
    %c0_57 = arith.constant 0 : index
    %c2 = arith.constant 2 : index
    %c0_58 = arith.constant 0 : index
    %52 = vector.load %arg9[%c0_57, %c2, %c0_58] : memref<10x10x128xbf16, #tpu.memory_space<vmem>>, vector<8x8x128xbf16>
    %53 = vector.shape_cast %52 : vector<8x8x128xbf16> to vector<64x128xbf16>
    %c1_59 = arith.constant 1 : index
    %c0_60 = arith.constant 0 : index
    %c0_61 = arith.constant 0 : index
    %54 = vector.load %arg9[%c1_59, %c0_60, %c0_61] : memref<10x10x128xbf16, #tpu.memory_space<vmem>>, vector<8x8x128xbf16>
    %55 = vector.shape_cast %54 : vector<8x8x128xbf16> to vector<64x128xbf16>
    %c1_62 = arith.constant 1 : index
    %c1_63 = arith.constant 1 : index
    %c0_64 = arith.constant 0 : index
    %56 = vector.load %arg9[%c1_62, %c1_63, %c0_64] : memref<10x10x128xbf16, #tpu.memory_space<vmem>>, vector<8x8x128xbf16>
    %57 = vector.shape_cast %56 : vector<8x8x128xbf16> to vector<64x128xbf16>
    %c1_65 = arith.constant 1 : index
    %c2_66 = arith.constant 2 : index
    %c0_67 = arith.constant 0 : index
    %58 = vector.load %arg9[%c1_65, %c2_66, %c0_67] : memref<10x10x128xbf16, #tpu.memory_space<vmem>>, vector<8x8x128xbf16>
    %59 = vector.shape_cast %58 : vector<8x8x128xbf16> to vector<64x128xbf16>
    %c2_68 = arith.constant 2 : index
    %c0_69 = arith.constant 0 : index
    %c0_70 = arith.constant 0 : index
    %60 = vector.load %arg9[%c2_68, %c0_69, %c0_70] : memref<10x10x128xbf16, #tpu.memory_space<vmem>>, vector<8x8x128xbf16>
    %61 = vector.shape_cast %60 : vector<8x8x128xbf16> to vector<64x128xbf16>
    %c2_71 = arith.constant 2 : index
    %c1_72 = arith.constant 1 : index
    %c0_73 = arith.constant 0 : index
    %62 = vector.load %arg9[%c2_71, %c1_72, %c0_73] : memref<10x10x128xbf16, #tpu.memory_space<vmem>>, vector<8x8x128xbf16>
    %63 = vector.shape_cast %62 : vector<8x8x128xbf16> to vector<64x128xbf16>
    %c2_74 = arith.constant 2 : index
    %c2_75 = arith.constant 2 : index
    %c0_76 = arith.constant 0 : index
    %64 = vector.load %arg9[%c2_74, %c2_75, %c0_76] : memref<10x10x128xbf16, #tpu.memory_space<vmem>>, vector<8x8x128xbf16>
    %65 = vector.shape_cast %64 : vector<8x8x128xbf16> to vector<64x128xbf16>
    %66 = tpu.concatenate %49, %51, %53, %55, %57, %59, %61, %63, %65 in 1 : vector<64x128xbf16>, vector<64x128xbf16>, vector<64x128xbf16>, vector<64x128xbf16>, vector<64x128xbf16>, vector<64x128xbf16>, vector<64x128xbf16>, vector<64x128xbf16>, vector<64x128xbf16> -> vector<64x1152xbf16>
    %c0_77 = arith.constant 0 : index
    %c0_78 = arith.constant 0 : index
    %67 = vector.load %arg4[%c0_77, %c0_78] : memref<1152x128xbf16, #tpu.memory_space<vmem>>, vector<1152x128xbf16>
    %cst_79 = arith.constant dense<0.000000e+00> : vector<64x128xf32>
    %68 = tpu.matmul %66, %67, %cst_79 {dimension_numbers = #tpu.dot_dimension_numbers<[1], [0], [0], [1], [0, 0, 1, 1], [], []>} : vector<64x1152xbf16>, vector<1152x128xbf16>, vector<64x128xf32> -> vector<64x128xf32>
    %c0_80 = arith.constant 0 : index
    %c0_81 = arith.constant 0 : index
    %69 = vector.load %arg5[%c0_80, %c0_81] : memref<1x128xf32, #tpu.memory_space<vmem>>, vector<1x128xf32>
    %70 = vector.broadcast %69 : vector<1x128xf32> to vector<64x128xf32>
    %71 = arith.addf %68, %70 : vector<64x128xf32>
    %72 = arith.addf %71, %47 : vector<64x128xf32>
    %cst_82 = arith.constant 0.000000e+00 : f32
    %73 = vector.broadcast %cst_82 : f32 to vector<64x128xf32>
    %74 = arith.maximumf %72, %73 : vector<64x128xf32>
    %75 = vector.shape_cast %74 : vector<64x128xf32> to vector<1x8x8x128xf32>
    %c0_83 = arith.constant 0 : index
    %c0_84 = arith.constant 0 : index
    %c0_85 = arith.constant 0 : index
    %c0_86 = arith.constant 0 : index
    %76 = vector.load %arg8[%c0_83, %c0_84, %c0_85, %c0_86] : memref<1x8x8x128xf32, #tpu.memory_space<vmem>>, vector<1x8x8x128xf32>
    tpu.vector_store %arg8[%c0_83, %c0_84, %c0_85, %c0_86], %75 {strides = array<i32>} : memref<1x8x8x128xf32, #tpu.memory_space<vmem>>, vector<1x8x8x128xf32>,
    return
  }
  func.func @transform_0(%arg0: i32) -> (i32, i32, i32, i32) {
    %c0_i32 = arith.constant 0 : i32
    %c0_i32_0 = arith.constant 0 : i32
    %c0_i32_1 = arith.constant 0 : i32
    %c0_i32_2 = arith.constant 0 : i32
    return %arg0, %c0_i32, %c0_i32_0, %c0_i32_1 : i32, i32, i32, i32
  }
  func.func @transform_1(%arg0: i32) -> (i32, i32) {
    %c0_i32 = arith.constant 0 : i32
    %c0_i32_0 = arith.constant 0 : i32
    %c0_i32_1 = arith.constant 0 : i32
    return %c0_i32, %c0_i32_0 : i32, i32
  }
  func.func @transform_2(%arg0: i32) -> (i32, i32) {
    %c0_i32 = arith.constant 0 : i32
    %c0_i32_0 = arith.constant 0 : i32
    %c0_i32_1 = arith.constant 0 : i32
    return %c0_i32, %c0_i32_0 : i32, i32
  }
  func.func @transform_3(%arg0: i32) -> (i32, i32) {
    %c0_i32 = arith.constant 0 : i32
    %c0_i32_0 = arith.constant 0 : i32
    %c0_i32_1 = arith.constant 0 : i32
    return %c0_i32, %c0_i32_0 : i32, i32
  }
  func.func @transform_4(%arg0: i32) -> (i32, i32) {
    %c0_i32 = arith.constant 0 : i32
    %c0_i32_0 = arith.constant 0 : i32
    %c0_i32_1 = arith.constant 0 : i32
    return %c0_i32, %c0_i32_0 : i32, i32
  }
  func.func @transform_5(%arg0: i32) -> (i32, i32) {
    %c0_i32 = arith.constant 0 : i32
    %c0_i32_0 = arith.constant 0 : i32
    %c0_i32_1 = arith.constant 0 : i32
    return %c0_i32, %c0_i32_0 : i32, i32
  }
  func.func @transform_6(%arg0: i32) -> (i32, i32) {
    %c0_i32 = arith.constant 0 : i32
    %c0_i32_0 = arith.constant 0 : i32
    %c0_i32_1 = arith.constant 0 : i32
    return %c0_i32, %c0_i32_0 : i32, i32
  }
  func.func @transform_7(%arg0: i32) -> (i32, i32, i32, i32) {
    %c0_i32 = arith.constant 0 : i32
    %c0_i32_0 = arith.constant 0 : i32
    %c0_i32_1 = arith.constant 0 : i32
    %c0_i32_2 = arith.constant 0 : i32
    return %arg0, %c0_i32, %c0_i32_0, %c0_i32_1 : i32, i32, i32, i32
  }
}

</mosaic_0001>

<llo_original>
// kernel: tpu_custom_call.1
$region0: #{tpu_custom_call.1}
  #allocation0 [shape = 'u32[]', space=smem, size = 0x4, offset = 0x4, fixed_abs, tag = 'smem constant byte address 0x4 - core index']
  #allocation1 [shape = 'u32[144,128]{1,0:T(1,128)}', space=vmem, size = 0x12000, scoped, tag = 'internal scratch']
  #allocation2 [shape = 'bf16[10,10,128]{2,1,0:T(8,128)(2,1)}', space=vmem, size = 0xa000, scoped, tag = 'scratch operand']
  %s0 = inlined_call_operand.vmem [shape: bf16[2,36,9,128], index: 0, kind: input, shape index: {}]
  %s1 = inlined_call_operand.vmem [shape: bf16[1152,128], index: 1, kind: input, shape index: {}]
  %s2 = inlined_call_operand.vmem [shape: f32[1,128], index: 2, kind: input, shape index: {}]
  %s3 = inlined_call_operand.hbm [shape: bf16[1152,128], index: 3, kind: input, shape index: {}]
  %s4 = inlined_call_operand.vmem [shape: f32[1,128], index: 4, kind: input, shape index: {}]
  %s5 = inlined_call_operand.vmem [shape: bf16[128,128], index: 5, kind: input, shape index: {}]
  %s6 = inlined_call_operand.vmem [shape: f32[1,128], index: 6, kind: input, shape index: {}]
  %s7 = inlined_call_operand.hbm [shape: f32[2,8,8,128], index: 7, kind: output, shape index: {}]
  %s8 = sld [smem:[#allocation0]]
  $region65: #{tpu_custom_call.1} parent=0
    _
  %s10 = ssub.s32 1, %s8
  %s11 = scalar_select 0, %s10, %s8
  $region1: #{tpu_custom_call.1} parent=0
    #allocation3 [shape = 'u8[294912]{0}', space=vmem, size = 0x48000, scoped, tag = 'input window, operand 3, single buffered']
    #allocation4 [shape = 's32[2]{0}', space=sflag, size = 0x8, scoped, tag = 'scoped memory for tpu_custom_call.1']
    #allocation5 [shape = 's32[2]{0}', space=sflag, size = 0x8, scoped, tag = 'scoped memory for tpu_custom_call.1']
    #allocation6 [shape = 'u8[65536]{0}', space=vmem, size = 0x10000, scoped, tag = 'output window, operand 0']
    %12 = vsyncpa [#allocation4], 0
    %13 = vsyncpa [#allocation5], 0
    %s14 = scalar_lea.sflag [#allocation5], 1
    %15 = vsyncpa %s14, 0
    loop: start=0, step=1, limit=4
    $region2: #{tpu_custom_call.1} parent=1 // loop_pre_header
      _
    $region3: #{tpu_custom_call.1} parent=1 // loop_header
      %s17 = sphi 0, %s21
      %p18 = scmp.ge.s32.totalorder %s17, 4
      %s27 = sphi 0, %s29
      %s30 = sphi 0, %s27
      %s31 = sphi 0, %s30
      %s47 = sphi 0, %s31
      %s51 = sphi 0, %s51
      %s53 = sphi 0, %s51
      %s54 = sphi 0, %s53
      %s68 = sphi 0, %s54
      %s72 = sphi 0, %s72
      %s74 = sphi 0, %s72
      %s75 = sphi 0, %s74
      %s89 = sphi 0, %s75
      %s93 = sphi 0, %s93
      %s95 = sphi 0, %s93
      %s96 = sphi 0, %s95
      %s110 = sphi 0, %s96
      %s114 = sphi 0, %s114
      %s116 = sphi 0, %s114
      %s117 = sphi 0, %s116
      %s131 = sphi 0, %s117
      %s135 = sphi 0, %s135
      %s137 = sphi 0, %s135
      %s138 = sphi 0, %s137
      %s152 = sphi 0, %s138
      %s156 = sphi 0, %s156
      %s158 = sphi 0, %s156
      %s159 = sphi 0, %s158
      %s173 = sphi 0, %s159
      %s179 = sphi 0, %s181
      %s182 = sphi 0, %s179
      %s183 = sphi 0, %s182
      %s199 = sphi 0, %s183
    $region4: #{tpu_custom_call.1} parent=1 // loop_header_branch
      %20 = sbr.rel (%p18) target = $region8
    $region5: #{tpu_custom_call.1} parent=1 // loop_body
      %s22 = ssub.s32 %s17, 1
      %s23 = ssub.s32 %s17, 2
      %s24 = sadd.s32 %s17, 1
      %s25 = ssub.s32 %s17, %s24
      %p26 = scmp.eq.s32.totalorder %s25, 0
      %s28 = sadd.s32 %s27, 1
      %s29 = scalar_select %p26, %s27, %s28
      %p32 = pneg %p26
      %p33 = scmp.eq.s32.totalorder %s17, 1
      %p34 = por %p32, %p33
      %p35 = scmp.ne.s32.totalorder %s27, %s30
      %p36 = scmp.eq.s32.totalorder %s17, 0
      %p37 = por %p35, %p36
      %p38 = scmp.ne.s32.totalorder %s27, %s30
      %p39 = scmp.eq.s32.totalorder %s22, 1
      %p40 = por %p38, %p39
      %p41 = scmp.ne.s32.totalorder %s30, %s31
      %p42 = scmp.eq.s32.totalorder %s22, 0
      %p43 = por %p41, %p42
      %p44 = scmp.ne.s32.totalorder %s30, %s31
      %p45 = scmp.eq.s32.totalorder %s23, 1
      %p46 = por %p44, %p45
      %p48 = scmp.ne.s32.totalorder %s31, %s47
      %p49 = scmp.eq.s32.totalorder %s23, 0
      %p50 = por %p48, %p49
      %s52 = sadd.s32 %s51, 1
      %p55 = scmp.eq.s32.totalorder %s17, 1
      %p56 = scmp.ne.s32.totalorder %s51, %s53
      %p57 = scmp.eq.s32.totalorder %s17, 0
      %p58 = por %p56, %p57
      %p59 = scmp.ne.s32.totalorder %s51, %s53
      %p60 = scmp.eq.s32.totalorder %s22, 1
      %p61 = por %p59, %p60
      %p62 = scmp.ne.s32.totalorder %s53, %s54
      %p63 = scmp.eq.s32.totalorder %s22, 0
      %p64 = por %p62, %p63
      %p65 = scmp.ne.s32.totalorder %s53, %s54
      %p66 = scmp.eq.s32.totalorder %s23, 1
      %p67 = por %p65, %p66
      %p69 = scmp.ne.s32.totalorder %s54, %s68
      %p70 = scmp.eq.s32.totalorder %s23, 0
      %p71 = por %p69, %p70
      %s73 = sadd.s32 %s72, 1
      %p76 = scmp.eq.s32.totalorder %s17, 1
      %p77 = scmp.ne.s32.totalorder %s72, %s74
      %p78 = scmp.eq.s32.totalorder %s17, 0
      %p79 = por %p77, %p78
      %p80 = scmp.ne.s32.totalorder %s72, %s74
      %p81 = scmp.eq.s32.totalorder %s22, 1
      %p82 = por %p80, %p81
      %p83 = scmp.ne.s32.totalorder %s74, %s75
      %p84 = scmp.eq.s32.totalorder %s22, 0
      %p85 = por %p83, %p84
      %p86 = scmp.ne.s32.totalorder %s74, %s75
      %p87 = scmp.eq.s32.totalorder %s23, 1
      %p88 = por %p86, %p87
      %p90 = scmp.ne.s32.totalorder %s75, %s89
      %p91 = scmp.eq.s32.totalorder %s23, 0
      %p92 = por %p90, %p91
      %s94 = sadd.s32 %s93, 1
      %p97 = scmp.eq.s32.totalorder %s17, 1
      %p98 = scmp.ne.s32.totalorder %s93, %s95
      %p99 = scmp.eq.s32.totalorder %s17, 0
      %p100 = por %p98, %p99
      %p101 = scmp.ne.s32.totalorder %s93, %s95
      %p102 = scmp.eq.s32.totalorder %s22, 1
      %p103 = por %p101, %p102
      %p104 = scmp.ne.s32.totalorder %s95, %s96
      %p105 = scmp.eq.s32.totalorder %s22, 0
      %p106 = por %p104, %p105
      %p107 = scmp.ne.s32.totalorder %s95, %s96
      %p108 = scmp.eq.s32.totalorder %s23, 1
      %p109 = por %p107, %p108
      %p111 = scmp.ne.s32.totalorder %s96, %s110
      %p112 = scmp.eq.s32.totalorder %s23, 0
      %p113 = por %p111, %p112
      %s115 = sadd.s32 %s114, 1
      %p118 = scmp.eq.s32.totalorder %s17, 1
      %p119 = scmp.ne.s32.totalorder %s114, %s116
      %p120 = scmp.eq.s32.totalorder %s17, 0
      %p121 = por %p119, %p120
      %p122 = scmp.ne.s32.totalorder %s114, %s116
      %p123 = scmp.eq.s32.totalorder %s22, 1
      %p124 = por %p122, %p123
      %p125 = scmp.ne.s32.totalorder %s116, %s117
      %p126 = scmp.eq.s32.totalorder %s22, 0
      %p127 = por %p125, %p126
      %p128 = scmp.ne.s32.totalorder %s116, %s117
      %p129 = scmp.eq.s32.totalorder %s23, 1
      %p130 = por %p128, %p129
      %p132 = scmp.ne.s32.totalorder %s117, %s131
      %p133 = scmp.eq.s32.totalorder %s23, 0
      %p134 = por %p132, %p133
      %s136 = sadd.s32 %s135, 1
      %p139 = scmp.eq.s32.totalorder %s17, 1
      %p140 = scmp.ne.s32.totalorder %s135, %s137
      %p141 = scmp.eq.s32.totalorder %s17, 0
      %p142 = por %p140, %p141
      %p143 = scmp.ne.s32.totalorder %s135, %s137
      %p144 = scmp.eq.s32.totalorder %s22, 1
      %p145 = por %p143, %p144
      %p146 = scmp.ne.s32.totalorder %s137, %s138
      %p147 = scmp.eq.s32.totalorder %s22, 0
      %p148 = por %p146, %p147
      %p149 = scmp.ne.s32.totalorder %s137, %s138
      %p150 = scmp.eq.s32.totalorder %s23, 1
      %p151 = por %p149, %p150
      %p153 = scmp.ne.s32.totalorder %s138, %s152
      %p154 = scmp.eq.s32.totalorder %s23, 0
      %p155 = por %p153, %p154
      %s157 = sadd.s32 %s156, 1
      %p160 = scmp.eq.s32.totalorder %s17, 1
      %p161 = scmp.ne.s32.totalorder %s156, %s158
      %p162 = scmp.eq.s32.totalorder %s17, 0
      %p163 = por %p161, %p162
      %p164 = scmp.ne.s32.totalorder %s156, %s158
      %p165 = scmp.eq.s32.totalorder %s22, 1
      %p166 = por %p164, %p165
      %p167 = scmp.ne.s32.totalorder %s158, %s159
      %p168 = scmp.eq.s32.totalorder %s22, 0
      %p169 = por %p167, %p168
      %p170 = scmp.ne.s32.totalorder %s158, %s159
      %p171 = scmp.eq.s32.totalorder %s23, 1
      %p172 = por %p170, %p171
      %p174 = scmp.ne.s32.totalorder %s159, %s173
      %p175 = scmp.eq.s32.totalorder %s23, 0
      %p176 = por %p174, %p175
      %s177 = ssub.s32 %s17, %s24
      %p178 = scmp.eq.s32.totalorder %s177, 0
      %s180 = sadd.s32 %s179, 1
      %s181 = scalar_select %p178, %s179, %s180
      %p184 = pneg %p178
      %p185 = scmp.eq.s32.totalorder %s17, 1
      %p186 = por %p184, %p185
      %p187 = scmp.ne.s32.totalorder %s179, %s182
      %p188 = scmp.eq.s32.totalorder %s17, 0
      %p189 = por %p187, %p188
      %p190 = scmp.ne.s32.totalorder %s179, %s182
      %p191 = scmp.eq.s32.totalorder %s22, 1
      %p192 = por %p190, %p191
      %p193 = scmp.ne.s32.totalorder %s182, %s183
      %p194 = scmp.eq.s32.totalorder %s22, 0
      %p195 = por %p193, %p194
      %p196 = scmp.ne.s32.totalorder %s182, %s183
      %p197 = scmp.eq.s32.totalorder %s23, 1
      %p198 = por %p196, %p197
      %p200 = scmp.ne.s32.totalorder %s183, %s199
      %p201 = scmp.eq.s32.totalorder %s23, 0
      %p202 = por %p200, %p201
      %p203 = scmp.le.s32.totalorder 1, %s17
      %p204 = scmp.lt.s32.totalorder %s17, 3
      %p205 = pnand %p203, %p204
      %p206 = pneg %p205
      // Predicated region
      $region9: #{tpu_custom_call.1} parent=5 // pred_check
        _
      $region10: #{tpu_custom_call.1} parent=5 // pred_check_branch
        %208 = sbr.rel (%p205) target = $region12
      $region11: #{tpu_custom_call.1} parent=5 // pred_region
        %s209 = ssub.s32 %s17, 1
        // Predicated region
        $region13: #{tpu_custom_call.1} parent=11 // pred_check
          %p210 = pneg %p64
        $region14: #{tpu_custom_call.1} parent=11 // pred_check_branch
          %212 = sbr.rel (%p210) target = $region16
        $region15: #{tpu_custom_call.1} parent=11 // pred_region
          _
        $region16: #{tpu_custom_call.1} parent=11 // pred_fallthru
          _
        // Predicated region
        $region17: #{tpu_custom_call.1} parent=11 // pred_check
          %p213 = pneg %p85
        $region18: #{tpu_custom_call.1} parent=11 // pred_check_branch
          %215 = sbr.rel (%p213) target = $region20
        $region19: #{tpu_custom_call.1} parent=11 // pred_region
          _
        $region20: #{tpu_custom_call.1} parent=11 // pred_fallthru
          _
        // Predicated region
        $region21: #{tpu_custom_call.1} parent=11 // pred_check
          %p216 = pneg %p106
        $region22: #{tpu_custom_call.1} parent=11 // pred_check_branch
          %218 = sbr.rel (%p216) target = $region24
        $region23: #{tpu_custom_call.1} parent=11 // pred_region
          %s220 = ssub.s32 9216, 9216
          %221 = vsyncadd [#allocation4], %s220
          %s222 = sshll.u32 [#allocation3], 4
          %s223 = int_to_ptr.vmem [resolvable:$true] %s222
          %228 = dma.hbm_to_vmem [thread:$0]  %s3, 9216, %s223, [#allocation4], 64, 64, 4
        $region24: #{tpu_custom_call.1} parent=11 // pred_fallthru
          _
        // Predicated region
        $region25: #{tpu_custom_call.1} parent=11 // pred_check
          %p229 = pneg %p127
        $region26: #{tpu_custom_call.1} parent=11 // pred_check_branch
          %231 = sbr.rel (%p229) target = $region28
        $region27: #{tpu_custom_call.1} parent=11 // pred_region
          _
        $region28: #{tpu_custom_call.1} parent=11 // pred_fallthru
          _
        // Predicated region
        $region29: #{tpu_custom_call.1} parent=11 // pred_check
          %p232 = pneg %p148
        $region30: #{tpu_custom_call.1} parent=11 // pred_check_branch
          %234 = sbr.rel (%p232) target = $region32
        $region31: #{tpu_custom_call.1} parent=11 // pred_region
          _
        $region32: #{tpu_custom_call.1} parent=11 // pred_fallthru
          _
        // Predicated region
        $region33: #{tpu_custom_call.1} parent=11 // pred_check
          %p235 = pneg %p169
        $region34: #{tpu_custom_call.1} parent=11 // pred_check_branch
          %237 = sbr.rel (%p235) target = $region36
        $region35: #{tpu_custom_call.1} parent=11 // pred_region
          _
        $region36: #{tpu_custom_call.1} parent=11 // pred_fallthru
          _
      $region12: #{tpu_custom_call.1} parent=5 // pred_fallthru
        _
      %p238 = scmp.lt.s32.totalorder %s17, 2
      // Predicated region
      $region37: #{tpu_custom_call.1} parent=5 // pred_check
        %p239 = pneg %p238
      $region38: #{tpu_custom_call.1} parent=5 // pred_check_branch
        %241 = sbr.rel (%p239) target = $region40
      $region39: #{tpu_custom_call.1} parent=5 // pred_region
        // Predicated region
        $region41: #{tpu_custom_call.1} parent=39 // pred_check
          %p242 = pneg %p37
        $region42: #{tpu_custom_call.1} parent=39 // pred_check_branch
          %244 = sbr.rel (%p242) target = $region44
        $region43: #{tpu_custom_call.1} parent=39 // pred_region
          %p245 = scmp.lt.s32.totalorder %s17, 1
          %s246 = scalar_select %p245, %s17, 1
          %s247 = smul.addr %s246, 72
          %s248 = smul.addr %s247, 4
          %s249 = scalar_lea.vmem %s0, %s248
        $region44: #{tpu_custom_call.1} parent=39 // pred_fallthru
          _
      $region40: #{tpu_custom_call.1} parent=5 // pred_fallthru
        _
      %p250 = scmp.le.s32.totalorder 1, %s17
      %p251 = scmp.lt.s32.totalorder %s17, 3
      %p252 = pnand %p250, %p251
      %p253 = pneg %p252
      // Predicated region
      $region45: #{tpu_custom_call.1} parent=5 // pred_check
        _
      $region46: #{tpu_custom_call.1} parent=5 // pred_check_branch
        %255 = sbr.rel (%p252) target = $region48
      $region47: #{tpu_custom_call.1} parent=5 // pred_region
        %s256 = ssub.s32 %s17, 1
        // Predicated region
        $region49: #{tpu_custom_call.1} parent=47 // pred_check
          %p257 = pneg %p106
        $region50: #{tpu_custom_call.1} parent=47 // pred_check_branch
          %259 = sbr.rel (%p257) target = $region52
        $region51: #{tpu_custom_call.1} parent=47 // pred_region
          %260 = dma.done [#allocation4], 9216
        $region52: #{tpu_custom_call.1} parent=47 // pred_fallthru
          _
        %p261 = scmp.lt.s32.totalorder %s22, 1
        %s262 = scalar_select %p261, %s22, 1
        %s263 = smul.addr %s262, 72
        %s264 = smul.addr %s263, 4
        %s265 = scalar_lea.vmem %s0, %s264
        %p266 = pneg %p43
        %p267 = pneg %p40
        %p268 = pneg %p64
        %p269 = pneg %p61
        %p270 = pneg %p85
        %p271 = pneg %p82
        %p272 = pneg %p106
        %p273 = pneg %p103
        %p274 = pneg %p127
        %p275 = pneg %p124
        %p276 = pneg %p148
        %p277 = pneg %p145
        %p278 = pneg %p169
        %p279 = pneg %p166
        %p280 = pneg %p195
        %p281 = pneg %p192
        %s282 = sand.u32 %s182, 1
        %s283 = scalar_lea.sflag [#allocation5], %s282
        %s284 = sand.u32 %s182, 1
        %s285 = smul.addr %s284, 64
        %s286 = scalar_lea.vmem [#allocation6], %s285
        %p287 = scmp.lt.s32.totalorder %s22, 1
        %s288 = scalar_select %p287, %s22, 1
        %s289 = smul.addr %s288, 72
        %s290 = smul.addr %s289, 4
        %s291 = scalar_lea.vmem %s0, %s290
        %v293 = vld [vmem:[%s291] sm:$0xf]
        %v294 = vld [vmem:[%s291 + $0x8] sm:$0xf]
        %v295 = vld [vmem:[%s291 + $0x10] sm:$0xf]
        %v296 = vld [vmem:[%s291 + $0x18] sm:$0xf]
        %v297 = vld [vmem:[%s291 + $0x20] sm:$0xf]
        %v298 = vld [vmem:[%s291 + $0x28] sm:$0xf]
        %v299 = vld [vmem:[%s291 + $0x30] sm:$0xf]
        %v300 = vld [vmem:[%s291 + $0x38] sm:$0xf]
        %s301 = scalar_lea.vmem %s291, 72
        %v302 = vld [vmem:[%s301] sm:$0xf]
        %v303 = vld [vmem:[%s301 + $0x8] sm:$0xf]
        %v304 = vld [vmem:[%s301 + $0x10] sm:$0xf]
        %v305 = vld [vmem:[%s301 + $0x18] sm:$0xf]
        %v306 = vld [vmem:[%s301 + $0x20] sm:$0xf]
        %v307 = vld [vmem:[%s301 + $0x28] sm:$0xf]
        %v308 = vld [vmem:[%s301 + $0x30] sm:$0xf]
        %v309 = vld [vmem:[%s301 + $0x38] sm:$0xf]
        %v310 = vld [vmem:[%s291 + $0x4] sm:$0x1]
        %v311 = vld [vmem:[%s291 + $0xc] sm:$0x1]
        %v312 = vld [vmem:[%s291 + $0x14] sm:$0x1]
        %v313 = vld [vmem:[%s291 + $0x1c] sm:$0x1]
        %v314 = vld [vmem:[%s291 + $0x24] sm:$0x1]
        %v315 = vld [vmem:[%s291 + $0x2c] sm:$0x1]
        %v316 = vld [vmem:[%s291 + $0x34] sm:$0x1]
        %v317 = vld [vmem:[%s291 + $0x3c] sm:$0x1]
        %vm318 = vsmask.f32 3328
        %vm319 = vsmask.f32 7440
        %vm320 = vmor %vm318, %vm319
        %v322 = vshrl.u32 %v293, 16
        %v324 = vrot.slane %v322, 4
        %v325 = vshll.u32 %v293, 16
        %v327 = vrot.slane %v325, 5
        %v328 = vor.u32 %v324, %v327
        %v329 = vrot.slane %v328, 4
        %v331 = vshll.u32 %v310, 16
        %v333 = vrot.slane %v331, 5
        %v334 = vsel %vm320, %v329, %v333
        %v336 = vshrl.u32 %v294, 16
        %v338 = vrot.slane %v336, 4
        %v339 = vshll.u32 %v294, 16
        %v341 = vrot.slane %v339, 5
        %v342 = vor.u32 %v338, %v341
        %v343 = vrot.slane %v342, 4
        %v345 = vshll.u32 %v311, 16
        %v347 = vrot.slane %v345, 5
        %v348 = vsel %vm320, %v343, %v347
        %v350 = vshrl.u32 %v295, 16
        %v352 = vrot.slane %v350, 4
        %v353 = vshll.u32 %v295, 16
        %v355 = vrot.slane %v353, 5
        %v356 = vor.u32 %v352, %v355
        %v357 = vrot.slane %v356, 4
        %v359 = vshll.u32 %v312, 16
        %v361 = vrot.slane %v359, 5
        %v362 = vsel %vm320, %v357, %v361
        %v364 = vshrl.u32 %v296, 16
        %v366 = vrot.slane %v364, 4
        %v367 = vshll.u32 %v296, 16
        %v369 = vrot.slane %v367, 5
        %v370 = vor.u32 %v366, %v369
        %v371 = vrot.slane %v370, 4
        %v373 = vshll.u32 %v313, 16
        %v375 = vrot.slane %v373, 5
        %v376 = vsel %vm320, %v371, %v375
        %v378 = vshrl.u32 %v297, 16
        %v380 = vrot.slane %v378, 4
        %v381 = vshll.u32 %v297, 16
        %v383 = vrot.slane %v381, 5
        %v384 = vor.u32 %v380, %v383
        %v385 = vrot.slane %v384, 4
        %v387 = vshll.u32 %v314, 16
        %v389 = vrot.slane %v387, 5
        %v390 = vsel %vm320, %v385, %v389
        %v392 = vshrl.u32 %v298, 16
        %v394 = vrot.slane %v392, 4
        %v395 = vshll.u32 %v298, 16
        %v397 = vrot.slane %v395, 5
        %v398 = vor.u32 %v394, %v397
        %v399 = vrot.slane %v398, 4
        %v401 = vshll.u32 %v315, 16
        %v403 = vrot.slane %v401, 5
        %v404 = vsel %vm320, %v399, %v403
        %v406 = vshrl.u32 %v299, 16
        %v408 = vrot.slane %v406, 4
        %v409 = vshll.u32 %v299, 16
        %v411 = vrot.slane %v409, 5
        %v412 = vor.u32 %v408, %v411
        %v413 = vrot.slane %v412, 4
        %v415 = vshll.u32 %v316, 16
        %v417 = vrot.slane %v415, 5
        %v418 = vsel %vm320, %v413, %v417
        %v420 = vshrl.u32 %v300, 16
        %v422 = vrot.slane %v420, 4
        %v423 = vshll.u32 %v300, 16
        %v425 = vrot.slane %v423, 5
        %v426 = vor.u32 %v422, %v425
        %v427 = vrot.slane %v426, 4
        %v429 = vshll.u32 %v317, 16
        %v431 = vrot.slane %v429, 5
        %v432 = vsel %vm320, %v427, %v431
        %s433 = scalar_lea.vmem %s291, 144
        %v434 = vld [vmem:[%s433] sm:$0xf]
        %v435 = vld [vmem:[%s433 + $0x8] sm:$0xf]
        %v436 = vld [vmem:[%s433 + $0x10] sm:$0xf]
        %v437 = vld [vmem:[%s433 + $0x18] sm:$0xf]
        %v438 = vld [vmem:[%s433 + $0x20] sm:$0xf]
        %v439 = vld [vmem:[%s433 + $0x28] sm:$0xf]
        %v440 = vld [vmem:[%s433 + $0x30] sm:$0xf]
        %v441 = vld [vmem:[%s433 + $0x38] sm:$0xf]
        %s442 = scalar_lea.vmem %s291, 216
        %v443 = vld [vmem:[%s442] sm:$0xf]
        %v444 = vld [vmem:[%s442 + $0x8] sm:$0xf]
        %v445 = vld [vmem:[%s442 + $0x10] sm:$0xf]
        %v446 = vld [vmem:[%s442 + $0x18] sm:$0xf]
        %v447 = vld [vmem:[%s442 + $0x20] sm:$0xf]
        %v448 = vld [vmem:[%s442 + $0x28] sm:$0xf]
        %v449 = vld [vmem:[%s442 + $0x30] sm:$0xf]
        %v450 = vld [vmem:[%s442 + $0x38] sm:$0xf]
        %v451 = vld [vmem:[%s433 + $0x4] sm:$0x1]
        %v452 = vld [vmem:[%s433 + $0xc] sm:$0x1]
        %v453 = vld [vmem:[%s433 + $0x14] sm:$0x1]
        %v454 = vld [vmem:[%s433 + $0x1c] sm:$0x1]
        %v455 = vld [vmem:[%s433 + $0x24] sm:$0x1]
        %v456 = vld [vmem:[%s433 + $0x2c] sm:$0x1]
        %v457 = vld [vmem:[%s433 + $0x34] sm:$0x1]
        %v458 = vld [vmem:[%s433 + $0x3c] sm:$0x1]
        %v460 = vshrl.u32 %v434, 16
        %v462 = vrot.slane %v460, 4
        %v463 = vshll.u32 %v434, 16
        %v465 = vrot.slane %v463, 5
        %v466 = vor.u32 %v462, %v465
        %v467 = vrot.slane %v466, 4
        %v469 = vshll.u32 %v451, 16
        %v471 = vrot.slane %v469, 5
        %v472 = vsel %vm320, %v467, %v471
        %v474 = vshrl.u32 %v435, 16
        %v476 = vrot.slane %v474, 4
        %v477 = vshll.u32 %v435, 16
        %v479 = vrot.slane %v477, 5
        %v480 = vor.u32 %v476, %v479
        %v481 = vrot.slane %v480, 4
        %v483 = vshll.u32 %v452, 16
        %v485 = vrot.slane %v483, 5
        %v486 = vsel %vm320, %v481, %v485
        %v488 = vshrl.u32 %v436, 16
        %v490 = vrot.slane %v488, 4
        %v491 = vshll.u32 %v436, 16
        %v493 = vrot.slane %v491, 5
        %v494 = vor.u32 %v490, %v493
        %v495 = vrot.slane %v494, 4
        %v497 = vshll.u32 %v453, 16
        %v499 = vrot.slane %v497, 5
        %v500 = vsel %vm320, %v495, %v499
        %v502 = vshrl.u32 %v437, 16
        %v504 = vrot.slane %v502, 4
        %v505 = vshll.u32 %v437, 16
        %v507 = vrot.slane %v505, 5
        %v508 = vor.u32 %v504, %v507
        %v509 = vrot.slane %v508, 4
        %v511 = vshll.u32 %v454, 16
        %v513 = vrot.slane %v511, 5
        %v514 = vsel %vm320, %v509, %v513
        %v516 = vshrl.u32 %v438, 16
        %v518 = vrot.slane %v516, 4
        %v519 = vshll.u32 %v438, 16
        %v521 = vrot.slane %v519, 5
        %v522 = vor.u32 %v518, %v521
        %v523 = vrot.slane %v522, 4
        %v525 = vshll.u32 %v455, 16
        %v527 = vrot.slane %v525, 5
        %v528 = vsel %vm320, %v523, %v527
        %v530 = vshrl.u32 %v439, 16
        %v532 = vrot.slane %v530, 4
        %v533 = vshll.u32 %v439, 16
        %v535 = vrot.slane %v533, 5
        %v536 = vor.u32 %v532, %v535
        %v537 = vrot.slane %v536, 4
        %v539 = vshll.u32 %v456, 16
        %v541 = vrot.slane %v539, 5
        %v542 = vsel %vm320, %v537, %v541
        %v544 = vshrl.u32 %v440, 16
        %v546 = vrot.slane %v544, 4
        %v547 = vshll.u32 %v440, 16
        %v549 = vrot.slane %v547, 5
        %v550 = vor.u32 %v546, %v549
        %v551 = vrot.slane %v550, 4
        %v553 = vshll.u32 %v457, 16
        %v555 = vrot.slane %v553, 5
        %v556 = vsel %vm320, %v551, %v555
        %v558 = vshrl.u32 %v441, 16
        %v560 = vrot.slane %v558, 4
        %v561 = vshll.u32 %v441, 16
        %v563 = vrot.slane %v561, 5
        %v564 = vor.u32 %v560, %v563
        %v565 = vrot.slane %v564, 4
        %v567 = vshll.u32 %v458, 16
        %v569 = vrot.slane %v567, 5
        %v570 = vsel %vm320, %v565, %v569
        %s571 = scalar_lea.vmem %s291, 8
        %v572 = vld [vmem:[%s571] sm:$0xf]
        %v573 = vld [vmem:[%s571 + $0x8] sm:$0xf]
        %v574 = vld [vmem:[%s571 + $0x10] sm:$0xf]
        %v575 = vld [vmem:[%s571 + $0x18] sm:$0xf]
        %v576 = vld [vmem:[%s571 + $0x20] sm:$0xf]
        %v577 = vld [vmem:[%s571 + $0x28] sm:$0xf]
        %v578 = vld [vmem:[%s571 + $0x30] sm:$0xf]
        %v579 = vld [vmem:[%s571 + $0x38] sm:$0xf]
        %s580 = scalar_lea.vmem %s291, 80
        %v581 = vld [vmem:[%s580] sm:$0xf]
        %v582 = vld [vmem:[%s580 + $0x8] sm:$0xf]
        %v583 = vld [vmem:[%s580 + $0x10] sm:$0xf]
        %v584 = vld [vmem:[%s580 + $0x18] sm:$0xf]
        %v585 = vld [vmem:[%s580 + $0x20] sm:$0xf]
        %v586 = vld [vmem:[%s580 + $0x28] sm:$0xf]
        %v587 = vld [vmem:[%s580 + $0x30] sm:$0xf]
        %v588 = vld [vmem:[%s580 + $0x38] sm:$0xf]
        %v589 = vld [vmem:[%s571 + $0x4] sm:$0x1]
        %v590 = vld [vmem:[%s571 + $0xc] sm:$0x1]
        %v591 = vld [vmem:[%s571 + $0x14] sm:$0x1]
        %v592 = vld [vmem:[%s571 + $0x1c] sm:$0x1]
        %v593 = vld [vmem:[%s571 + $0x24] sm:$0x1]
        %v594 = vld [vmem:[%s571 + $0x2c] sm:$0x1]
        %v595 = vld [vmem:[%s571 + $0x34] sm:$0x1]
        %v596 = vld [vmem:[%s571 + $0x3c] sm:$0x1]
        %v598 = vshrl.u32 %v572, 16
        %v600 = vrot.slane %v598, 4
        %v601 = vshll.u32 %v572, 16
        %v603 = vrot.slane %v601, 5
        %v604 = vor.u32 %v600, %v603
        %v605 = vrot.slane %v604, 4
        %v607 = vshll.u32 %v589, 16
        %v609 = vrot.slane %v607, 5
        %v610 = vsel %vm320, %v605, %v609
        %v612 = vshrl.u32 %v573, 16
        %v614 = vrot.slane %v612, 4
        %v615 = vshll.u32 %v573, 16
        %v617 = vrot.slane %v615, 5
        %v618 = vor.u32 %v614, %v617
        %v619 = vrot.slane %v618, 4
        %v621 = vshll.u32 %v590, 16
        %v623 = vrot.slane %v621, 5
        %v624 = vsel %vm320, %v619, %v623
        %v626 = vshrl.u32 %v574, 16
        %v628 = vrot.slane %v626, 4
        %v629 = vshll.u32 %v574, 16
        %v631 = vrot.slane %v629, 5
        %v632 = vor.u32 %v628, %v631
        %v633 = vrot.slane %v632, 4
        %v635 = vshll.u32 %v591, 16
        %v637 = vrot.slane %v635, 5
        %v638 = vsel %vm320, %v633, %v637
        %v640 = vshrl.u32 %v575, 16
        %v642 = vrot.slane %v640, 4
        %v643 = vshll.u32 %v575, 16
        %v645 = vrot.slane %v643, 5
        %v646 = vor.u32 %v642, %v645
        %v647 = vrot.slane %v646, 4
        %v649 = vshll.u32 %v592, 16
        %v651 = vrot.slane %v649, 5
        %v652 = vsel %vm320, %v647, %v651
        %v654 = vshrl.u32 %v576, 16
        %v656 = vrot.slane %v654, 4
        %v657 = vshll.u32 %v576, 16
        %v659 = vrot.slane %v657, 5
        %v660 = vor.u32 %v656, %v659
        %v661 = vrot.slane %v660, 4
        %v663 = vshll.u32 %v593, 16
        %v665 = vrot.slane %v663, 5
        %v666 = vsel %vm320, %v661, %v665
        %v668 = vshrl.u32 %v577, 16
        %v670 = vrot.slane %v668, 4
        %v671 = vshll.u32 %v577, 16
        %v673 = vrot.slane %v671, 5
        %v674 = vor.u32 %v670, %v673
        %v675 = vrot.slane %v674, 4
        %v677 = vshll.u32 %v594, 16
        %v679 = vrot.slane %v677, 5
        %v680 = vsel %vm320, %v675, %v679
        %v682 = vshrl.u32 %v578, 16
        %v684 = vrot.slane %v682, 4
        %v685 = vshll.u32 %v578, 16
        %v687 = vrot.slane %v685, 5
        %v688 = vor.u32 %v684, %v687
        %v689 = vrot.slane %v688, 4
        %v691 = vshll.u32 %v595, 16
        %v693 = vrot.slane %v691, 5
        %v694 = vsel %vm320, %v689, %v693
        %v696 = vshrl.u32 %v579, 16
        %v698 = vrot.slane %v696, 4
        %v699 = vshll.u32 %v579, 16
        %v701 = vrot.slane %v699, 5
        %v702 = vor.u32 %v698, %v701
        %v703 = vrot.slane %v702, 4
        %v705 = vshll.u32 %v596, 16
        %v707 = vrot.slane %v705, 5
        %v708 = vsel %vm320, %v703, %v707
        %v717 = vunpack.c.l.b16 %v293
        %v718 = vunpack.c.l.b16 %v294
        %v719 = vunpack.c.l.b16 %v295
        %v720 = vunpack.c.l.b16 %v296
        %v721 = vunpack.c.l.b16 %v297
        %v722 = vunpack.c.l.b16 %v298
        %v723 = vunpack.c.l.b16 %v299
        %v724 = vunpack.c.l.b16 %v300
        %v725 = vpack.c.b16 %v718, %v717
        %v726 = vpack.c.b16 %v720, %v719
        %v727 = vpack.c.b16 %v722, %v721
        %v728 = vpack.c.b16 %v724, %v723
        %v741 = vunpack.c.l.b16 %v302
        %v742 = vunpack.c.l.b16 %v303
        %v743 = vunpack.c.l.b16 %v304
        %v744 = vunpack.c.l.b16 %v305
        %v745 = vunpack.c.l.b16 %v306
        %v746 = vunpack.c.l.b16 %v307
        %v747 = vunpack.c.l.b16 %v308
        %v748 = vunpack.c.l.b16 %v309
        %v749 = vpack.c.b16 %v742, %v741
        %v750 = vpack.c.b16 %v744, %v743
        %v751 = vpack.c.b16 %v746, %v745
        %v752 = vpack.c.b16 %v748, %v747
        %v757 = vunpack.c.l.b16 %v334
        %v758 = vunpack.c.l.b16 %v348
        %v759 = vunpack.c.l.b16 %v362
        %v760 = vunpack.c.l.b16 %v376
        %v761 = vunpack.c.l.b16 %v390
        %v762 = vunpack.c.l.b16 %v404
        %v763 = vunpack.c.l.b16 %v418
        %v764 = vunpack.c.l.b16 %v432
        %v765 = vpack.c.b16 %v758, %v757
        %v766 = vpack.c.b16 %v760, %v759
        %v767 = vpack.c.b16 %v762, %v761
        %v768 = vpack.c.b16 %v764, %v763
        %v781 = vunpack.c.l.b16 %v434
        %v782 = vunpack.c.l.b16 %v435
        %v783 = vunpack.c.l.b16 %v436
        %v784 = vunpack.c.l.b16 %v437
        %v785 = vunpack.c.l.b16 %v438
        %v786 = vunpack.c.l.b16 %v439
        %v787 = vunpack.c.l.b16 %v440
        %v788 = vunpack.c.l.b16 %v441
        %v789 = vpack.c.b16 %v782, %v781
        %v790 = vpack.c.b16 %v784, %v783
        %v791 = vpack.c.b16 %v786, %v785
        %v792 = vpack.c.b16 %v788, %v787
        %v805 = vunpack.c.l.b16 %v443
        %v806 = vunpack.c.l.b16 %v444
        %v807 = vunpack.c.l.b16 %v445
        %v808 = vunpack.c.l.b16 %v446
        %v809 = vunpack.c.l.b16 %v447
        %v810 = vunpack.c.l.b16 %v448
        %v811 = vunpack.c.l.b16 %v449
        %v812 = vunpack.c.l.b16 %v450
        %v813 = vpack.c.b16 %v806, %v805
        %v814 = vpack.c.b16 %v808, %v807
        %v815 = vpack.c.b16 %v810, %v809
        %v816 = vpack.c.b16 %v812, %v811
        %v821 = vunpack.c.l.b16 %v472
        %v822 = vunpack.c.l.b16 %v486
        %v823 = vunpack.c.l.b16 %v500
        %v824 = vunpack.c.l.b16 %v514
        %v825 = vunpack.c.l.b16 %v528
        %v826 = vunpack.c.l.b16 %v542
        %v827 = vunpack.c.l.b16 %v556
        %v828 = vunpack.c.l.b16 %v570
        %v829 = vpack.c.b16 %v822, %v821
        %v830 = vpack.c.b16 %v824, %v823
        %v831 = vpack.c.b16 %v826, %v825
        %v832 = vpack.c.b16 %v828, %v827
        %v845 = vunpack.c.l.b16 %v572
        %v846 = vunpack.c.l.b16 %v573
        %v847 = vunpack.c.l.b16 %v574
        %v848 = vunpack.c.l.b16 %v575
        %v849 = vunpack.c.l.b16 %v576
        %v850 = vunpack.c.l.b16 %v577
        %v851 = vunpack.c.l.b16 %v578
        %v852 = vunpack.c.l.b16 %v579
        %v853 = vpack.c.b16 %v846, %v845
        %v854 = vpack.c.b16 %v848, %v847
        %v855 = vpack.c.b16 %v850, %v849
        %v856 = vpack.c.b16 %v852, %v851
        %v869 = vunpack.c.l.b16 %v581
        %v870 = vunpack.c.l.b16 %v582
        %v871 = vunpack.c.l.b16 %v583
        %v872 = vunpack.c.l.b16 %v584
        %v873 = vunpack.c.l.b16 %v585
        %v874 = vunpack.c.l.b16 %v586
        %v875 = vunpack.c.l.b16 %v587
        %v876 = vunpack.c.l.b16 %v588
        %v877 = vpack.c.b16 %v870, %v869
        %v878 = vpack.c.b16 %v872, %v871
        %v879 = vpack.c.b16 %v874, %v873
        %v880 = vpack.c.b16 %v876, %v875
        %v885 = vunpack.c.l.b16 %v610
        %v886 = vunpack.c.l.b16 %v624
        %v887 = vunpack.c.l.b16 %v638
        %v888 = vunpack.c.l.b16 %v652
        %v889 = vunpack.c.l.b16 %v666
        %v890 = vunpack.c.l.b16 %v680
        %v891 = vunpack.c.l.b16 %v694
        %v892 = vunpack.c.l.b16 %v708
        %v893 = vpack.c.b16 %v886, %v885
        %v894 = vpack.c.b16 %v888, %v887
        %v895 = vpack.c.b16 %v890, %v889
        %v896 = vpack.c.b16 %v892, %v891
        %v901 = vld [vmem:[%s1] sm:$0xf]
        %v902 = vld [vmem:[%s1 + $0x4] sm:$0xf]
        %v903 = vld [vmem:[%s1 + $0x8] sm:$0xf]
        %v904 = vld [vmem:[%s1 + $0xc] sm:$0xf]
        %v905 = vld [vmem:[%s1 + $0x10] sm:$0xf]
        %v906 = vld [vmem:[%s1 + $0x14] sm:$0xf]
        %v907 = vld [vmem:[%s1 + $0x18] sm:$0xf]
        %v908 = vld [vmem:[%s1 + $0x1c] sm:$0xf]
        %v909 = vld [vmem:[%s1 + $0x20] sm:$0xf]
        %v910 = vld [vmem:[%s1 + $0x24] sm:$0xf]
        %v911 = vld [vmem:[%s1 + $0x28] sm:$0xf]
        %v912 = vld [vmem:[%s1 + $0x2c] sm:$0xf]
        %v913 = vld [vmem:[%s1 + $0x30] sm:$0xf]
        %v914 = vld [vmem:[%s1 + $0x34] sm:$0xf]
        %v915 = vld [vmem:[%s1 + $0x38] sm:$0xf]
        %v916 = vld [vmem:[%s1 + $0x3c] sm:$0xf]
        %v917 = vld [vmem:[%s1 + $0x40] sm:$0xf]
        %v918 = vld [vmem:[%s1 + $0x44] sm:$0xf]
        %v919 = vld [vmem:[%s1 + $0x48] sm:$0xf]
        %v920 = vld [vmem:[%s1 + $0x4c] sm:$0xf]
        %v921 = vld [vmem:[%s1 + $0x50] sm:$0xf]
        %v922 = vld [vmem:[%s1 + $0x54] sm:$0xf]
        %v923 = vld [vmem:[%s1 + $0x58] sm:$0xf]
        %v924 = vld [vmem:[%s1 + $0x5c] sm:$0xf]
        %v925 = vld [vmem:[%s1 + $0x60] sm:$0xf]
        %v926 = vld [vmem:[%s1 + $0x64] sm:$0xf]
        %v927 = vld [vmem:[%s1 + $0x68] sm:$0xf]
        %v928 = vld [vmem:[%s1 + $0x6c] sm:$0xf]
        %v929 = vld [vmem:[%s1 + $0x70] sm:$0xf]
        %v930 = vld [vmem:[%s1 + $0x74] sm:$0xf]
        %v931 = vld [vmem:[%s1 + $0x78] sm:$0xf]
        %v932 = vld [vmem:[%s1 + $0x7c] sm:$0xf]
        %v933 = vld [vmem:[%s1 + $0x80] sm:$0xf]
        %v934 = vld [vmem:[%s1 + $0x84] sm:$0xf]
        %v935 = vld [vmem:[%s1 + $0x88] sm:$0xf]
        %v936 = vld [vmem:[%s1 + $0x8c] sm:$0xf]
        %v937 = vld [vmem:[%s1 + $0x90] sm:$0xf]
        %v938 = vld [vmem:[%s1 + $0x94] sm:$0xf]
        %v939 = vld [vmem:[%s1 + $0x98] sm:$0xf]
        %v940 = vld [vmem:[%s1 + $0x9c] sm:$0xf]
        %v941 = vld [vmem:[%s1 + $0xa0] sm:$0xf]
        %v942 = vld [vmem:[%s1 + $0xa4] sm:$0xf]
        %v943 = vld [vmem:[%s1 + $0xa8] sm:$0xf]
        %v944 = vld [vmem:[%s1 + $0xac] sm:$0xf]
        %v945 = vld [vmem:[%s1 + $0xb0] sm:$0xf]
        %v946 = vld [vmem:[%s1 + $0xb4] sm:$0xf]
        %v947 = vld [vmem:[%s1 + $0xb8] sm:$0xf]
        %v948 = vld [vmem:[%s1 + $0xbc] sm:$0xf]
        %v949 = vld [vmem:[%s1 + $0xc0] sm:$0xf]
        %v950 = vld [vmem:[%s1 + $0xc4] sm:$0xf]
        %v951 = vld [vmem:[%s1 + $0xc8] sm:$0xf]
        %v952 = vld [vmem:[%s1 + $0xcc] sm:$0xf]
        %v953 = vld [vmem:[%s1 + $0xd0] sm:$0xf]
        %v954 = vld [vmem:[%s1 + $0xd4] sm:$0xf]
        %v955 = vld [vmem:[%s1 + $0xd8] sm:$0xf]
        %v956 = vld [vmem:[%s1 + $0xdc] sm:$0xf]
        %v957 = vld [vmem:[%s1 + $0xe0] sm:$0xf]
        %v958 = vld [vmem:[%s1 + $0xe4] sm:$0xf]
        %v959 = vld [vmem:[%s1 + $0xe8] sm:$0xf]
        %v960 = vld [vmem:[%s1 + $0xec] sm:$0xf]
        %v961 = vld [vmem:[%s1 + $0xf0] sm:$0xf]
        %v962 = vld [vmem:[%s1 + $0xf4] sm:$0xf]
        %v963 = vld [vmem:[%s1 + $0xf8] sm:$0xf]
        %v964 = vld [vmem:[%s1 + $0xfc] sm:$0xf]
        %v965 = vld [vmem:[%s1 + $0x100] sm:$0xf]
        %v966 = vld [vmem:[%s1 + $0x104] sm:$0xf]
        %v967 = vld [vmem:[%s1 + $0x108] sm:$0xf]
        %v968 = vld [vmem:[%s1 + $0x10c] sm:$0xf]
        %v969 = vld [vmem:[%s1 + $0x110] sm:$0xf]
        %v970 = vld [vmem:[%s1 + $0x114] sm:$0xf]
        %v971 = vld [vmem:[%s1 + $0x118] sm:$0xf]
        %v972 = vld [vmem:[%s1 + $0x11c] sm:$0xf]
        %v973 = vld [vmem:[%s1 + $0x120] sm:$0xf]
        %v974 = vld [vmem:[%s1 + $0x124] sm:$0xf]
        %v975 = vld [vmem:[%s1 + $0x128] sm:$0xf]
        %v976 = vld [vmem:[%s1 + $0x12c] sm:$0xf]
        %v977 = vld [vmem:[%s1 + $0x130] sm:$0xf]
        %v978 = vld [vmem:[%s1 + $0x134] sm:$0xf]
        %v979 = vld [vmem:[%s1 + $0x138] sm:$0xf]
        %v980 = vld [vmem:[%s1 + $0x13c] sm:$0xf]
        %v981 = vld [vmem:[%s1 + $0x140] sm:$0xf]
        %v982 = vld [vmem:[%s1 + $0x144] sm:$0xf]
        %v983 = vld [vmem:[%s1 + $0x148] sm:$0xf]
        %v984 = vld [vmem:[%s1 + $0x14c] sm:$0xf]
        %v985 = vld [vmem:[%s1 + $0x150] sm:$0xf]
        %v986 = vld [vmem:[%s1 + $0x154] sm:$0xf]
        %v987 = vld [vmem:[%s1 + $0x158] sm:$0xf]
        %v988 = vld [vmem:[%s1 + $0x15c] sm:$0xf]
        %v989 = vld [vmem:[%s1 + $0x160] sm:$0xf]
        %v990 = vld [vmem:[%s1 + $0x164] sm:$0xf]
        %v991 = vld [vmem:[%s1 + $0x168] sm:$0xf]
        %v992 = vld [vmem:[%s1 + $0x16c] sm:$0xf]
        %v993 = vld [vmem:[%s1 + $0x170] sm:$0xf]
        %v994 = vld [vmem:[%s1 + $0x174] sm:$0xf]
        %v995 = vld [vmem:[%s1 + $0x178] sm:$0xf]
        %v996 = vld [vmem:[%s1 + $0x17c] sm:$0xf]
        %v997 = vld [vmem:[%s1 + $0x180] sm:$0xf]
        %v998 = vld [vmem:[%s1 + $0x184] sm:$0xf]
        %v999 = vld [vmem:[%s1 + $0x188] sm:$0xf]
        %v1000 = vld [vmem:[%s1 + $0x18c] sm:$0xf]
        %v1001 = vld [vmem:[%s1 + $0x190] sm:$0xf]
        %v1002 = vld [vmem:[%s1 + $0x194] sm:$0xf]
        %v1003 = vld [vmem:[%s1 + $0x198] sm:$0xf]
        %v1004 = vld [vmem:[%s1 + $0x19c] sm:$0xf]
        %v1005 = vld [vmem:[%s1 + $0x1a0] sm:$0xf]
        %v1006 = vld [vmem:[%s1 + $0x1a4] sm:$0xf]
        %v1007 = vld [vmem:[%s1 + $0x1a8] sm:$0xf]
        %v1008 = vld [vmem:[%s1 + $0x1ac] sm:$0xf]
        %v1009 = vld [vmem:[%s1 + $0x1b0] sm:$0xf]
        %v1010 = vld [vmem:[%s1 + $0x1b4] sm:$0xf]
        %v1011 = vld [vmem:[%s1 + $0x1b8] sm:$0xf]
        %v1012 = vld [vmem:[%s1 + $0x1bc] sm:$0xf]
        %v1013 = vld [vmem:[%s1 + $0x1c0] sm:$0xf]
        %v1014 = vld [vmem:[%s1 + $0x1c4] sm:$0xf]
        %v1015 = vld [vmem:[%s1 + $0x1c8] sm:$0xf]
        %v1016 = vld [vmem:[%s1 + $0x1cc] sm:$0xf]
        %v1017 = vld [vmem:[%s1 + $0x1d0] sm:$0xf]
        %v1018 = vld [vmem:[%s1 + $0x1d4] sm:$0xf]
        %v1019 = vld [vmem:[%s1 + $0x1d8] sm:$0xf]
        %v1020 = vld [vmem:[%s1 + $0x1dc] sm:$0xf]
        %v1021 = vld [vmem:[%s1 + $0x1e0] sm:$0xf]
        %v1022 = vld [vmem:[%s1 + $0x1e4] sm:$0xf]
        %v1023 = vld [vmem:[%s1 + $0x1e8] sm:$0xf]
        %v1024 = vld [vmem:[%s1 + $0x1ec] sm:$0xf]
        %v1025 = vld [vmem:[%s1 + $0x1f0] sm:$0xf]
        %v1026 = vld [vmem:[%s1 + $0x1f4] sm:$0xf]
        %v1027 = vld [vmem:[%s1 + $0x1f8] sm:$0xf]
        %v1028 = vld [vmem:[%s1 + $0x1fc] sm:$0xf]
        %v1029 = vld [vmem:[%s1 + $0x200] sm:$0xf]
        %v1030 = vld [vmem:[%s1 + $0x204] sm:$0xf]
        %v1031 = vld [vmem:[%s1 + $0x208] sm:$0xf]
        %v1032 = vld [vmem:[%s1 + $0x20c] sm:$0xf]
        %v1033 = vld [vmem:[%s1 + $0x210] sm:$0xf]
        %v1034 = vld [vmem:[%s1 + $0x214] sm:$0xf]
        %v1035 = vld [vmem:[%s1 + $0x218] sm:$0xf]
        %v1036 = vld [vmem:[%s1 + $0x21c] sm:$0xf]
        %v1037 = vld [vmem:[%s1 + $0x220] sm:$0xf]
        %v1038 = vld [vmem:[%s1 + $0x224] sm:$0xf]
        %v1039 = vld [vmem:[%s1 + $0x228] sm:$0xf]
        %v1040 = vld [vmem:[%s1 + $0x22c] sm:$0xf]
        %v1041 = vld [vmem:[%s1 + $0x230] sm:$0xf]
        %v1042 = vld [vmem:[%s1 + $0x234] sm:$0xf]
        %v1043 = vld [vmem:[%s1 + $0x238] sm:$0xf]
        %v1044 = vld [vmem:[%s1 + $0x23c] sm:$0xf]
        %v1045 = vld [vmem:[%s2] sm:$0x1]
        %v1047 = vlaneseq
        %v1048 = vshrl.u32 %v1047, 7
        %v1049 = vsub.s32 0, %v1048
        %v1050 = vrot.slane %v1045, %v1049
        %v1196 = vunpack.c.l.b16 %v901
        %v1197 = vunpack.c.l.b16 %v902
        %v1198 = vunpack.c.l.b16 %v903
        %v1199 = vunpack.c.l.b16 %v904
        %v1200 = vunpack.c.l.b16 %v905
        %v1201 = vunpack.c.l.b16 %v906
        %v1202 = vunpack.c.l.b16 %v907
        %v1203 = vunpack.c.l.b16 %v908
        %v1204 = vunpack.c.l.b16 %v909
        %v1205 = vunpack.c.l.b16 %v910
        %v1206 = vunpack.c.l.b16 %v911
        %v1207 = vunpack.c.l.b16 %v912
        %v1208 = vunpack.c.l.b16 %v913
        %v1209 = vunpack.c.l.b16 %v914
        %v1210 = vunpack.c.l.b16 %v915
        %v1211 = vunpack.c.l.b16 %v916
        %v1212 = vunpack.c.l.b16 %v917
        %v1213 = vunpack.c.l.b16 %v918
        %v1214 = vunpack.c.l.b16 %v919
        %v1215 = vunpack.c.l.b16 %v920
        %v1216 = vunpack.c.l.b16 %v921
        %v1217 = vunpack.c.l.b16 %v922
        %v1218 = vunpack.c.l.b16 %v923
        %v1219 = vunpack.c.l.b16 %v924
        %v1220 = vunpack.c.l.b16 %v925
        %v1221 = vunpack.c.l.b16 %v926
        %v1222 = vunpack.c.l.b16 %v927
        %v1223 = vunpack.c.l.b16 %v928
        %v1224 = vunpack.c.l.b16 %v929
        %v1225 = vunpack.c.l.b16 %v930
        %v1226 = vunpack.c.l.b16 %v931
        %v1227 = vunpack.c.l.b16 %v932
        %v1228 = vunpack.c.l.b16 %v933
        %v1229 = vunpack.c.l.b16 %v934
        %v1230 = vunpack.c.l.b16 %v935
        %v1231 = vunpack.c.l.b16 %v936
        %v1232 = vunpack.c.l.b16 %v937
        %v1233 = vunpack.c.l.b16 %v938
        %v1234 = vunpack.c.l.b16 %v939
        %v1235 = vunpack.c.l.b16 %v940
        %v1236 = vunpack.c.l.b16 %v941
        %v1237 = vunpack.c.l.b16 %v942
        %v1238 = vunpack.c.l.b16 %v943
        %v1239 = vunpack.c.l.b16 %v944
        %v1240 = vunpack.c.l.b16 %v945
        %v1241 = vunpack.c.l.b16 %v946
        %v1242 = vunpack.c.l.b16 %v947
        %v1243 = vunpack.c.l.b16 %v948
        %v1244 = vunpack.c.l.b16 %v949
        %v1245 = vunpack.c.l.b16 %v950
        %v1246 = vunpack.c.l.b16 %v951
        %v1247 = vunpack.c.l.b16 %v952
        %v1248 = vunpack.c.l.b16 %v953
        %v1249 = vunpack.c.l.b16 %v954
        %v1250 = vunpack.c.l.b16 %v955
        %v1251 = vunpack.c.l.b16 %v956
        %v1252 = vunpack.c.l.b16 %v957
        %v1253 = vunpack.c.l.b16 %v958
        %v1254 = vunpack.c.l.b16 %v959
        %v1255 = vunpack.c.l.b16 %v960
        %v1256 = vunpack.c.l.b16 %v961
        %v1257 = vunpack.c.l.b16 %v962
        %v1258 = vunpack.c.l.b16 %v963
        %v1259 = vunpack.c.l.b16 %v964
        %v1260 = vunpack.c.l.b16 %v965
        %v1261 = vunpack.c.l.b16 %v966
        %v1262 = vunpack.c.l.b16 %v967
        %v1263 = vunpack.c.l.b16 %v968
        %v1264 = vunpack.c.l.b16 %v969
        %v1265 = vunpack.c.l.b16 %v970
        %v1266 = vunpack.c.l.b16 %v971
        %v1267 = vunpack.c.l.b16 %v972
        %v1268 = vunpack.c.l.b16 %v973
        %v1269 = vunpack.c.l.b16 %v974
        %v1270 = vunpack.c.l.b16 %v975
        %v1271 = vunpack.c.l.b16 %v976
        %v1272 = vunpack.c.l.b16 %v977
        %v1273 = vunpack.c.l.b16 %v978
        %v1274 = vunpack.c.l.b16 %v979
        %v1275 = vunpack.c.l.b16 %v980
        %v1276 = vunpack.c.l.b16 %v981
        %v1277 = vunpack.c.l.b16 %v982
        %v1278 = vunpack.c.l.b16 %v983
        %v1279 = vunpack.c.l.b16 %v984
        %v1280 = vunpack.c.l.b16 %v985
        %v1281 = vunpack.c.l.b16 %v986
        %v1282 = vunpack.c.l.b16 %v987
        %v1283 = vunpack.c.l.b16 %v988
        %v1284 = vunpack.c.l.b16 %v989
        %v1285 = vunpack.c.l.b16 %v990
        %v1286 = vunpack.c.l.b16 %v991
        %v1287 = vunpack.c.l.b16 %v992
        %v1288 = vunpack.c.l.b16 %v993
        %v1289 = vunpack.c.l.b16 %v994
        %v1290 = vunpack.c.l.b16 %v995
        %v1291 = vunpack.c.l.b16 %v996
        %v1292 = vunpack.c.l.b16 %v997
        %v1293 = vunpack.c.l.b16 %v998
        %v1294 = vunpack.c.l.b16 %v999
        %v1295 = vunpack.c.l.b16 %v1000
        %v1296 = vunpack.c.l.b16 %v1001
        %v1297 = vunpack.c.l.b16 %v1002
        %v1298 = vunpack.c.l.b16 %v1003
        %v1299 = vunpack.c.l.b16 %v1004
        %v1300 = vunpack.c.l.b16 %v1005
        %v1301 = vunpack.c.l.b16 %v1006
        %v1302 = vunpack.c.l.b16 %v1007
        %v1303 = vunpack.c.l.b16 %v1008
        %v1304 = vunpack.c.l.b16 %v1009
        %v1305 = vunpack.c.l.b16 %v1010
        %v1306 = vunpack.c.l.b16 %v1011
        %v1307 = vunpack.c.l.b16 %v1012
        %v1308 = vunpack.c.l.b16 %v1013
        %v1309 = vunpack.c.l.b16 %v1014
        %v1310 = vunpack.c.l.b16 %v1015
        %v1311 = vunpack.c.l.b16 %v1016
        %v1312 = vunpack.c.l.b16 %v1017
        %v1313 = vunpack.c.l.b16 %v1018
        %v1314 = vunpack.c.l.b16 %v1019
        %v1315 = vunpack.c.l.b16 %v1020
        %v1316 = vunpack.c.l.b16 %v1021
        %v1317 = vunpack.c.l.b16 %v1022
        %v1318 = vunpack.c.l.b16 %v1023
        %v1319 = vunpack.c.l.b16 %v1024
        %v1320 = vunpack.c.l.b16 %v1025
        %v1321 = vunpack.c.l.b16 %v1026
        %v1322 = vunpack.c.l.b16 %v1027
        %v1323 = vunpack.c.l.b16 %v1028
        %v1324 = vunpack.c.l.b16 %v1029
        %v1325 = vunpack.c.l.b16 %v1030
        %v1326 = vunpack.c.l.b16 %v1031
        %v1327 = vunpack.c.l.b16 %v1032
        %v1328 = vunpack.c.l.b16 %v1033
        %v1329 = vunpack.c.l.b16 %v1034
        %v1330 = vunpack.c.l.b16 %v1035
        %v1331 = vunpack.c.l.b16 %v1036
        %v1332 = vunpack.c.l.b16 %v1037
        %v1333 = vunpack.c.l.b16 %v1038
        %v1334 = vunpack.c.l.b16 %v1039
        %v1335 = vunpack.c.l.b16 %v1040
        %v1336 = vunpack.c.l.b16 %v1041
        %v1337 = vunpack.c.l.b16 %v1042
        %v1338 = vunpack.c.l.b16 %v1043
        %v1339 = vunpack.c.l.b16 %v1044
        %v1340 = vpack.c.b16 %v1197, %v1196
        %v1341 = vpack.c.b16 %v1199, %v1198
        %v1342 = vpack.c.b16 %v1201, %v1200
        %v1343 = vpack.c.b16 %v1203, %v1202
        %v1344 = vpack.c.b16 %v1205, %v1204
        %v1345 = vpack.c.b16 %v1207, %v1206
        %v1346 = vpack.c.b16 %v1209, %v1208
        %v1347 = vpack.c.b16 %v1211, %v1210
        %v1348 = vpack.c.b16 %v1213, %v1212
        %v1349 = vpack.c.b16 %v1215, %v1214
        %v1350 = vpack.c.b16 %v1217, %v1216
        %v1351 = vpack.c.b16 %v1219, %v1218
        %v1352 = vpack.c.b16 %v1221, %v1220
        %v1353 = vpack.c.b16 %v1223, %v1222
        %v1354 = vpack.c.b16 %v1225, %v1224
        %v1355 = vpack.c.b16 %v1227, %v1226
        %v1356 = vpack.c.b16 %v1229, %v1228
        %v1357 = vpack.c.b16 %v1231, %v1230
        %v1358 = vpack.c.b16 %v1233, %v1232
        %v1359 = vpack.c.b16 %v1235, %v1234
        %v1360 = vpack.c.b16 %v1237, %v1236
        %v1361 = vpack.c.b16 %v1239, %v1238
        %v1362 = vpack.c.b16 %v1241, %v1240
        %v1363 = vpack.c.b16 %v1243, %v1242
        %v1364 = vpack.c.b16 %v1245, %v1244
        %v1365 = vpack.c.b16 %v1247, %v1246
        %v1366 = vpack.c.b16 %v1249, %v1248
        %v1367 = vpack.c.b16 %v1251, %v1250
        %v1368 = vpack.c.b16 %v1253, %v1252
        %v1369 = vpack.c.b16 %v1255, %v1254
        %v1370 = vpack.c.b16 %v1257, %v1256
        %v1371 = vpack.c.b16 %v1259, %v1258
        %v1372 = vpack.c.b16 %v1261, %v1260
        %v1373 = vpack.c.b16 %v1263, %v1262
        %v1374 = vpack.c.b16 %v1265, %v1264
        %v1375 = vpack.c.b16 %v1267, %v1266
        %v1376 = vpack.c.b16 %v1269, %v1268
        %v1377 = vpack.c.b16 %v1271, %v1270
        %v1378 = vpack.c.b16 %v1273, %v1272
        %v1379 = vpack.c.b16 %v1275, %v1274
        %v1380 = vpack.c.b16 %v1277, %v1276
        %v1381 = vpack.c.b16 %v1279, %v1278
        %v1382 = vpack.c.b16 %v1281, %v1280
        %v1383 = vpack.c.b16 %v1283, %v1282
        %v1384 = vpack.c.b16 %v1285, %v1284
        %v1385 = vpack.c.b16 %v1287, %v1286
        %v1386 = vpack.c.b16 %v1289, %v1288
        %v1387 = vpack.c.b16 %v1291, %v1290
        %v1388 = vpack.c.b16 %v1293, %v1292
        %v1389 = vpack.c.b16 %v1295, %v1294
        %v1390 = vpack.c.b16 %v1297, %v1296
        %v1391 = vpack.c.b16 %v1299, %v1298
        %v1392 = vpack.c.b16 %v1301, %v1300
        %v1393 = vpack.c.b16 %v1303, %v1302
        %v1394 = vpack.c.b16 %v1305, %v1304
        %v1395 = vpack.c.b16 %v1307, %v1306
        %v1396 = vpack.c.b16 %v1309, %v1308
        %v1397 = vpack.c.b16 %v1311, %v1310
        %v1398 = vpack.c.b16 %v1313, %v1312
        %v1399 = vpack.c.b16 %v1315, %v1314
        %v1400 = vpack.c.b16 %v1317, %v1316
        %v1401 = vpack.c.b16 %v1319, %v1318
        %v1402 = vpack.c.b16 %v1321, %v1320
        %v1403 = vpack.c.b16 %v1323, %v1322
        %v1404 = vpack.c.b16 %v1325, %v1324
        %v1405 = vpack.c.b16 %v1327, %v1326
        %v1406 = vpack.c.b16 %v1329, %v1328
        %v1407 = vpack.c.b16 %v1331, %v1330
        %v1408 = vpack.c.b16 %v1333, %v1332
        %v1409 = vpack.c.b16 %v1335, %v1334
        %v1410 = vpack.c.b16 %v1337, %v1336
        %v1411 = vpack.c.b16 %v1339, %v1338
        %1484 = vmatprep.subr.bf16.mxu0 0
        %1485 = vmatpush1.bf16.msra.mxu0 %v1340
        %1486 = vmatprep.subr.bf16.mxu0 0
        %1487 = vmatpush1.bf16.msra.mxu0 %v1341
        %1488 = vmatprep.subr.bf16.mxu0 0
        %1489 = vmatpush1.bf16.msra.mxu0 %v1342
        %1490 = vmatprep.subr.bf16.mxu0 0
        %1491 = vmatpush1.bf16.msra.mxu0 %v1343
        %1492 = vmatprep.subr.bf16.mxu0 0
        %1493 = vmatpush1.bf16.msra.mxu0 %v1344
        %1494 = vmatprep.subr.bf16.mxu0 0
        %1495 = vmatpush1.bf16.msra.mxu0 %v1345
        %1496 = vmatprep.subr.bf16.mxu0 0
        %1497 = vmatpush1.bf16.msra.mxu0 %v1346
        %1498 = vmatprep.subr.bf16.mxu0 0
        %1499 = vmatpush1.bf16.msra.mxu0 %v1347
        %1500 = vmatprep.subr.bf16.mxu0 0
        %1501 = vmatpush1.bf16.msra.mxu0 %v1348
        %1502 = vmatprep.subr.bf16.mxu0 0
        %1503 = vmatpush1.bf16.msra.mxu0 %v1349
        %1504 = vmatprep.subr.bf16.mxu0 0
        %1505 = vmatpush1.bf16.msra.mxu0 %v1350
        %1506 = vmatprep.subr.bf16.mxu0 0
        %1507 = vmatpush1.bf16.msra.mxu0 %v1351
        %1508 = vmatprep.subr.bf16.mxu0 0
        %1509 = vmatpush1.bf16.msra.mxu0 %v1352
        %1510 = vmatprep.subr.bf16.mxu0 0
        %1511 = vmatpush1.bf16.msra.mxu0 %v1353
        %1512 = vmatprep.subr.bf16.mxu0 0
        %1513 = vmatpush1.bf16.msra.mxu0 %v1354
        %1514 = vmatprep.subr.bf16.mxu0 0
        %1515 = vmatpush1.bf16.msra.mxu0 %v1355
        %1516 = vmatprep.mubr.bf16.mxu0 %v749
        %1517 = vmatmul.mubr.bf16.gmra.mrb[0].mxu0 %v725
        %v1518 = vpop.f32.mrb[0].mxu0
        %v1519 = vadd.f32 %v1050, %v1518
        %v1520 = vpop.f32.mrb[0].mxu0
        %v1521 = vpop.f32.mrb[0].mxu0
        %v1522 = vadd.f32 %v1050, %v1521
        %v1523 = vpop.f32.mrb[0].mxu0
        %1524 = vmatprep.mubr.bf16.mxu0 %v750
        %1525 = vmatmul.mubr.bf16.gmra.mrb[0].mxu0 %v726
        %v1526 = vpop.f32.mrb[0].mxu0
        %v1527 = vadd.f32 %v1050, %v1526
        %v1528 = vpop.f32.mrb[0].mxu0
        %v1529 = vpop.f32.mrb[0].mxu0
        %v1530 = vadd.f32 %v1050, %v1529
        %v1531 = vpop.f32.mrb[0].mxu0
        %1532 = vmatprep.mubr.bf16.mxu0 %v751
        %1533 = vmatmul.mubr.bf16.gmra.mrb[0].mxu0 %v727
        %v1534 = vpop.f32.mrb[0].mxu0
        %v1535 = vadd.f32 %v1050, %v1534
        %v1536 = vpop.f32.mrb[0].mxu0
        %v1537 = vpop.f32.mrb[0].mxu0
        %v1538 = vadd.f32 %v1050, %v1537
        %v1539 = vpop.f32.mrb[0].mxu0
        %1540 = vmatprep.mubr.bf16.mxu0 %v752
        %1541 = vmatmul.mubr.bf16.gmra.mrb[0].mxu0 %v728
        %v1542 = vpop.f32.mrb[0].mxu0
        %v1543 = vadd.f32 %v1050, %v1542
        %v1544 = vpop.f32.mrb[0].mxu0
        %v1545 = vpop.f32.mrb[0].mxu0
        %v1546 = vadd.f32 %v1050, %v1545
        %v1547 = vpop.f32.mrb[0].mxu0
        %1548 = vdwg.mxu0
        %1549 = vmatprep.subr.bf16.mxu0 0
        %1550 = vmatpush1.bf16.msra.mxu0 %v1356
        %1551 = vmatprep.subr.bf16.mxu0 0
        %1552 = vmatpush1.bf16.msra.mxu0 %v1357
        %1553 = vmatprep.subr.bf16.mxu0 0
        %1554 = vmatpush1.bf16.msra.mxu0 %v1358
        %1555 = vmatprep.subr.bf16.mxu0 0
        %1556 = vmatpush1.bf16.msra.mxu0 %v1359
        %1557 = vmatprep.subr.bf16.mxu0 0
        %1558 = vmatpush1.bf16.msra.mxu0 %v1360
        %1559 = vmatprep.subr.bf16.mxu0 0
        %1560 = vmatpush1.bf16.msra.mxu0 %v1361
        %1561 = vmatprep.subr.bf16.mxu0 0
        %1562 = vmatpush1.bf16.msra.mxu0 %v1362
        %1563 = vmatprep.subr.bf16.mxu0 0
        %1564 = vmatpush1.bf16.msra.mxu0 %v1363
        %1565 = vmatprep.subr.bf16.mxu0 0
        %1566 = vmatpush1.bf16.msra.mxu0 %v1364
        %1567 = vmatprep.subr.bf16.mxu0 0
        %1568 = vmatpush1.bf16.msra.mxu0 %v1365
        %1569 = vmatprep.subr.bf16.mxu0 0
        %1570 = vmatpush1.bf16.msra.mxu0 %v1366
        %1571 = vmatprep.subr.bf16.mxu0 0
        %1572 = vmatpush1.bf16.msra.mxu0 %v1367
        %1573 = vmatprep.subr.bf16.mxu0 0
        %1574 = vmatpush1.bf16.msra.mxu0 %v1368
        %1575 = vmatprep.subr.bf16.mxu0 0
        %1576 = vmatpush1.bf16.msra.mxu0 %v1369
        %1577 = vmatprep.subr.bf16.mxu0 0
        %1578 = vmatpush1.bf16.msra.mxu0 %v1370
        %1579 = vmatprep.subr.bf16.mxu0 0
        %1580 = vmatpush1.bf16.msra.mxu0 %v1371
        %1581 = vmatprep.mubr.bf16.mxu0 %v789
        %1582 = vmatmul.mubr.bf16.gmra.mrb[0].mxu0 %v765
        %v1583 = vpop.f32.mrb[0].mxu0
        %v1584 = vadd.f32 %v1519, %v1583
        %v1585 = vpop.f32.mrb[0].mxu0
        %v1586 = vpop.f32.mrb[0].mxu0
        %v1587 = vadd.f32 %v1522, %v1586
        %v1588 = vpop.f32.mrb[0].mxu0
        %1589 = vmatprep.mubr.bf16.mxu0 %v790
        %1590 = vmatmul.mubr.bf16.gmra.mrb[0].mxu0 %v766
        %v1591 = vpop.f32.mrb[0].mxu0
        %v1592 = vadd.f32 %v1527, %v1591
        %v1593 = vpop.f32.mrb[0].mxu0
        %v1594 = vpop.f32.mrb[0].mxu0
        %v1595 = vadd.f32 %v1530, %v1594
        %v1596 = vpop.f32.mrb[0].mxu0
        %1597 = vmatprep.mubr.bf16.mxu0 %v791
        %1598 = vmatmul.mubr.bf16.gmra.mrb[0].mxu0 %v767
        %v1599 = vpop.f32.mrb[0].mxu0
        %v1600 = vadd.f32 %v1535, %v1599
        %v1601 = vpop.f32.mrb[0].mxu0
        %v1602 = vpop.f32.mrb[0].mxu0
        %v1603 = vadd.f32 %v1538, %v1602
        %v1604 = vpop.f32.mrb[0].mxu0
        %1605 = vmatprep.mubr.bf16.mxu0 %v792
        %1606 = vmatmul.mubr.bf16.gmra.mrb[0].mxu0 %v768
        %v1607 = vpop.f32.mrb[0].mxu0
        %v1608 = vadd.f32 %v1543, %v1607
        %v1609 = vpop.f32.mrb[0].mxu0
        %v1610 = vpop.f32.mrb[0].mxu0
        %v1611 = vadd.f32 %v1546, %v1610
        %v1612 = vpop.f32.mrb[0].mxu0
        %1613 = vdwg.mxu0
        %1614 = vmatprep.subr.bf16.mxu0 0
        %1615 = vmatpush1.bf16.msra.mxu0 %v1372
        %1616 = vmatprep.subr.bf16.mxu0 0
        %1617 = vmatpush1.bf16.msra.mxu0 %v1373
        %1618 = vmatprep.subr.bf16.mxu0 0
        %1619 = vmatpush1.bf16.msra.mxu0 %v1374
        %1620 = vmatprep.subr.bf16.mxu0 0
        %1621 = vmatpush1.bf16.msra.mxu0 %v1375
        %1622 = vmatprep.subr.bf16.mxu0 0
        %1623 = vmatpush1.bf16.msra.mxu0 %v1376
        %1624 = vmatprep.subr.bf16.mxu0 0
        %1625 = vmatpush1.bf16.msra.mxu0 %v1377
        %1626 = vmatprep.subr.bf16.mxu0 0
        %1627 = vmatpush1.bf16.msra.mxu0 %v1378
        %1628 = vmatprep.subr.bf16.mxu0 0
        %1629 = vmatpush1.bf16.msra.mxu0 %v1379
        %1630 = vmatprep.subr.bf16.mxu0 0
        %1631 = vmatpush1.bf16.msra.mxu0 %v1380
        %1632 = vmatprep.subr.bf16.mxu0 0
        %1633 = vmatpush1.bf16.msra.mxu0 %v1381
        %1634 = vmatprep.subr.bf16.mxu0 0
        %1635 = vmatpush1.bf16.msra.mxu0 %v1382
        %1636 = vmatprep.subr.bf16.mxu0 0
        %1637 = vmatpush1.bf16.msra.mxu0 %v1383
        %1638 = vmatprep.subr.bf16.mxu0 0
        %1639 = vmatpush1.bf16.msra.mxu0 %v1384
        %1640 = vmatprep.subr.bf16.mxu0 0
        %1641 = vmatpush1.bf16.msra.mxu0 %v1385
        %1642 = vmatprep.subr.bf16.mxu0 0
        %1643 = vmatpush1.bf16.msra.mxu0 %v1386
        %1644 = vmatprep.subr.bf16.mxu0 0
        %1645 = vmatpush1.bf16.msra.mxu0 %v1387
        %1646 = vmatprep.mubr.bf16.mxu0 %v829
        %1647 = vmatmul.mubr.bf16.gmra.mrb[0].mxu0 %v813
        %v1648 = vpop.f32.mrb[0].mxu0
        %v1649 = vadd.f32 %v1584, %v1648
        %v1650 = vpop.f32.mrb[0].mxu0
        %v1651 = vpop.f32.mrb[0].mxu0
        %v1652 = vadd.f32 %v1587, %v1651
        %v1653 = vpop.f32.mrb[0].mxu0
        %1654 = vmatprep.mubr.bf16.mxu0 %v830
        %1655 = vmatmul.mubr.bf16.gmra.mrb[0].mxu0 %v814
        %v1656 = vpop.f32.mrb[0].mxu0
        %v1657 = vadd.f32 %v1592, %v1656
        %v1658 = vpop.f32.mrb[0].mxu0
        %v1659 = vpop.f32.mrb[0].mxu0
        %v1660 = vadd.f32 %v1595, %v1659
        %v1661 = vpop.f32.mrb[0].mxu0
        %1662 = vmatprep.mubr.bf16.mxu0 %v831
        %1663 = vmatmul.mubr.bf16.gmra.mrb[0].mxu0 %v815
        %v1664 = vpop.f32.mrb[0].mxu0
        %v1665 = vadd.f32 %v1600, %v1664
        %v1666 = vpop.f32.mrb[0].mxu0
        %v1667 = vpop.f32.mrb[0].mxu0
        %v1668 = vadd.f32 %v1603, %v1667
        %v1669 = vpop.f32.mrb[0].mxu0
        %1670 = vmatprep.mubr.bf16.mxu0 %v832
        %1671 = vmatmul.mubr.bf16.gmra.mrb[0].mxu0 %v816
        %v1672 = vpop.f32.mrb[0].mxu0
        %v1673 = vadd.f32 %v1608, %v1672
        %v1674 = vpop.f32.mrb[0].mxu0
        %v1675 = vpop.f32.mrb[0].mxu0
        %v1676 = vadd.f32 %v1611, %v1675
        %v1677 = vpop.f32.mrb[0].mxu0
        %1678 = vdwg.mxu0
        %1679 = vmatprep.subr.bf16.mxu0 0
        %1680 = vmatpush1.bf16.msra.mxu0 %v1388
        %1681 = vmatprep.subr.bf16.mxu0 0
        %1682 = vmatpush1.bf16.msra.mxu0 %v1389
        %1683 = vmatprep.subr.bf16.mxu0 0
        %1684 = vmatpush1.bf16.msra.mxu0 %v1390
        %1685 = vmatprep.subr.bf16.mxu0 0
        %1686 = vmatpush1.bf16.msra.mxu0 %v1391
        %1687 = vmatprep.subr.bf16.mxu0 0
        %1688 = vmatpush1.bf16.msra.mxu0 %v1392
        %1689 = vmatprep.subr.bf16.mxu0 0
        %1690 = vmatpush1.bf16.msra.mxu0 %v1393
        %1691 = vmatprep.subr.bf16.mxu0 0
        %1692 = vmatpush1.bf16.msra.mxu0 %v1394
        %1693 = vmatprep.subr.bf16.mxu0 0
        %1694 = vmatpush1.bf16.msra.mxu0 %v1395
        %1695 = vmatprep.subr.bf16.mxu0 0
        %1696 = vmatpush1.bf16.msra.mxu0 %v1396
        %1697 = vmatprep.subr.bf16.mxu0 0
        %1698 = vmatpush1.bf16.msra.mxu0 %v1397
        %1699 = vmatprep.subr.bf16.mxu0 0
        %1700 = vmatpush1.bf16.msra.mxu0 %v1398
        %1701 = vmatprep.subr.bf16.mxu0 0
        %1702 = vmatpush1.bf16.msra.mxu0 %v1399
        %1703 = vmatprep.subr.bf16.mxu0 0
        %1704 = vmatpush1.bf16.msra.mxu0 %v1400
        %1705 = vmatprep.subr.bf16.mxu0 0
        %1706 = vmatpush1.bf16.msra.mxu0 %v1401
        %1707 = vmatprep.subr.bf16.mxu0 0
        %1708 = vmatpush1.bf16.msra.mxu0 %v1402
        %1709 = vmatprep.subr.bf16.mxu0 0
        %1710 = vmatpush1.bf16.msra.mxu0 %v1403
        %1711 = vmatprep.mubr.bf16.mxu0 %v877
        %1712 = vmatmul.mubr.bf16.gmra.mrb[0].mxu0 %v853
        %v1713 = vpop.f32.mrb[0].mxu0
        %v1714 = vadd.f32 %v1649, %v1713
        %v1715 = vpop.f32.mrb[0].mxu0
        %v1716 = vpop.f32.mrb[0].mxu0
        %v1717 = vadd.f32 %v1652, %v1716
        %v1718 = vpop.f32.mrb[0].mxu0
        %1719 = vmatprep.mubr.bf16.mxu0 %v878
        %1720 = vmatmul.mubr.bf16.gmra.mrb[0].mxu0 %v854
        %v1721 = vpop.f32.mrb[0].mxu0
        %v1722 = vadd.f32 %v1657, %v1721
        %v1723 = vpop.f32.mrb[0].mxu0
        %v1724 = vpop.f32.mrb[0].mxu0
        %v1725 = vadd.f32 %v1660, %v1724
        %v1726 = vpop.f32.mrb[0].mxu0
        %1727 = vmatprep.mubr.bf16.mxu0 %v879
        %1728 = vmatmul.mubr.bf16.gmra.mrb[0].mxu0 %v855
        %v1729 = vpop.f32.mrb[0].mxu0
        %v1730 = vadd.f32 %v1665, %v1729
        %v1731 = vpop.f32.mrb[0].mxu0
        %v1732 = vpop.f32.mrb[0].mxu0
        %v1733 = vadd.f32 %v1668, %v1732
        %v1734 = vpop.f32.mrb[0].mxu0
        %1735 = vmatprep.mubr.bf16.mxu0 %v880
        %1736 = vmatmul.mubr.bf16.gmra.mrb[0].mxu0 %v856
        %v1737 = vpop.f32.mrb[0].mxu0
        %v1738 = vadd.f32 %v1673, %v1737
        %v1739 = vpop.f32.mrb[0].mxu0
        %v1740 = vpop.f32.mrb[0].mxu0
        %v1741 = vadd.f32 %v1676, %v1740
        %v1742 = vpop.f32.mrb[0].mxu0
        %1743 = vdwg.mxu0
        %1744 = vmatprep.subr.bf16.mxu0 0
        %1745 = vmatpush1.bf16.msra.mxu0 %v1404
        %1746 = vmatprep.subr.bf16.mxu0 0
        %1747 = vmatpush1.bf16.msra.mxu0 %v1405
        %1748 = vmatprep.subr.bf16.mxu0 0
        %1749 = vmatpush1.bf16.msra.mxu0 %v1406
        %1750 = vmatprep.subr.bf16.mxu0 0
        %1751 = vmatpush1.bf16.msra.mxu0 %v1407
        %1752 = vmatprep.subr.bf16.mxu0 0
        %1753 = vmatpush1.bf16.msra.mxu0 %v1408
        %1754 = vmatprep.subr.bf16.mxu0 0
        %1755 = vmatpush1.bf16.msra.mxu0 %v1409
        %1756 = vmatprep.subr.bf16.mxu0 0
        %1757 = vmatpush1.bf16.msra.mxu0 %v1410
        %1758 = vmatprep.subr.bf16.mxu0 0
        %1759 = vmatpush1.bf16.msra.mxu0 %v1411
        %1760 = vmatprep.subr.bf16.mxu0 0
        %1761 = vmatpush1.bf16.msra.mxu0 0
        %1762 = vmatprep.subr.bf16.mxu0 0
        %1763 = vmatpush1.bf16.msra.mxu0 0
        %1764 = vmatprep.subr.bf16.mxu0 0
        %1765 = vmatpush1.bf16.msra.mxu0 0
        %1766 = vmatprep.subr.bf16.mxu0 0
        %1767 = vmatpush1.bf16.msra.mxu0 0
        %1768 = vmatprep.subr.bf16.mxu0 0
        %1769 = vmatpush1.bf16.msra.mxu0 0
        %1770 = vmatprep.subr.bf16.mxu0 0
        %1771 = vmatpush1.bf16.msra.mxu0 0
        %1772 = vmatprep.subr.bf16.mxu0 0
        %1773 = vmatpush1.bf16.msra.mxu0 0
        %1774 = vmatprep.subr.bf16.mxu0 0
        %1775 = vmatpush1.bf16.msra.mxu0 0
        %1776 = vmatprep.mubr.bf16.mxu0 0
        %1777 = vmatmul.mubr.bf16.gmra.mrb[0].mxu0 %v893
        %v1778 = vpop.f32.mrb[0].mxu0
        %v1779 = vadd.f32 %v1714, %v1778
        %v1780 = vpop.f32.mrb[0].mxu0
        %v1781 = vpop.f32.mrb[0].mxu0
        %v1782 = vadd.f32 %v1717, %v1781
        %v1783 = vpop.f32.mrb[0].mxu0
        %1784 = vmatprep.mubr.bf16.mxu0 0
        %1785 = vmatmul.mubr.bf16.gmra.mrb[0].mxu0 %v894
        %v1786 = vpop.f32.mrb[0].mxu0
        %v1787 = vadd.f32 %v1722, %v1786
        %v1788 = vpop.f32.mrb[0].mxu0
        %v1789 = vpop.f32.mrb[0].mxu0
        %v1790 = vadd.f32 %v1725, %v1789
        %v1791 = vpop.f32.mrb[0].mxu0
        %1792 = vmatprep.mubr.bf16.mxu0 0
        %1793 = vmatmul.mubr.bf16.gmra.mrb[0].mxu0 %v895
        %v1794 = vpop.f32.mrb[0].mxu0
        %v1795 = vadd.f32 %v1730, %v1794
        %v1796 = vpop.f32.mrb[0].mxu0
        %v1797 = vpop.f32.mrb[0].mxu0
        %v1798 = vadd.f32 %v1733, %v1797
        %v1799 = vpop.f32.mrb[0].mxu0
        %1800 = vmatprep.mubr.bf16.mxu0 0
        %1801 = vmatmul.mubr.bf16.gmra.mrb[0].mxu0 %v896
        %v1802 = vpop.f32.mrb[0].mxu0
        %v1803 = vadd.f32 %v1738, %v1802
        %v1804 = vpop.f32.mrb[0].mxu0
        %v1805 = vpop.f32.mrb[0].mxu0
        %v1806 = vadd.f32 %v1741, %v1805
        %v1807 = vpop.f32.mrb[0].mxu0
        %1808 = vdwg.mxu0
        %v1809 = vmax.f32 %v1779, 0.0
        %v1810 = vmax.f32 %v1782, 0.0
        %v1811 = vmax.f32 %v1787, 0.0
        %v1812 = vmax.f32 %v1790, 0.0
        %v1813 = vmax.f32 %v1795, 0.0
        %v1814 = vmax.f32 %v1798, 0.0
        %v1815 = vmax.f32 %v1803, 0.0
        %v1816 = vmax.f32 %v1806, 0.0
        %1817 = vst [vmem:[#allocation2] sm:$0xf] 0
        %1818 = vst [vmem:[#allocation2 + $0x4] sm:$0x1] 0
        %1819 = vst [vmem:[#allocation2 + $0x8] sm:$0xf] 0
        %1820 = vst [vmem:[#allocation2 + $0xc] sm:$0x1] 0
        %1821 = vst [vmem:[#allocation2 + $0x10] sm:$0xf] 0
        %1822 = vst [vmem:[#allocation2 + $0x14] sm:$0x1] 0
        %1823 = vst [vmem:[#allocation2 + $0x18] sm:$0xf] 0
        %1824 = vst [vmem:[#allocation2 + $0x1c] sm:$0x1] 0
        %1825 = vst [vmem:[#allocation2 + $0x20] sm:$0xf] 0
        %1826 = vst [vmem:[#allocation2 + $0x24] sm:$0x1] 0
        %1827 = vst [vmem:[#allocation2 + $0x28] sm:$0xf] 0
        %1828 = vst [vmem:[#allocation2 + $0x2c] sm:$0x1] 0
        %1829 = vst [vmem:[#allocation2 + $0x30] sm:$0xf] 0
        %1830 = vst [vmem:[#allocation2 + $0x34] sm:$0x1] 0
        %1831 = vst [vmem:[#allocation2 + $0x38] sm:$0xf] 0
        %1832 = vst [vmem:[#allocation2 + $0x3c] sm:$0x1] 0
        %1833 = vst [vmem:[#allocation2 + $0x40] sm:$0xf] 0
        %1834 = vst [vmem:[#allocation2 + $0x44] sm:$0x1] 0
        %1835 = vst [vmem:[#allocation2 + $0x48] sm:$0xf] 0
        %1836 = vst [vmem:[#allocation2 + $0x4c] sm:$0x1] 0
        %v1837 = vpack.c.bf16 %v1809, %v1809
        %v1838 = vpack.c.bf16 %v1810, %v1810
        %v1839 = vpack.c.bf16 %v1811, %v1811
        %v1840 = vpack.c.bf16 %v1812, %v1812
        %v1841 = vpack.c.bf16 %v1813, %v1813
        %v1842 = vpack.c.bf16 %v1814, %v1814
        %v1843 = vpack.c.bf16 %v1815, %v1815
        %v1844 = vpack.c.bf16 %v1816, %v1816
        %v1853 = vunpack.c.l.b16 %v1837
        %v1854 = vunpack.c.l.b16 %v1838
        %v1855 = vunpack.c.l.b16 %v1839
        %v1856 = vunpack.c.l.b16 %v1840
        %v1857 = vunpack.c.l.b16 %v1841
        %v1858 = vunpack.c.l.b16 %v1842
        %v1859 = vunpack.c.l.b16 %v1843
        %v1860 = vunpack.c.l.b16 %v1844
        %v1861 = vpack.c.b16 %v1853, %v1853
        %v1862 = vpack.c.b16 %v1854, %v1854
        %v1863 = vpack.c.b16 %v1855, %v1855
        %v1864 = vpack.c.b16 %v1856, %v1856
        %v1865 = vpack.c.b16 %v1857, %v1857
        %v1866 = vpack.c.b16 %v1858, %v1858
        %v1867 = vpack.c.b16 %v1859, %v1859
        %v1868 = vpack.c.b16 %v1860, %v1860
        %v1870 = vshrl.u32 %v1861, 16
        %v1872 = vrot.slane %v1870, 7
        %v1873 = vshll.u32 %v1861, 16
        %v1875 = vor.u32 %v1872, %v1873
        %v1876 = vrot.slane %v1872, 4
        %v1878 = vshrl.u32 %v1862, 16
        %v1880 = vrot.slane %v1878, 7
        %v1881 = vshll.u32 %v1862, 16
        %v1883 = vor.u32 %v1880, %v1881
        %v1884 = vrot.slane %v1880, 4
        %v1886 = vshrl.u32 %v1863, 16
        %v1888 = vrot.slane %v1886, 7
        %v1889 = vshll.u32 %v1863, 16
        %v1891 = vor.u32 %v1888, %v1889
        %v1892 = vrot.slane %v1888, 4
        %v1894 = vshrl.u32 %v1864, 16
        %v1896 = vrot.slane %v1894, 7
        %v1897 = vshll.u32 %v1864, 16
        %v1899 = vor.u32 %v1896, %v1897
        %v1900 = vrot.slane %v1896, 4
        %v1902 = vshrl.u32 %v1865, 16
        %v1904 = vrot.slane %v1902, 7
        %v1905 = vshll.u32 %v1865, 16
        %v1907 = vor.u32 %v1904, %v1905
        %v1908 = vrot.slane %v1904, 4
        %v1910 = vshrl.u32 %v1866, 16
        %v1912 = vrot.slane %v1910, 7
        %v1913 = vshll.u32 %v1866, 16
        %v1915 = vor.u32 %v1912, %v1913
        %v1916 = vrot.slane %v1912, 4
        %v1918 = vshrl.u32 %v1867, 16
        %v1920 = vrot.slane %v1918, 7
        %v1921 = vshll.u32 %v1867, 16
        %v1923 = vor.u32 %v1920, %v1921
        %v1924 = vrot.slane %v1920, 4
        %v1926 = vshrl.u32 %v1868, 16
        %v1928 = vrot.slane %v1926, 7
        %v1929 = vshll.u32 %v1868, 16
        %v1931 = vor.u32 %v1928, %v1929
        %v1932 = vrot.slane %v1928, 4
        %s1949 = scalar_lea.vmem [#allocation2], 8
        %vm1950 = vcmask 1043456
        %vm1951 = vsmask.f32 7938
        %vm1952 = vmand %vm1950, %vm1951
        %v1953 = vld [vmem:[%s1949] sm:$0xf]
        %v1954 = vsel %vm1952, %v1875, %v1953
        %1955 = vst [vmem:[%s1949] sm:$0xf] %v1954
        %vm1956 = vcmask 1040384
        %vm1957 = vsmask.f32 256
        %vm1958 = vmand %vm1956, %vm1957
        %v1959 = vld [vmem:[%s1949 + $0x4] sm:$0x1]
        %v1960 = vsel %vm1958, %v1876, %v1959
        %1961 = vst [vmem:[%s1949 + $0x4] sm:$0x1] %v1960
        %v1962 = vld [vmem:[%s1949 + $0x8] sm:$0xf]
        %v1963 = vsel %vm1952, %v1883, %v1962
        %1964 = vst [vmem:[%s1949 + $0x8] sm:$0xf] %v1963
        %v1965 = vld [vmem:[%s1949 + $0xc] sm:$0x1]
        %v1966 = vsel %vm1958, %v1884, %v1965
        %1967 = vst [vmem:[%s1949 + $0xc] sm:$0x1] %v1966
        %v1968 = vld [vmem:[%s1949 + $0x10] sm:$0xf]
        %v1969 = vsel %vm1952, %v1891, %v1968
        %1970 = vst [vmem:[%s1949 + $0x10] sm:$0xf] %v1969
        %v1971 = vld [vmem:[%s1949 + $0x14] sm:$0x1]
        %v1972 = vsel %vm1958, %v1892, %v1971
        %1973 = vst [vmem:[%s1949 + $0x14] sm:$0x1] %v1972
        %v1974 = vld [vmem:[%s1949 + $0x18] sm:$0xf]
        %v1975 = vsel %vm1952, %v1899, %v1974
        %1976 = vst [vmem:[%s1949 + $0x18] sm:$0xf] %v1975
        %v1977 = vld [vmem:[%s1949 + $0x1c] sm:$0x1]
        %v1978 = vsel %vm1958, %v1900, %v1977
        %1979 = vst [vmem:[%s1949 + $0x1c] sm:$0x1] %v1978
        %v1980 = vld [vmem:[%s1949 + $0x20] sm:$0xf]
        %v1981 = vsel %vm1952, %v1907, %v1980
        %1982 = vst [vmem:[%s1949 + $0x20] sm:$0xf] %v1981
        %v1983 = vld [vmem:[%s1949 + $0x24] sm:$0x1]
        %v1984 = vsel %vm1958, %v1908, %v1983
        %1985 = vst [vmem:[%s1949 + $0x24] sm:$0x1] %v1984
        %v1986 = vld [vmem:[%s1949 + $0x28] sm:$0xf]
        %v1987 = vsel %vm1952, %v1915, %v1986
        %1988 = vst [vmem:[%s1949 + $0x28] sm:$0xf] %v1987
        %v1989 = vld [vmem:[%s1949 + $0x2c] sm:$0x1]
        %v1990 = vsel %vm1958, %v1916, %v1989
        %1991 = vst [vmem:[%s1949 + $0x2c] sm:$0x1] %v1990
        %v1992 = vld [vmem:[%s1949 + $0x30] sm:$0xf]
        %v1993 = vsel %vm1952, %v1923, %v1992
        %1994 = vst [vmem:[%s1949 + $0x30] sm:$0xf] %v1993
        %v1995 = vld [vmem:[%s1949 + $0x34] sm:$0x1]
        %v1996 = vsel %vm1958, %v1924, %v1995
        %1997 = vst [vmem:[%s1949 + $0x34] sm:$0x1] %v1996
        %v1998 = vld [vmem:[%s1949 + $0x38] sm:$0xf]
        %v1999 = vsel %vm1952, %v1931, %v1998
        %2000 = vst [vmem:[%s1949 + $0x38] sm:$0xf] %v1999
        %v2001 = vld [vmem:[%s1949 + $0x3c] sm:$0x1]
        %v2002 = vsel %vm1958, %v1932, %v2001
        %2003 = vst [vmem:[%s1949 + $0x3c] sm:$0x1] %v2002
        %v2004 = vld [vmem:[%s442] sm:$0xf]
        %v2005 = vld [vmem:[%s442 + $0x8] sm:$0xf]
        %v2006 = vld [vmem:[%s442 + $0x10] sm:$0xf]
        %v2007 = vld [vmem:[%s442 + $0x18] sm:$0xf]
        %v2008 = vld [vmem:[%s442 + $0x20] sm:$0xf]
        %v2009 = vld [vmem:[%s442 + $0x28] sm:$0xf]
        %v2010 = vld [vmem:[%s442 + $0x30] sm:$0xf]
        %v2011 = vld [vmem:[%s442 + $0x38] sm:$0xf]
        %v2012 = vld [vmem:[%s5] sm:$0xf]
        %v2013 = vld [vmem:[%s5 + $0x4] sm:$0xf]
        %v2014 = vld [vmem:[%s5 + $0x8] sm:$0xf]
        %v2015 = vld [vmem:[%s5 + $0xc] sm:$0xf]
        %v2016 = vld [vmem:[%s5 + $0x10] sm:$0xf]
        %v2017 = vld [vmem:[%s5 + $0x14] sm:$0xf]
        %v2018 = vld [vmem:[%s5 + $0x18] sm:$0xf]
        %v2019 = vld [vmem:[%s5 + $0x1c] sm:$0xf]
        %v2020 = vld [vmem:[%s5 + $0x20] sm:$0xf]
        %v2021 = vld [vmem:[%s5 + $0x24] sm:$0xf]
        %v2022 = vld [vmem:[%s5 + $0x28] sm:$0xf]
        %v2023 = vld [vmem:[%s5 + $0x2c] sm:$0xf]
        %v2024 = vld [vmem:[%s5 + $0x30] sm:$0xf]
        %v2025 = vld [vmem:[%s5 + $0x34] sm:$0xf]
        %v2026 = vld [vmem:[%s5 + $0x38] sm:$0xf]
        %v2027 = vld [vmem:[%s5 + $0x3c] sm:$0xf]
        %v2028 = vld [vmem:[%s6] sm:$0x1]
        %v2030 = vlaneseq
        %v2031 = vshrl.u32 %v2030, 7
        %v2032 = vsub.s32 0, %v2031
        %v2033 = vrot.slane %v2028, %v2032
        %v2043 = vunpack.c.l.b16 %v2004
        %v2044 = vunpack.c.l.b16 %v2005
        %v2045 = vunpack.c.l.b16 %v2006
        %v2046 = vunpack.c.l.b16 %v2007
        %v2047 = vunpack.c.l.b16 %v2008
        %v2048 = vunpack.c.l.b16 %v2009
        %v2049 = vunpack.c.l.b16 %v2010
        %v2050 = vunpack.c.l.b16 %v2011
        %v2051 = vpack.c.b16 %v2044, %v2043
        %v2052 = vpack.c.b16 %v2046, %v2045
        %v2053 = vpack.c.b16 %v2048, %v2047
        %v2054 = vpack.c.b16 %v2050, %v2049
        %v2075 = vunpack.c.l.b16 %v2012
        %v2076 = vunpack.c.l.b16 %v2013
        %v2077 = vunpack.c.l.b16 %v2014
        %v2078 = vunpack.c.l.b16 %v2015
        %v2079 = vunpack.c.l.b16 %v2016
        %v2080 = vunpack.c.l.b16 %v2017
        %v2081 = vunpack.c.l.b16 %v2018
        %v2082 = vunpack.c.l.b16 %v2019
        %v2083 = vunpack.c.l.b16 %v2020
        %v2084 = vunpack.c.l.b16 %v2021
        %v2085 = vunpack.c.l.b16 %v2022
        %v2086 = vunpack.c.l.b16 %v2023
        %v2087 = vunpack.c.l.b16 %v2024
        %v2088 = vunpack.c.l.b16 %v2025
        %v2089 = vunpack.c.l.b16 %v2026
        %v2090 = vunpack.c.l.b16 %v2027
        %v2091 = vpack.c.b16 %v2076, %v2075
        %v2092 = vpack.c.b16 %v2078, %v2077
        %v2093 = vpack.c.b16 %v2080, %v2079
        %v2094 = vpack.c.b16 %v2082, %v2081
        %v2095 = vpack.c.b16 %v2084, %v2083
        %v2096 = vpack.c.b16 %v2086, %v2085
        %v2097 = vpack.c.b16 %v2088, %v2087
        %v2098 = vpack.c.b16 %v2090, %v2089
        %2107 = vmatprep.subr.bf16.mxu0 0
        %2108 = vmatpush1.bf16.msra.mxu0 %v2091
        %2109 = vmatprep.subr.bf16.mxu0 0
        %2110 = vmatpush1.bf16.msra.mxu0 %v2092
        %2111 = vmatprep.subr.bf16.mxu0 0
        %2112 = vmatpush1.bf16.msra.mxu0 %v2093
        %2113 = vmatprep.subr.bf16.mxu0 0
        %2114 = vmatpush1.bf16.msra.mxu0 %v2094
        %2115 = vmatprep.subr.bf16.mxu0 0
        %2116 = vmatpush1.bf16.msra.mxu0 %v2095
        %2117 = vmatprep.subr.bf16.mxu0 0
        %2118 = vmatpush1.bf16.msra.mxu0 %v2096
        %2119 = vmatprep.subr.bf16.mxu0 0
        %2120 = vmatpush1.bf16.msra.mxu0 %v2097
        %2121 = vmatprep.subr.bf16.mxu0 0
        %2122 = vmatpush1.bf16.msra.mxu0 %v2098
        %2123 = vmatprep.subr.bf16.mxu0 0
        %2124 = vmatpush1.bf16.msra.mxu0 0
        %2125 = vmatprep.subr.bf16.mxu0 0
        %2126 = vmatpush1.bf16.msra.mxu0 0
        %2127 = vmatprep.subr.bf16.mxu0 0
        %2128 = vmatpush1.bf16.msra.mxu0 0
        %2129 = vmatprep.subr.bf16.mxu0 0
        %2130 = vmatpush1.bf16.msra.mxu0 0
        %2131 = vmatprep.subr.bf16.mxu0 0
        %2132 = vmatpush1.bf16.msra.mxu0 0
        %2133 = vmatprep.subr.bf16.mxu0 0
        %2134 = vmatpush1.bf16.msra.mxu0 0
        %2135 = vmatprep.subr.bf16.mxu0 0
        %2136 = vmatpush1.bf16.msra.mxu0 0
        %2137 = vmatprep.subr.bf16.mxu0 0
        %2138 = vmatpush1.bf16.msra.mxu0 0
        %2139 = vmatprep.mubr.bf16.mxu0 0
        %2140 = vmatmul.mubr.bf16.gmra.mrb[0].mxu0 %v2051
        %v2141 = vpop.f32.mrb[0].mxu0
        %v2142 = vadd.f32 %v2033, %v2141
        %v2143 = vpop.f32.mrb[0].mxu0
        %v2144 = vpop.f32.mrb[0].mxu0
        %v2145 = vadd.f32 %v2033, %v2144
        %v2146 = vpop.f32.mrb[0].mxu0
        %2147 = vmatprep.mubr.bf16.mxu0 0
        %2148 = vmatmul.mubr.bf16.gmra.mrb[0].mxu0 %v2052
        %v2149 = vpop.f32.mrb[0].mxu0
        %v2150 = vadd.f32 %v2033, %v2149
        %v2151 = vpop.f32.mrb[0].mxu0
        %v2152 = vpop.f32.mrb[0].mxu0
        %v2153 = vadd.f32 %v2033, %v2152
        %v2154 = vpop.f32.mrb[0].mxu0
        %2155 = vmatprep.mubr.bf16.mxu0 0
        %2156 = vmatmul.mubr.bf16.gmra.mrb[0].mxu0 %v2053
        %v2157 = vpop.f32.mrb[0].mxu0
        %v2158 = vadd.f32 %v2033, %v2157
        %v2159 = vpop.f32.mrb[0].mxu0
        %v2160 = vpop.f32.mrb[0].mxu0
        %v2161 = vadd.f32 %v2033, %v2160
        %v2162 = vpop.f32.mrb[0].mxu0
        %2163 = vmatprep.mubr.bf16.mxu0 0
        %2164 = vmatmul.mubr.bf16.gmra.mrb[0].mxu0 %v2054
        %v2165 = vpop.f32.mrb[0].mxu0
        %v2166 = vadd.f32 %v2033, %v2165
        %v2167 = vpop.f32.mrb[0].mxu0
        %v2168 = vpop.f32.mrb[0].mxu0
        %v2169 = vadd.f32 %v2033, %v2168
        %v2170 = vpop.f32.mrb[0].mxu0
        %2171 = vdwg.mxu0
        %v2172 = vld [vmem:[#allocation2] sm:$0xf]
        %v2173 = vld [vmem:[#allocation2 + $0x8] sm:$0xf]
        %v2174 = vld [vmem:[#allocation2 + $0x10] sm:$0xf]
        %v2175 = vld [vmem:[#allocation2 + $0x18] sm:$0xf]
        %v2176 = vld [vmem:[#allocation2 + $0x20] sm:$0xf]
        %v2177 = vld [vmem:[#allocation2 + $0x28] sm:$0xf]
        %v2178 = vld [vmem:[#allocation2 + $0x30] sm:$0xf]
        %v2179 = vld [vmem:[#allocation2 + $0x38] sm:$0xf]
        %v2180 = vld [vmem:[#allocation2 + $0x4] sm:$0x1]
        %v2181 = vld [vmem:[#allocation2 + $0xc] sm:$0x1]
        %v2182 = vld [vmem:[#allocation2 + $0x14] sm:$0x1]
        %v2183 = vld [vmem:[#allocation2 + $0x1c] sm:$0x1]
        %v2184 = vld [vmem:[#allocation2 + $0x24] sm:$0x1]
        %v2185 = vld [vmem:[#allocation2 + $0x2c] sm:$0x1]
        %v2186 = vld [vmem:[#allocation2 + $0x34] sm:$0x1]
        %v2187 = vld [vmem:[#allocation2 + $0x3c] sm:$0x1]
        %v2189 = vshrl.u32 %v2172, 16
        %v2191 = vrot.slane %v2189, 4
        %v2192 = vshll.u32 %v2172, 16
        %v2194 = vrot.slane %v2192, 5
        %v2195 = vor.u32 %v2191, %v2194
        %v2196 = vrot.slane %v2195, 4
        %v2198 = vshll.u32 %v2180, 16
        %v2200 = vrot.slane %v2198, 5
        %v2201 = vsel %vm320, %v2196, %v2200
        %v2203 = vshrl.u32 %v2173, 16
        %v2205 = vrot.slane %v2203, 4
        %v2206 = vshll.u32 %v2173, 16
        %v2208 = vrot.slane %v2206, 5
        %v2209 = vor.u32 %v2205, %v2208
        %v2210 = vrot.slane %v2209, 4
        %v2212 = vshll.u32 %v2181, 16
        %v2214 = vrot.slane %v2212, 5
        %v2215 = vsel %vm320, %v2210, %v2214
        %v2217 = vshrl.u32 %v2174, 16
        %v2219 = vrot.slane %v2217, 4
        %v2220 = vshll.u32 %v2174, 16
        %v2222 = vrot.slane %v2220, 5
        %v2223 = vor.u32 %v2219, %v2222
        %v2224 = vrot.slane %v2223, 4
        %v2226 = vshll.u32 %v2182, 16
        %v2228 = vrot.slane %v2226, 5
        %v2229 = vsel %vm320, %v2224, %v2228
        %v2231 = vshrl.u32 %v2175, 16
        %v2233 = vrot.slane %v2231, 4
        %v2234 = vshll.u32 %v2175, 16
        %v2236 = vrot.slane %v2234, 5
        %v2237 = vor.u32 %v2233, %v2236
        %v2238 = vrot.slane %v2237, 4
        %v2240 = vshll.u32 %v2183, 16
        %v2242 = vrot.slane %v2240, 5
        %v2243 = vsel %vm320, %v2238, %v2242
        %v2245 = vshrl.u32 %v2176, 16
        %v2247 = vrot.slane %v2245, 4
        %v2248 = vshll.u32 %v2176, 16
        %v2250 = vrot.slane %v2248, 5
        %v2251 = vor.u32 %v2247, %v2250
        %v2252 = vrot.slane %v2251, 4
        %v2254 = vshll.u32 %v2184, 16
        %v2256 = vrot.slane %v2254, 5
        %v2257 = vsel %vm320, %v2252, %v2256
        %v2259 = vshrl.u32 %v2177, 16
        %v2261 = vrot.slane %v2259, 4
        %v2262 = vshll.u32 %v2177, 16
        %v2264 = vrot.slane %v2262, 5
        %v2265 = vor.u32 %v2261, %v2264
        %v2266 = vrot.slane %v2265, 4
        %v2268 = vshll.u32 %v2185, 16
        %v2270 = vrot.slane %v2268, 5
        %v2271 = vsel %vm320, %v2266, %v2270
        %v2273 = vshrl.u32 %v2178, 16
        %v2275 = vrot.slane %v2273, 4
        %v2276 = vshll.u32 %v2178, 16
        %v2278 = vrot.slane %v2276, 5
        %v2279 = vor.u32 %v2275, %v2278
        %v2280 = vrot.slane %v2279, 4
        %v2282 = vshll.u32 %v2186, 16
        %v2284 = vrot.slane %v2282, 5
        %v2285 = vsel %vm320, %v2280, %v2284
        %v2287 = vshrl.u32 %v2179, 16
        %v2289 = vrot.slane %v2287, 4
        %v2290 = vshll.u32 %v2179, 16
        %v2292 = vrot.slane %v2290, 5
        %v2293 = vor.u32 %v2289, %v2292
        %v2294 = vrot.slane %v2293, 4
        %v2296 = vshll.u32 %v2187, 16
        %v2298 = vrot.slane %v2296, 5
        %v2299 = vsel %vm320, %v2294, %v2298
        %v2300 = vld [vmem:[#allocation2] sm:$0xe]
        %v2301 = vld [vmem:[#allocation2 + $0x8] sm:$0xe]
        %v2302 = vld [vmem:[#allocation2 + $0x10] sm:$0xe]
        %v2303 = vld [vmem:[#allocation2 + $0x18] sm:$0xe]
        %v2304 = vld [vmem:[#allocation2 + $0x20] sm:$0xe]
        %v2305 = vld [vmem:[#allocation2 + $0x28] sm:$0xe]
        %v2306 = vld [vmem:[#allocation2 + $0x30] sm:$0xe]
        %v2307 = vld [vmem:[#allocation2 + $0x38] sm:$0xe]
        %vm2324 = vcmask 1042432
        %vm2325 = vcmask 1046532
        %vm2326 = vmor %vm2324, %vm2325
        %v2327 = vrot.slane %v2300, 5
        %v2328 = vrot.slane %v2327, 4
        %v2329 = vrot.slane %v2180, 5
        %v2330 = vsel %vm2326, %v2328, %v2329
        %v2331 = vrot.slane %v2301, 5
        %v2332 = vrot.slane %v2331, 4
        %v2333 = vrot.slane %v2181, 5
        %v2334 = vsel %vm2326, %v2332, %v2333
        %v2335 = vrot.slane %v2302, 5
        %v2336 = vrot.slane %v2335, 4
        %v2337 = vrot.slane %v2182, 5
        %v2338 = vsel %vm2326, %v2336, %v2337
        %v2339 = vrot.slane %v2303, 5
        %v2340 = vrot.slane %v2339, 4
        %v2341 = vrot.slane %v2183, 5
        %v2342 = vsel %vm2326, %v2340, %v2341
        %v2343 = vrot.slane %v2304, 5
        %v2344 = vrot.slane %v2343, 4
        %v2345 = vrot.slane %v2184, 5
        %v2346 = vsel %vm2326, %v2344, %v2345
        %v2347 = vrot.slane %v2305, 5
        %v2348 = vrot.slane %v2347, 4
        %v2349 = vrot.slane %v2185, 5
        %v2350 = vsel %vm2326, %v2348, %v2349
        %v2351 = vrot.slane %v2306, 5
        %v2352 = vrot.slane %v2351, 4
        %v2353 = vrot.slane %v2186, 5
        %v2354 = vsel %vm2326, %v2352, %v2353
        %v2355 = vrot.slane %v2307, 5
        %v2356 = vrot.slane %v2355, 4
        %v2357 = vrot.slane %v2187, 5
        %v2358 = vsel %vm2326, %v2356, %v2357
        %v2359 = vld [vmem:[%s1949] sm:$0xf]
        %v2360 = vld [vmem:[%s1949 + $0x8] sm:$0xf]
        %v2361 = vld [vmem:[%s1949 + $0x10] sm:$0xf]
        %v2362 = vld [vmem:[%s1949 + $0x18] sm:$0xf]
        %v2363 = vld [vmem:[%s1949 + $0x20] sm:$0xf]
        %v2364 = vld [vmem:[%s1949 + $0x28] sm:$0xf]
        %v2365 = vld [vmem:[%s1949 + $0x30] sm:$0xf]
        %v2366 = vld [vmem:[%s1949 + $0x38] sm:$0xf]
        %v2367 = vld [vmem:[%s1949 + $0x4] sm:$0x1]
        %v2368 = vld [vmem:[%s1949 + $0xc] sm:$0x1]
        %v2369 = vld [vmem:[%s1949 + $0x14] sm:$0x1]
        %v2370 = vld [vmem:[%s1949 + $0x1c] sm:$0x1]
        %v2371 = vld [vmem:[%s1949 + $0x24] sm:$0x1]
        %v2372 = vld [vmem:[%s1949 + $0x2c] sm:$0x1]
        %v2373 = vld [vmem:[%s1949 + $0x34] sm:$0x1]
        %v2374 = vld [vmem:[%s1949 + $0x3c] sm:$0x1]
        %v2376 = vshrl.u32 %v2359, 16
        %v2378 = vrot.slane %v2376, 4
        %v2379 = vshll.u32 %v2359, 16
        %v2381 = vrot.slane %v2379, 5
        %v2382 = vor.u32 %v2378, %v2381
        %v2383 = vrot.slane %v2382, 4
        %v2385 = vshll.u32 %v2367, 16
        %v2387 = vrot.slane %v2385, 5
        %v2388 = vsel %vm320, %v2383, %v2387
        %v2390 = vshrl.u32 %v2360, 16
        %v2392 = vrot.slane %v2390, 4
        %v2393 = vshll.u32 %v2360, 16
        %v2395 = vrot.slane %v2393, 5
        %v2396 = vor.u32 %v2392, %v2395
        %v2397 = vrot.slane %v2396, 4
        %v2399 = vshll.u32 %v2368, 16
        %v2401 = vrot.slane %v2399, 5
        %v2402 = vsel %vm320, %v2397, %v2401
        %v2404 = vshrl.u32 %v2361, 16
        %v2406 = vrot.slane %v2404, 4
        %v2407 = vshll.u32 %v2361, 16
        %v2409 = vrot.slane %v2407, 5
        %v2410 = vor.u32 %v2406, %v2409
        %v2411 = vrot.slane %v2410, 4
        %v2413 = vshll.u32 %v2369, 16
        %v2415 = vrot.slane %v2413, 5
        %v2416 = vsel %vm320, %v2411, %v2415
        %v2418 = vshrl.u32 %v2362, 16
        %v2420 = vrot.slane %v2418, 4
        %v2421 = vshll.u32 %v2362, 16
        %v2423 = vrot.slane %v2421, 5
        %v2424 = vor.u32 %v2420, %v2423
        %v2425 = vrot.slane %v2424, 4
        %v2427 = vshll.u32 %v2370, 16
        %v2429 = vrot.slane %v2427, 5
        %v2430 = vsel %vm320, %v2425, %v2429
        %v2432 = vshrl.u32 %v2363, 16
        %v2434 = vrot.slane %v2432, 4
        %v2435 = vshll.u32 %v2363, 16
        %v2437 = vrot.slane %v2435, 5
        %v2438 = vor.u32 %v2434, %v2437
        %v2439 = vrot.slane %v2438, 4
        %v2441 = vshll.u32 %v2371, 16
        %v2443 = vrot.slane %v2441, 5
        %v2444 = vsel %vm320, %v2439, %v2443
        %v2446 = vshrl.u32 %v2364, 16
        %v2448 = vrot.slane %v2446, 4
        %v2449 = vshll.u32 %v2364, 16
        %v2451 = vrot.slane %v2449, 5
        %v2452 = vor.u32 %v2448, %v2451
        %v2453 = vrot.slane %v2452, 4
        %v2455 = vshll.u32 %v2372, 16
        %v2457 = vrot.slane %v2455, 5
        %v2458 = vsel %vm320, %v2453, %v2457
        %v2460 = vshrl.u32 %v2365, 16
        %v2462 = vrot.slane %v2460, 4
        %v2463 = vshll.u32 %v2365, 16
        %v2465 = vrot.slane %v2463, 5
        %v2466 = vor.u32 %v2462, %v2465
        %v2467 = vrot.slane %v2466, 4
        %v2469 = vshll.u32 %v2373, 16
        %v2471 = vrot.slane %v2469, 5
        %v2472 = vsel %vm320, %v2467, %v2471
        %v2474 = vshrl.u32 %v2366, 16
        %v2476 = vrot.slane %v2474, 4
        %v2477 = vshll.u32 %v2366, 16
        %v2479 = vrot.slane %v2477, 5
        %v2480 = vor.u32 %v2476, %v2479
        %v2481 = vrot.slane %v2480, 4
        %v2483 = vshll.u32 %v2374, 16
        %v2485 = vrot.slane %v2483, 5
        %v2486 = vsel %vm320, %v2481, %v2485
        %v2487 = vld [vmem:[%s1949] sm:$0xe]
        %v2488 = vld [vmem:[%s1949 + $0x8] sm:$0xe]
        %v2489 = vld [vmem:[%s1949 + $0x10] sm:$0xe]
        %v2490 = vld [vmem:[%s1949 + $0x18] sm:$0xe]
        %v2491 = vld [vmem:[%s1949 + $0x20] sm:$0xe]
        %v2492 = vld [vmem:[%s1949 + $0x28] sm:$0xe]
        %v2493 = vld [vmem:[%s1949 + $0x30] sm:$0xe]
        %v2494 = vld [vmem:[%s1949 + $0x38] sm:$0xe]
        %v2511 = vrot.slane %v2487, 5
        %v2512 = vrot.slane %v2511, 4
        %v2513 = vrot.slane %v2367, 5
        %v2514 = vsel %vm2326, %v2512, %v2513
        %v2515 = vrot.slane %v2488, 5
        %v2516 = vrot.slane %v2515, 4
        %v2517 = vrot.slane %v2368, 5
        %v2518 = vsel %vm2326, %v2516, %v2517
        %v2519 = vrot.slane %v2489, 5
        %v2520 = vrot.slane %v2519, 4
        %v2521 = vrot.slane %v2369, 5
        %v2522 = vsel %vm2326, %v2520, %v2521
        %v2523 = vrot.slane %v2490, 5
        %v2524 = vrot.slane %v2523, 4
        %v2525 = vrot.slane %v2370, 5
        %v2526 = vsel %vm2326, %v2524, %v2525
        %v2527 = vrot.slane %v2491, 5
        %v2528 = vrot.slane %v2527, 4
        %v2529 = vrot.slane %v2371, 5
        %v2530 = vsel %vm2326, %v2528, %v2529
        %v2531 = vrot.slane %v2492, 5
        %v2532 = vrot.slane %v2531, 4
        %v2533 = vrot.slane %v2372, 5
        %v2534 = vsel %vm2326, %v2532, %v2533
        %v2535 = vrot.slane %v2493, 5
        %v2536 = vrot.slane %v2535, 4
        %v2537 = vrot.slane %v2373, 5
        %v2538 = vsel %vm2326, %v2536, %v2537
        %v2539 = vrot.slane %v2494, 5
        %v2540 = vrot.slane %v2539, 4
        %v2541 = vrot.slane %v2374, 5
        %v2542 = vsel %vm2326, %v2540, %v2541
        %s2543 = scalar_lea.vmem [#allocation2], 16
        %v2544 = vld [vmem:[%s2543] sm:$0xf]
        %v2545 = vld [vmem:[%s2543 + $0x8] sm:$0xf]
        %v2546 = vld [vmem:[%s2543 + $0x10] sm:$0xf]
        %v2547 = vld [vmem:[%s2543 + $0x18] sm:$0xf]
        %v2548 = vld [vmem:[%s2543 + $0x20] sm:$0xf]
        %v2549 = vld [vmem:[%s2543 + $0x28] sm:$0xf]
        %v2550 = vld [vmem:[%s2543 + $0x30] sm:$0xf]
        %v2551 = vld [vmem:[%s2543 + $0x38] sm:$0xf]
        %v2552 = vld [vmem:[%s2543 + $0x4] sm:$0x1]
        %v2553 = vld [vmem:[%s2543 + $0xc] sm:$0x1]
        %v2554 = vld [vmem:[%s2543 + $0x14] sm:$0x1]
        %v2555 = vld [vmem:[%s2543 + $0x1c] sm:$0x1]
        %v2556 = vld [vmem:[%s2543 + $0x24] sm:$0x1]
        %v2557 = vld [vmem:[%s2543 + $0x2c] sm:$0x1]
        %v2558 = vld [vmem:[%s2543 + $0x34] sm:$0x1]
        %v2559 = vld [vmem:[%s2543 + $0x3c] sm:$0x1]
        %v2561 = vshrl.u32 %v2544, 16
        %v2563 = vrot.slane %v2561, 4
        %v2564 = vshll.u32 %v2544, 16
        %v2566 = vrot.slane %v2564, 5
        %v2567 = vor.u32 %v2563, %v2566
        %v2568 = vrot.slane %v2567, 4
        %v2570 = vshll.u32 %v2552, 16
        %v2572 = vrot.slane %v2570, 5
        %v2573 = vsel %vm320, %v2568, %v2572
        %v2575 = vshrl.u32 %v2545, 16
        %v2577 = vrot.slane %v2575, 4
        %v2578 = vshll.u32 %v2545, 16
        %v2580 = vrot.slane %v2578, 5
        %v2581 = vor.u32 %v2577, %v2580
        %v2582 = vrot.slane %v2581, 4
        %v2584 = vshll.u32 %v2553, 16
        %v2586 = vrot.slane %v2584, 5
        %v2587 = vsel %vm320, %v2582, %v2586
        %v2589 = vshrl.u32 %v2546, 16
        %v2591 = vrot.slane %v2589, 4
        %v2592 = vshll.u32 %v2546, 16
        %v2594 = vrot.slane %v2592, 5
        %v2595 = vor.u32 %v2591, %v2594
        %v2596 = vrot.slane %v2595, 4
        %v2598 = vshll.u32 %v2554, 16
        %v2600 = vrot.slane %v2598, 5
        %v2601 = vsel %vm320, %v2596, %v2600
        %v2603 = vshrl.u32 %v2547, 16
        %v2605 = vrot.slane %v2603, 4
        %v2606 = vshll.u32 %v2547, 16
        %v2608 = vrot.slane %v2606, 5
        %v2609 = vor.u32 %v2605, %v2608
        %v2610 = vrot.slane %v2609, 4
        %v2612 = vshll.u32 %v2555, 16
        %v2614 = vrot.slane %v2612, 5
        %v2615 = vsel %vm320, %v2610, %v2614
        %v2617 = vshrl.u32 %v2548, 16
        %v2619 = vrot.slane %v2617, 4
        %v2620 = vshll.u32 %v2548, 16
        %v2622 = vrot.slane %v2620, 5
        %v2623 = vor.u32 %v2619, %v2622
        %v2624 = vrot.slane %v2623, 4
        %v2626 = vshll.u32 %v2556, 16
        %v2628 = vrot.slane %v2626, 5
        %v2629 = vsel %vm320, %v2624, %v2628
        %v2631 = vshrl.u32 %v2549, 16
        %v2633 = vrot.slane %v2631, 4
        %v2634 = vshll.u32 %v2549, 16
        %v2636 = vrot.slane %v2634, 5
        %v2637 = vor.u32 %v2633, %v2636
        %v2638 = vrot.slane %v2637, 4
        %v2640 = vshll.u32 %v2557, 16
        %v2642 = vrot.slane %v2640, 5
        %v2643 = vsel %vm320, %v2638, %v2642
        %v2645 = vshrl.u32 %v2550, 16
        %v2647 = vrot.slane %v2645, 4
        %v2648 = vshll.u32 %v2550, 16
        %v2650 = vrot.slane %v2648, 5
        %v2651 = vor.u32 %v2647, %v2650
        %v2652 = vrot.slane %v2651, 4
        %v2654 = vshll.u32 %v2558, 16
        %v2656 = vrot.slane %v2654, 5
        %v2657 = vsel %vm320, %v2652, %v2656
        %v2659 = vshrl.u32 %v2551, 16
        %v2661 = vrot.slane %v2659, 4
        %v2662 = vshll.u32 %v2551, 16
        %v2664 = vrot.slane %v2662, 5
        %v2665 = vor.u32 %v2661, %v2664
        %v2666 = vrot.slane %v2665, 4
        %v2668 = vshll.u32 %v2559, 16
        %v2670 = vrot.slane %v2668, 5
        %v2671 = vsel %vm320, %v2666, %v2670
        %v2672 = vld [vmem:[%s2543] sm:$0xe]
        %v2673 = vld [vmem:[%s2543 + $0x8] sm:$0xe]
        %v2674 = vld [vmem:[%s2543 + $0x10] sm:$0xe]
        %v2675 = vld [vmem:[%s2543 + $0x18] sm:$0xe]
        %v2676 = vld [vmem:[%s2543 + $0x20] sm:$0xe]
        %v2677 = vld [vmem:[%s2543 + $0x28] sm:$0xe]
        %v2678 = vld [vmem:[%s2543 + $0x30] sm:$0xe]
        %v2679 = vld [vmem:[%s2543 + $0x38] sm:$0xe]
        %v2696 = vrot.slane %v2672, 5
        %v2697 = vrot.slane %v2696, 4
        %v2698 = vrot.slane %v2552, 5
        %v2699 = vsel %vm2326, %v2697, %v2698
        %v2700 = vrot.slane %v2673, 5
        %v2701 = vrot.slane %v2700, 4
        %v2702 = vrot.slane %v2553, 5
        %v2703 = vsel %vm2326, %v2701, %v2702
        %v2704 = vrot.slane %v2674, 5
        %v2705 = vrot.slane %v2704, 4
        %v2706 = vrot.slane %v2554, 5
        %v2707 = vsel %vm2326, %v2705, %v2706
        %v2708 = vrot.slane %v2675, 5
        %v2709 = vrot.slane %v2708, 4
        %v2710 = vrot.slane %v2555, 5
        %v2711 = vsel %vm2326, %v2709, %v2710
        %v2712 = vrot.slane %v2676, 5
        %v2713 = vrot.slane %v2712, 4
        %v2714 = vrot.slane %v2556, 5
        %v2715 = vsel %vm2326, %v2713, %v2714
        %v2716 = vrot.slane %v2677, 5
        %v2717 = vrot.slane %v2716, 4
        %v2718 = vrot.slane %v2557, 5
        %v2719 = vsel %vm2326, %v2717, %v2718
        %v2720 = vrot.slane %v2678, 5
        %v2721 = vrot.slane %v2720, 4
        %v2722 = vrot.slane %v2558, 5
        %v2723 = vsel %vm2326, %v2721, %v2722
        %v2724 = vrot.slane %v2679, 5
        %v2725 = vrot.slane %v2724, 4
        %v2726 = vrot.slane %v2559, 5
        %v2727 = vsel %vm2326, %v2725, %v2726
        %v2736 = vunpack.c.l.b16 %v2172
        %v2737 = vunpack.c.l.b16 %v2173
        %v2738 = vunpack.c.l.b16 %v2174
        %v2739 = vunpack.c.l.b16 %v2175
        %v2740 = vunpack.c.l.b16 %v2176
        %v2741 = vunpack.c.l.b16 %v2177
        %v2742 = vunpack.c.l.b16 %v2178
        %v2743 = vunpack.c.l.b16 %v2179
        %v2744 = vpack.c.b16 %v2737, %v2736
        %v2745 = vpack.c.b16 %v2739, %v2738
        %v2746 = vpack.c.b16 %v2741, %v2740
        %v2747 = vpack.c.b16 %v2743, %v2742
        %v2752 = vunpack.c.l.b16 %v2201
        %v2753 = vunpack.c.l.b16 %v2215
        %v2754 = vunpack.c.l.b16 %v2229
        %v2755 = vunpack.c.l.b16 %v2243
        %v2756 = vunpack.c.l.b16 %v2257
        %v2757 = vunpack.c.l.b16 %v2271
        %v2758 = vunpack.c.l.b16 %v2285
        %v2759 = vunpack.c.l.b16 %v2299
        %v2760 = vpack.c.b16 %v2753, %v2752
        %v2761 = vpack.c.b16 %v2755, %v2754
        %v2762 = vpack.c.b16 %v2757, %v2756
        %v2763 = vpack.c.b16 %v2759, %v2758
        %v2768 = vunpack.c.l.b16 %v2330
        %v2769 = vunpack.c.l.b16 %v2334
        %v2770 = vunpack.c.l.b16 %v2338
        %v2771 = vunpack.c.l.b16 %v2342
        %v2772 = vunpack.c.l.b16 %v2346
        %v2773 = vunpack.c.l.b16 %v2350
        %v2774 = vunpack.c.l.b16 %v2354
        %v2775 = vunpack.c.l.b16 %v2358
        %v2776 = vpack.c.b16 %v2769, %v2768
        %v2777 = vpack.c.b16 %v2771, %v2770
        %v2778 = vpack.c.b16 %v2773, %v2772
        %v2779 = vpack.c.b16 %v2775, %v2774
        %v2792 = vunpack.c.l.b16 %v2359
        %v2793 = vunpack.c.l.b16 %v2360
        %v2794 = vunpack.c.l.b16 %v2361
        %v2795 = vunpack.c.l.b16 %v2362
        %v2796 = vunpack.c.l.b16 %v2363
        %v2797 = vunpack.c.l.b16 %v2364
        %v2798 = vunpack.c.l.b16 %v2365
        %v2799 = vunpack.c.l.b16 %v2366
        %v2800 = vpack.c.b16 %v2793, %v2792
        %v2801 = vpack.c.b16 %v2795, %v2794
        %v2802 = vpack.c.b16 %v2797, %v2796
        %v2803 = vpack.c.b16 %v2799, %v2798
        %v2808 = vunpack.c.l.b16 %v2388
        %v2809 = vunpack.c.l.b16 %v2402
        %v2810 = vunpack.c.l.b16 %v2416
        %v2811 = vunpack.c.l.b16 %v2430
        %v2812 = vunpack.c.l.b16 %v2444
        %v2813 = vunpack.c.l.b16 %v2458
        %v2814 = vunpack.c.l.b16 %v2472
        %v2815 = vunpack.c.l.b16 %v2486
        %v2816 = vpack.c.b16 %v2809, %v2808
        %v2817 = vpack.c.b16 %v2811, %v2810
        %v2818 = vpack.c.b16 %v2813, %v2812
        %v2819 = vpack.c.b16 %v2815, %v2814
        %v2824 = vunpack.c.l.b16 %v2514
        %v2825 = vunpack.c.l.b16 %v2518
        %v2826 = vunpack.c.l.b16 %v2522
        %v2827 = vunpack.c.l.b16 %v2526
        %v2828 = vunpack.c.l.b16 %v2530
        %v2829 = vunpack.c.l.b16 %v2534
        %v2830 = vunpack.c.l.b16 %v2538
        %v2831 = vunpack.c.l.b16 %v2542
        %v2832 = vpack.c.b16 %v2825, %v2824
        %v2833 = vpack.c.b16 %v2827, %v2826
        %v2834 = vpack.c.b16 %v2829, %v2828
        %v2835 = vpack.c.b16 %v2831, %v2830
        %v2848 = vunpack.c.l.b16 %v2544
        %v2849 = vunpack.c.l.b16 %v2545
        %v2850 = vunpack.c.l.b16 %v2546
        %v2851 = vunpack.c.l.b16 %v2547
        %v2852 = vunpack.c.l.b16 %v2548
        %v2853 = vunpack.c.l.b16 %v2549
        %v2854 = vunpack.c.l.b16 %v2550
        %v2855 = vunpack.c.l.b16 %v2551
        %v2856 = vpack.c.b16 %v2849, %v2848
        %v2857 = vpack.c.b16 %v2851, %v2850
        %v2858 = vpack.c.b16 %v2853, %v2852
        %v2859 = vpack.c.b16 %v2855, %v2854
        %v2864 = vunpack.c.l.b16 %v2573
        %v2865 = vunpack.c.l.b16 %v2587
        %v2866 = vunpack.c.l.b16 %v2601
        %v2867 = vunpack.c.l.b16 %v2615
        %v2868 = vunpack.c.l.b16 %v2629
        %v2869 = vunpack.c.l.b16 %v2643
        %v2870 = vunpack.c.l.b16 %v2657
        %v2871 = vunpack.c.l.b16 %v2671
        %v2872 = vpack.c.b16 %v2865, %v2864
        %v2873 = vpack.c.b16 %v2867, %v2866
        %v2874 = vpack.c.b16 %v2869, %v2868
        %v2875 = vpack.c.b16 %v2871, %v2870
        %v2880 = vunpack.c.l.b16 %v2699
        %v2881 = vunpack.c.l.b16 %v2703
        %v2882 = vunpack.c.l.b16 %v2707
        %v2883 = vunpack.c.l.b16 %v2711
        %v2884 = vunpack.c.l.b16 %v2715
        %v2885 = vunpack.c.l.b16 %v2719
        %v2886 = vunpack.c.l.b16 %v2723
        %v2887 = vunpack.c.l.b16 %v2727
        %v2888 = vpack.c.b16 %v2881, %v2880
        %v2889 = vpack.c.b16 %v2883, %v2882
        %v2890 = vpack.c.b16 %v2885, %v2884
        %v2891 = vpack.c.b16 %v2887, %v2886
        %v2896 = vld [vmem:[#allocation3] sm:$0xf]
        %v2897 = vld [vmem:[#allocation3 + $0x4] sm:$0xf]
        %v2898 = vld [vmem:[#allocation3 + $0x8] sm:$0xf]
        %v2899 = vld [vmem:[#allocation3 + $0xc] sm:$0xf]
        %v2900 = vld [vmem:[#allocation3 + $0x10] sm:$0xf]
        %v2901 = vld [vmem:[#allocation3 + $0x14] sm:$0xf]
        %v2902 = vld [vmem:[#allocation3 + $0x18] sm:$0xf]
        %v2903 = vld [vmem:[#allocation3 + $0x1c] sm:$0xf]
        %v2904 = vld [vmem:[#allocation3 + $0x20] sm:$0xf]
        %v2905 = vld [vmem:[#allocation3 + $0x24] sm:$0xf]
        %v2906 = vld [vmem:[#allocation3 + $0x28] sm:$0xf]
        %v2907 = vld [vmem:[#allocation3 + $0x2c] sm:$0xf]
        %v2908 = vld [vmem:[#allocation3 + $0x30] sm:$0xf]
        %v2909 = vld [vmem:[#allocation3 + $0x34] sm:$0xf]
        %v2910 = vld [vmem:[#allocation3 + $0x38] sm:$0xf]
        %v2911 = vld [vmem:[#allocation3 + $0x3c] sm:$0xf]
        %v2912 = vld [vmem:[#allocation3 + $0x40] sm:$0xf]
        %v2913 = vld [vmem:[#allocation3 + $0x44] sm:$0xf]
        %v2914 = vld [vmem:[#allocation3 + $0x48] sm:$0xf]
        %v2915 = vld [vmem:[#allocation3 + $0x4c] sm:$0xf]
        %v2916 = vld [vmem:[#allocation3 + $0x50] sm:$0xf]
        %v2917 = vld [vmem:[#allocation3 + $0x54] sm:$0xf]
        %v2918 = vld [vmem:[#allocation3 + $0x58] sm:$0xf]
        %v2919 = vld [vmem:[#allocation3 + $0x5c] sm:$0xf]
        %v2920 = vld [vmem:[#allocation3 + $0x60] sm:$0xf]
        %v2921 = vld [vmem:[#allocation3 + $0x64] sm:$0xf]
        %v2922 = vld [vmem:[#allocation3 + $0x68] sm:$0xf]
        %v2923 = vld [vmem:[#allocation3 + $0x6c] sm:$0xf]
        %v2924 = vld [vmem:[#allocation3 + $0x70] sm:$0xf]
        %v2925 = vld [vmem:[#allocation3 + $0x74] sm:$0xf]
        %v2926 = vld [vmem:[#allocation3 + $0x78] sm:$0xf]
        %v2927 = vld [vmem:[#allocation3 + $0x7c] sm:$0xf]
        %v2928 = vld [vmem:[#allocation3 + $0x80] sm:$0xf]
        %v2929 = vld [vmem:[#allocation3 + $0x84] sm:$0xf]
        %v2930 = vld [vmem:[#allocation3 + $0x88] sm:$0xf]
        %v2931 = vld [vmem:[#allocation3 + $0x8c] sm:$0xf]
        %v2932 = vld [vmem:[#allocation3 + $0x90] sm:$0xf]
        %v2933 = vld [vmem:[#allocation3 + $0x94] sm:$0xf]
        %v2934 = vld [vmem:[#allocation3 + $0x98] sm:$0xf]
        %v2935 = vld [vmem:[#allocation3 + $0x9c] sm:$0xf]
        %v2936 = vld [vmem:[#allocation3 + $0xa0] sm:$0xf]
        %v2937 = vld [vmem:[#allocation3 + $0xa4] sm:$0xf]
        %v2938 = vld [vmem:[#allocation3 + $0xa8] sm:$0xf]
        %v2939 = vld [vmem:[#allocation3 + $0xac] sm:$0xf]
        %v2940 = vld [vmem:[#allocation3 + $0xb0] sm:$0xf]
        %v2941 = vld [vmem:[#allocation3 + $0xb4] sm:$0xf]
        %v2942 = vld [vmem:[#allocation3 + $0xb8] sm:$0xf]
        %v2943 = vld [vmem:[#allocation3 + $0xbc] sm:$0xf]
        %v2944 = vld [vmem:[#allocation3 + $0xc0] sm:$0xf]
        %v2945 = vld [vmem:[#allocation3 + $0xc4] sm:$0xf]
        %v2946 = vld [vmem:[#allocation3 + $0xc8] sm:$0xf]
        %v2947 = vld [vmem:[#allocation3 + $0xcc] sm:$0xf]
        %v2948 = vld [vmem:[#allocation3 + $0xd0] sm:$0xf]
        %v2949 = vld [vmem:[#allocation3 + $0xd4] sm:$0xf]
        %v2950 = vld [vmem:[#allocation3 + $0xd8] sm:$0xf]
        %v2951 = vld [vmem:[#allocation3 + $0xdc] sm:$0xf]
        %v2952 = vld [vmem:[#allocation3 + $0xe0] sm:$0xf]
        %v2953 = vld [vmem:[#allocation3 + $0xe4] sm:$0xf]
        %v2954 = vld [vmem:[#allocation3 + $0xe8] sm:$0xf]
        %v2955 = vld [vmem:[#allocation3 + $0xec] sm:$0xf]
        %v2956 = vld [vmem:[#allocation3 + $0xf0] sm:$0xf]
        %v2957 = vld [vmem:[#allocation3 + $0xf4] sm:$0xf]
        %v2958 = vld [vmem:[#allocation3 + $0xf8] sm:$0xf]
        %v2959 = vld [vmem:[#allocation3 + $0xfc] sm:$0xf]
        %v2960 = vld [vmem:[#allocation3 + $0x100] sm:$0xf]
        %v2961 = vld [vmem:[#allocation3 + $0x104] sm:$0xf]
        %v2962 = vld [vmem:[#allocation3 + $0x108] sm:$0xf]
        %v2963 = vld [vmem:[#allocation3 + $0x10c] sm:$0xf]
        %v2964 = vld [vmem:[#allocation3 + $0x110] sm:$0xf]
        %v2965 = vld [vmem:[#allocation3 + $0x114] sm:$0xf]
        %v2966 = vld [vmem:[#allocation3 + $0x118] sm:$0xf]
        %v2967 = vld [vmem:[#allocation3 + $0x11c] sm:$0xf]
        %v2968 = vld [vmem:[#allocation3 + $0x120] sm:$0xf]
        %v2969 = vld [vmem:[#allocation3 + $0x124] sm:$0xf]
        %v2970 = vld [vmem:[#allocation3 + $0x128] sm:$0xf]
        %v2971 = vld [vmem:[#allocation3 + $0x12c] sm:$0xf]
        %v2972 = vld [vmem:[#allocation3 + $0x130] sm:$0xf]
        %v2973 = vld [vmem:[#allocation3 + $0x134] sm:$0xf]
        %v2974 = vld [vmem:[#allocation3 + $0x138] sm:$0xf]
        %v2975 = vld [vmem:[#allocation3 + $0x13c] sm:$0xf]
        %v2976 = vld [vmem:[#allocation3 + $0x140] sm:$0xf]
        %v2977 = vld [vmem:[#allocation3 + $0x144] sm:$0xf]
        %v2978 = vld [vmem:[#allocation3 + $0x148] sm:$0xf]
        %v2979 = vld [vmem:[#allocation3 + $0x14c] sm:$0xf]
        %v2980 = vld [vmem:[#allocation3 + $0x150] sm:$0xf]
        %v2981 = vld [vmem:[#allocation3 + $0x154] sm:$0xf]
        %v2982 = vld [vmem:[#allocation3 + $0x158] sm:$0xf]
        %v2983 = vld [vmem:[#allocation3 + $0x15c] sm:$0xf]
        %v2984 = vld [vmem:[#allocation3 + $0x160] sm:$0xf]
        %v2985 = vld [vmem:[#allocation3 + $0x164] sm:$0xf]
        %v2986 = vld [vmem:[#allocation3 + $0x168] sm:$0xf]
        %v2987 = vld [vmem:[#allocation3 + $0x16c] sm:$0xf]
        %v2988 = vld [vmem:[#allocation3 + $0x170] sm:$0xf]
        %v2989 = vld [vmem:[#allocation3 + $0x174] sm:$0xf]
        %v2990 = vld [vmem:[#allocation3 + $0x178] sm:$0xf]
        %v2991 = vld [vmem:[#allocation3 + $0x17c] sm:$0xf]
        %v2992 = vld [vmem:[#allocation3 + $0x180] sm:$0xf]
        %v2993 = vld [vmem:[#allocation3 + $0x184] sm:$0xf]
        %v2994 = vld [vmem:[#allocation3 + $0x188] sm:$0xf]
        %v2995 = vld [vmem:[#allocation3 + $0x18c] sm:$0xf]
        %v2996 = vld [vmem:[#allocation3 + $0x190] sm:$0xf]
        %v2997 = vld [vmem:[#allocation3 + $0x194] sm:$0xf]
        %v2998 = vld [vmem:[#allocation3 + $0x198] sm:$0xf]
        %v2999 = vld [vmem:[#allocation3 + $0x19c] sm:$0xf]
        %v3000 = vld [vmem:[#allocation3 + $0x1a0] sm:$0xf]
        %v3001 = vld [vmem:[#allocation3 + $0x1a4] sm:$0xf]
        %v3002 = vld [vmem:[#allocation3 + $0x1a8] sm:$0xf]
        %v3003 = vld [vmem:[#allocation3 + $0x1ac] sm:$0xf]
        %v3004 = vld [vmem:[#allocation3 + $0x1b0] sm:$0xf]
        %v3005 = vld [vmem:[#allocation3 + $0x1b4] sm:$0xf]
        %v3006 = vld [vmem:[#allocation3 + $0x1b8] sm:$0xf]
        %v3007 = vld [vmem:[#allocation3 + $0x1bc] sm:$0xf]
        %v3008 = vld [vmem:[#allocation3 + $0x1c0] sm:$0xf]
        %v3009 = vld [vmem:[#allocation3 + $0x1c4] sm:$0xf]
        %v3010 = vld [vmem:[#allocation3 + $0x1c8] sm:$0xf]
        %v3011 = vld [vmem:[#allocation3 + $0x1cc] sm:$0xf]
        %v3012 = vld [vmem:[#allocation3 + $0x1d0] sm:$0xf]
        %v3013 = vld [vmem:[#allocation3 + $0x1d4] sm:$0xf]
        %v3014 = vld [vmem:[#allocation3 + $0x1d8] sm:$0xf]
        %v3015 = vld [vmem:[#allocation3 + $0x1dc] sm:$0xf]
        %v3016 = vld [vmem:[#allocation3 + $0x1e0] sm:$0xf]
        %v3017 = vld [vmem:[#allocation3 + $0x1e4] sm:$0xf]
        %v3018 = vld [vmem:[#allocation3 + $0x1e8] sm:$0xf]
        %v3019 = vld [vmem:[#allocation3 + $0x1ec] sm:$0xf]
        %v3020 = vld [vmem:[#allocation3 + $0x1f0] sm:$0xf]
        %v3021 = vld [vmem:[#allocation3 + $0x1f4] sm:$0xf]
        %v3022 = vld [vmem:[#allocation3 + $0x1f8] sm:$0xf]
        %v3023 = vld [vmem:[#allocation3 + $0x1fc] sm:$0xf]
        %v3024 = vld [vmem:[#allocation3 + $0x200] sm:$0xf]
        %v3025 = vld [vmem:[#allocation3 + $0x204] sm:$0xf]
        %v3026 = vld [vmem:[#allocation3 + $0x208] sm:$0xf]
        %v3027 = vld [vmem:[#allocation3 + $0x20c] sm:$0xf]
        %v3028 = vld [vmem:[#allocation3 + $0x210] sm:$0xf]
        %v3029 = vld [vmem:[#allocation3 + $0x214] sm:$0xf]
        %v3030 = vld [vmem:[#allocation3 + $0x218] sm:$0xf]
        %v3031 = vld [vmem:[#allocation3 + $0x21c] sm:$0xf]
        %v3032 = vld [vmem:[#allocation3 + $0x220] sm:$0xf]
        %v3033 = vld [vmem:[#allocation3 + $0x224] sm:$0xf]
        %v3034 = vld [vmem:[#allocation3 + $0x228] sm:$0xf]
        %v3035 = vld [vmem:[#allocation3 + $0x22c] sm:$0xf]
        %v3036 = vld [vmem:[#allocation3 + $0x230] sm:$0xf]
        %v3037 = vld [vmem:[#allocation3 + $0x234] sm:$0xf]
        %v3038 = vld [vmem:[#allocation3 + $0x238] sm:$0xf]
        %v3039 = vld [vmem:[#allocation3 + $0x23c] sm:$0xf]
        %v3040 = vld [vmem:[%s4] sm:$0x1]
        %v3042 = vlaneseq
        %v3043 = vshrl.u32 %v3042, 7
        %v3044 = vsub.s32 0, %v3043
        %v3045 = vrot.slane %v3040, %v3044
        %v3191 = vunpack.c.l.b16 %v2896
        %v3192 = vunpack.c.l.b16 %v2897
        %v3193 = vunpack.c.l.b16 %v2898
        %v3194 = vunpack.c.l.b16 %v2899
        %v3195 = vunpack.c.l.b16 %v2900
        %v3196 = vunpack.c.l.b16 %v2901
        %v3197 = vunpack.c.l.b16 %v2902
        %v3198 = vunpack.c.l.b16 %v2903
        %v3199 = vunpack.c.l.b16 %v2904
        %v3200 = vunpack.c.l.b16 %v2905
        %v3201 = vunpack.c.l.b16 %v2906
        %v3202 = vunpack.c.l.b16 %v2907
        %v3203 = vunpack.c.l.b16 %v2908
        %v3204 = vunpack.c.l.b16 %v2909
        %v3205 = vunpack.c.l.b16 %v2910
        %v3206 = vunpack.c.l.b16 %v2911
        %v3207 = vunpack.c.l.b16 %v2912
        %v3208 = vunpack.c.l.b16 %v2913
        %v3209 = vunpack.c.l.b16 %v2914
        %v3210 = vunpack.c.l.b16 %v2915
        %v3211 = vunpack.c.l.b16 %v2916
        %v3212 = vunpack.c.l.b16 %v2917
        %v3213 = vunpack.c.l.b16 %v2918
        %v3214 = vunpack.c.l.b16 %v2919
        %v3215 = vunpack.c.l.b16 %v2920
        %v3216 = vunpack.c.l.b16 %v2921
        %v3217 = vunpack.c.l.b16 %v2922
        %v3218 = vunpack.c.l.b16 %v2923
        %v3219 = vunpack.c.l.b16 %v2924
        %v3220 = vunpack.c.l.b16 %v2925
        %v3221 = vunpack.c.l.b16 %v2926
        %v3222 = vunpack.c.l.b16 %v2927
        %v3223 = vunpack.c.l.b16 %v2928
        %v3224 = vunpack.c.l.b16 %v2929
        %v3225 = vunpack.c.l.b16 %v2930
        %v3226 = vunpack.c.l.b16 %v2931
        %v3227 = vunpack.c.l.b16 %v2932
        %v3228 = vunpack.c.l.b16 %v2933
        %v3229 = vunpack.c.l.b16 %v2934
        %v3230 = vunpack.c.l.b16 %v2935
        %v3231 = vunpack.c.l.b16 %v2936
        %v3232 = vunpack.c.l.b16 %v2937
        %v3233 = vunpack.c.l.b16 %v2938
        %v3234 = vunpack.c.l.b16 %v2939
        %v3235 = vunpack.c.l.b16 %v2940
        %v3236 = vunpack.c.l.b16 %v2941
        %v3237 = vunpack.c.l.b16 %v2942
        %v3238 = vunpack.c.l.b16 %v2943
        %v3239 = vunpack.c.l.b16 %v2944
        %v3240 = vunpack.c.l.b16 %v2945
        %v3241 = vunpack.c.l.b16 %v2946
        %v3242 = vunpack.c.l.b16 %v2947
        %v3243 = vunpack.c.l.b16 %v2948
        %v3244 = vunpack.c.l.b16 %v2949
        %v3245 = vunpack.c.l.b16 %v2950
        %v3246 = vunpack.c.l.b16 %v2951
        %v3247 = vunpack.c.l.b16 %v2952
        %v3248 = vunpack.c.l.b16 %v2953
        %v3249 = vunpack.c.l.b16 %v2954
        %v3250 = vunpack.c.l.b16 %v2955
        %v3251 = vunpack.c.l.b16 %v2956
        %v3252 = vunpack.c.l.b16 %v2957
        %v3253 = vunpack.c.l.b16 %v2958
        %v3254 = vunpack.c.l.b16 %v2959
        %v3255 = vunpack.c.l.b16 %v2960
        %v3256 = vunpack.c.l.b16 %v2961
        %v3257 = vunpack.c.l.b16 %v2962
        %v3258 = vunpack.c.l.b16 %v2963
        %v3259 = vunpack.c.l.b16 %v2964
        %v3260 = vunpack.c.l.b16 %v2965
        %v3261 = vunpack.c.l.b16 %v2966
        %v3262 = vunpack.c.l.b16 %v2967
        %v3263 = vunpack.c.l.b16 %v2968
        %v3264 = vunpack.c.l.b16 %v2969
        %v3265 = vunpack.c.l.b16 %v2970
        %v3266 = vunpack.c.l.b16 %v2971
        %v3267 = vunpack.c.l.b16 %v2972
        %v3268 = vunpack.c.l.b16 %v2973
        %v3269 = vunpack.c.l.b16 %v2974
        %v3270 = vunpack.c.l.b16 %v2975
        %v3271 = vunpack.c.l.b16 %v2976
        %v3272 = vunpack.c.l.b16 %v2977
        %v3273 = vunpack.c.l.b16 %v2978
        %v3274 = vunpack.c.l.b16 %v2979
        %v3275 = vunpack.c.l.b16 %v2980
        %v3276 = vunpack.c.l.b16 %v2981
        %v3277 = vunpack.c.l.b16 %v2982
        %v3278 = vunpack.c.l.b16 %v2983
        %v3279 = vunpack.c.l.b16 %v2984
        %v3280 = vunpack.c.l.b16 %v2985
        %v3281 = vunpack.c.l.b16 %v2986
        %v3282 = vunpack.c.l.b16 %v2987
        %v3283 = vunpack.c.l.b16 %v2988
        %v3284 = vunpack.c.l.b16 %v2989
        %v3285 = vunpack.c.l.b16 %v2990
        %v3286 = vunpack.c.l.b16 %v2991
        %v3287 = vunpack.c.l.b16 %v2992
        %v3288 = vunpack.c.l.b16 %v2993
        %v3289 = vunpack.c.l.b16 %v2994
        %v3290 = vunpack.c.l.b16 %v2995
        %v3291 = vunpack.c.l.b16 %v2996
        %v3292 = vunpack.c.l.b16 %v2997
        %v3293 = vunpack.c.l.b16 %v2998
        %v3294 = vunpack.c.l.b16 %v2999
        %v3295 = vunpack.c.l.b16 %v3000
        %v3296 = vunpack.c.l.b16 %v3001
        %v3297 = vunpack.c.l.b16 %v3002
        %v3298 = vunpack.c.l.b16 %v3003
        %v3299 = vunpack.c.l.b16 %v3004
        %v3300 = vunpack.c.l.b16 %v3005
        %v3301 = vunpack.c.l.b16 %v3006
        %v3302 = vunpack.c.l.b16 %v3007
        %v3303 = vunpack.c.l.b16 %v3008
        %v3304 = vunpack.c.l.b16 %v3009
        %v3305 = vunpack.c.l.b16 %v3010
        %v3306 = vunpack.c.l.b16 %v3011
        %v3307 = vunpack.c.l.b16 %v3012
        %v3308 = vunpack.c.l.b16 %v3013
        %v3309 = vunpack.c.l.b16 %v3014
        %v3310 = vunpack.c.l.b16 %v3015
        %v3311 = vunpack.c.l.b16 %v3016
        %v3312 = vunpack.c.l.b16 %v3017
        %v3313 = vunpack.c.l.b16 %v3018
        %v3314 = vunpack.c.l.b16 %v3019
        %v3315 = vunpack.c.l.b16 %v3020
        %v3316 = vunpack.c.l.b16 %v3021
        %v3317 = vunpack.c.l.b16 %v3022
        %v3318 = vunpack.c.l.b16 %v3023
        %v3319 = vunpack.c.l.b16 %v3024
        %v3320 = vunpack.c.l.b16 %v3025
        %v3321 = vunpack.c.l.b16 %v3026
        %v3322 = vunpack.c.l.b16 %v3027
        %v3323 = vunpack.c.l.b16 %v3028
        %v3324 = vunpack.c.l.b16 %v3029
        %v3325 = vunpack.c.l.b16 %v3030
        %v3326 = vunpack.c.l.b16 %v3031
        %v3327 = vunpack.c.l.b16 %v3032
        %v3328 = vunpack.c.l.b16 %v3033
        %v3329 = vunpack.c.l.b16 %v3034
        %v3330 = vunpack.c.l.b16 %v3035
        %v3331 = vunpack.c.l.b16 %v3036
        %v3332 = vunpack.c.l.b16 %v3037
        %v3333 = vunpack.c.l.b16 %v3038
        %v3334 = vunpack.c.l.b16 %v3039
        %v3335 = vpack.c.b16 %v3192, %v3191
        %v3336 = vpack.c.b16 %v3194, %v3193
        %v3337 = vpack.c.b16 %v3196, %v3195
        %v3338 = vpack.c.b16 %v3198, %v3197
        %v3339 = vpack.c.b16 %v3200, %v3199
        %v3340 = vpack.c.b16 %v3202, %v3201
        %v3341 = vpack.c.b16 %v3204, %v3203
        %v3342 = vpack.c.b16 %v3206, %v3205
        %v3343 = vpack.c.b16 %v3208, %v3207
        %v3344 = vpack.c.b16 %v3210, %v3209
        %v3345 = vpack.c.b16 %v3212, %v3211
        %v3346 = vpack.c.b16 %v3214, %v3213
        %v3347 = vpack.c.b16 %v3216, %v3215
        %v3348 = vpack.c.b16 %v3218, %v3217
        %v3349 = vpack.c.b16 %v3220, %v3219
        %v3350 = vpack.c.b16 %v3222, %v3221
        %v3351 = vpack.c.b16 %v3224, %v3223
        %v3352 = vpack.c.b16 %v3226, %v3225
        %v3353 = vpack.c.b16 %v3228, %v3227
        %v3354 = vpack.c.b16 %v3230, %v3229
        %v3355 = vpack.c.b16 %v3232, %v3231
        %v3356 = vpack.c.b16 %v3234, %v3233
        %v3357 = vpack.c.b16 %v3236, %v3235
        %v3358 = vpack.c.b16 %v3238, %v3237
        %v3359 = vpack.c.b16 %v3240, %v3239
        %v3360 = vpack.c.b16 %v3242, %v3241
        %v3361 = vpack.c.b16 %v3244, %v3243
        %v3362 = vpack.c.b16 %v3246, %v3245
        %v3363 = vpack.c.b16 %v3248, %v3247
        %v3364 = vpack.c.b16 %v3250, %v3249
        %v3365 = vpack.c.b16 %v3252, %v3251
        %v3366 = vpack.c.b16 %v3254, %v3253
        %v3367 = vpack.c.b16 %v3256, %v3255
        %v3368 = vpack.c.b16 %v3258, %v3257
        %v3369 = vpack.c.b16 %v3260, %v3259
        %v3370 = vpack.c.b16 %v3262, %v3261
        %v3371 = vpack.c.b16 %v3264, %v3263
        %v3372 = vpack.c.b16 %v3266, %v3265
        %v3373 = vpack.c.b16 %v3268, %v3267
        %v3374 = vpack.c.b16 %v3270, %v3269
        %v3375 = vpack.c.b16 %v3272, %v3271
        %v3376 = vpack.c.b16 %v3274, %v3273
        %v3377 = vpack.c.b16 %v3276, %v3275
        %v3378 = vpack.c.b16 %v3278, %v3277
        %v3379 = vpack.c.b16 %v3280, %v3279
        %v3380 = vpack.c.b16 %v3282, %v3281
        %v3381 = vpack.c.b16 %v3284, %v3283
        %v3382 = vpack.c.b16 %v3286, %v3285
        %v3383 = vpack.c.b16 %v3288, %v3287
        %v3384 = vpack.c.b16 %v3290, %v3289
        %v3385 = vpack.c.b16 %v3292, %v3291
        %v3386 = vpack.c.b16 %v3294, %v3293
        %v3387 = vpack.c.b16 %v3296, %v3295
        %v3388 = vpack.c.b16 %v3298, %v3297
        %v3389 = vpack.c.b16 %v3300, %v3299
        %v3390 = vpack.c.b16 %v3302, %v3301
        %v3391 = vpack.c.b16 %v3304, %v3303
        %v3392 = vpack.c.b16 %v3306, %v3305
        %v3393 = vpack.c.b16 %v3308, %v3307
        %v3394 = vpack.c.b16 %v3310, %v3309
        %v3395 = vpack.c.b16 %v3312, %v3311
        %v3396 = vpack.c.b16 %v3314, %v3313
        %v3397 = vpack.c.b16 %v3316, %v3315
        %v3398 = vpack.c.b16 %v3318, %v3317
        %v3399 = vpack.c.b16 %v3320, %v3319
        %v3400 = vpack.c.b16 %v3322, %v3321
        %v3401 = vpack.c.b16 %v3324, %v3323
        %v3402 = vpack.c.b16 %v3326, %v3325
        %v3403 = vpack.c.b16 %v3328, %v3327
        %v3404 = vpack.c.b16 %v3330, %v3329
        %v3405 = vpack.c.b16 %v3332, %v3331
        %v3406 = vpack.c.b16 %v3334, %v3333
        %3479 = vmatprep.subr.bf16.mxu0 0
        %3480 = vmatpush1.bf16.msra.mxu0 %v3335
        %3481 = vmatprep.subr.bf16.mxu0 0
        %3482 = vmatpush1.bf16.msra.mxu0 %v3336
        %3483 = vmatprep.subr.bf16.mxu0 0
        %3484 = vmatpush1.bf16.msra.mxu0 %v3337
        %3485 = vmatprep.subr.bf16.mxu0 0
        %3486 = vmatpush1.bf16.msra.mxu0 %v3338
        %3487 = vmatprep.subr.bf16.mxu0 0
        %3488 = vmatpush1.bf16.msra.mxu0 %v3339
        %3489 = vmatprep.subr.bf16.mxu0 0
        %3490 = vmatpush1.bf16.msra.mxu0 %v3340
        %3491 = vmatprep.subr.bf16.mxu0 0
        %3492 = vmatpush1.bf16.msra.mxu0 %v3341
        %3493 = vmatprep.subr.bf16.mxu0 0
        %3494 = vmatpush1.bf16.msra.mxu0 %v3342
        %3495 = vmatprep.subr.bf16.mxu0 0
        %3496 = vmatpush1.bf16.msra.mxu0 %v3343
        %3497 = vmatprep.subr.bf16.mxu0 0
        %3498 = vmatpush1.bf16.msra.mxu0 %v3344
        %3499 = vmatprep.subr.bf16.mxu0 0
        %3500 = vmatpush1.bf16.msra.mxu0 %v3345
        %3501 = vmatprep.subr.bf16.mxu0 0
        %3502 = vmatpush1.bf16.msra.mxu0 %v3346
        %3503 = vmatprep.subr.bf16.mxu0 0
        %3504 = vmatpush1.bf16.msra.mxu0 %v3347
        %3505 = vmatprep.subr.bf16.mxu0 0
        %3506 = vmatpush1.bf16.msra.mxu0 %v3348
        %3507 = vmatprep.subr.bf16.mxu0 0
        %3508 = vmatpush1.bf16.msra.mxu0 %v3349
        %3509 = vmatprep.subr.bf16.mxu0 0
        %3510 = vmatpush1.bf16.msra.mxu0 %v3350
        %3511 = vmatprep.mubr.bf16.mxu0 %v2760
        %3512 = vmatmul.mubr.bf16.gmra.mrb[0].mxu0 %v2744
        %v3513 = vpop.f32.mrb[0].mxu0
        %v3514 = vadd.f32 %v3045, %v3513
        %v3515 = vpop.f32.mrb[0].mxu0
        %v3516 = vpop.f32.mrb[0].mxu0
        %v3517 = vadd.f32 %v3045, %v3516
        %v3518 = vpop.f32.mrb[0].mxu0
        %3519 = vmatprep.mubr.bf16.mxu0 %v2761
        %3520 = vmatmul.mubr.bf16.gmra.mrb[0].mxu0 %v2745
        %v3521 = vpop.f32.mrb[0].mxu0
        %v3522 = vadd.f32 %v3045, %v3521
        %v3523 = vpop.f32.mrb[0].mxu0
        %v3524 = vpop.f32.mrb[0].mxu0
        %v3525 = vadd.f32 %v3045, %v3524
        %v3526 = vpop.f32.mrb[0].mxu0
        %3527 = vmatprep.mubr.bf16.mxu0 %v2762
        %3528 = vmatmul.mubr.bf16.gmra.mrb[0].mxu0 %v2746
        %v3529 = vpop.f32.mrb[0].mxu0
        %v3530 = vadd.f32 %v3045, %v3529
        %v3531 = vpop.f32.mrb[0].mxu0
        %v3532 = vpop.f32.mrb[0].mxu0
        %v3533 = vadd.f32 %v3045, %v3532
        %v3534 = vpop.f32.mrb[0].mxu0
        %3535 = vmatprep.mubr.bf16.mxu0 %v2763
        %3536 = vmatmul.mubr.bf16.gmra.mrb[0].mxu0 %v2747
        %v3537 = vpop.f32.mrb[0].mxu0
        %v3538 = vadd.f32 %v3045, %v3537
        %v3539 = vpop.f32.mrb[0].mxu0
        %v3540 = vpop.f32.mrb[0].mxu0
        %v3541 = vadd.f32 %v3045, %v3540
        %v3542 = vpop.f32.mrb[0].mxu0
        %3543 = vdwg.mxu0
        %3544 = vmatprep.subr.bf16.mxu0 0
        %3545 = vmatpush1.bf16.msra.mxu0 %v3351
        %3546 = vmatprep.subr.bf16.mxu0 0
        %3547 = vmatpush1.bf16.msra.mxu0 %v3352
        %3548 = vmatprep.subr.bf16.mxu0 0
        %3549 = vmatpush1.bf16.msra.mxu0 %v3353
        %3550 = vmatprep.subr.bf16.mxu0 0
        %3551 = vmatpush1.bf16.msra.mxu0 %v3354
        %3552 = vmatprep.subr.bf16.mxu0 0
        %3553 = vmatpush1.bf16.msra.mxu0 %v3355
        %3554 = vmatprep.subr.bf16.mxu0 0
        %3555 = vmatpush1.bf16.msra.mxu0 %v3356
        %3556 = vmatprep.subr.bf16.mxu0 0
        %3557 = vmatpush1.bf16.msra.mxu0 %v3357
        %3558 = vmatprep.subr.bf16.mxu0 0
        %3559 = vmatpush1.bf16.msra.mxu0 %v3358
        %3560 = vmatprep.subr.bf16.mxu0 0
        %3561 = vmatpush1.bf16.msra.mxu0 %v3359
        %3562 = vmatprep.subr.bf16.mxu0 0
        %3563 = vmatpush1.bf16.msra.mxu0 %v3360
        %3564 = vmatprep.subr.bf16.mxu0 0
        %3565 = vmatpush1.bf16.msra.mxu0 %v3361
        %3566 = vmatprep.subr.bf16.mxu0 0
        %3567 = vmatpush1.bf16.msra.mxu0 %v3362
        %3568 = vmatprep.subr.bf16.mxu0 0
        %3569 = vmatpush1.bf16.msra.mxu0 %v3363
        %3570 = vmatprep.subr.bf16.mxu0 0
        %3571 = vmatpush1.bf16.msra.mxu0 %v3364
        %3572 = vmatprep.subr.bf16.mxu0 0
        %3573 = vmatpush1.bf16.msra.mxu0 %v3365
        %3574 = vmatprep.subr.bf16.mxu0 0
        %3575 = vmatpush1.bf16.msra.mxu0 %v3366
        %3576 = vmatprep.mubr.bf16.mxu0 %v2800
        %3577 = vmatmul.mubr.bf16.gmra.mrb[0].mxu0 %v2776
        %v3578 = vpop.f32.mrb[0].mxu0
        %v3579 = vadd.f32 %v3514, %v3578
        %v3580 = vpop.f32.mrb[0].mxu0
        %v3581 = vpop.f32.mrb[0].mxu0
        %v3582 = vadd.f32 %v3517, %v3581
        %v3583 = vpop.f32.mrb[0].mxu0
        %3584 = vmatprep.mubr.bf16.mxu0 %v2801
        %3585 = vmatmul.mubr.bf16.gmra.mrb[0].mxu0 %v2777
        %v3586 = vpop.f32.mrb[0].mxu0
        %v3587 = vadd.f32 %v3522, %v3586
        %v3588 = vpop.f32.mrb[0].mxu0
        %v3589 = vpop.f32.mrb[0].mxu0
        %v3590 = vadd.f32 %v3525, %v3589
        %v3591 = vpop.f32.mrb[0].mxu0
        %3592 = vmatprep.mubr.bf16.mxu0 %v2802
        %3593 = vmatmul.mubr.bf16.gmra.mrb[0].mxu0 %v2778
        %v3594 = vpop.f32.mrb[0].mxu0
        %v3595 = vadd.f32 %v3530, %v3594
        %v3596 = vpop.f32.mrb[0].mxu0
        %v3597 = vpop.f32.mrb[0].mxu0
        %v3598 = vadd.f32 %v3533, %v3597
        %v3599 = vpop.f32.mrb[0].mxu0
        %3600 = vmatprep.mubr.bf16.mxu0 %v2803
        %3601 = vmatmul.mubr.bf16.gmra.mrb[0].mxu0 %v2779
        %v3602 = vpop.f32.mrb[0].mxu0
        %v3603 = vadd.f32 %v3538, %v3602
        %v3604 = vpop.f32.mrb[0].mxu0
        %v3605 = vpop.f32.mrb[0].mxu0
        %v3606 = vadd.f32 %v3541, %v3605
        %v3607 = vpop.f32.mrb[0].mxu0
        %3608 = vdwg.mxu0
        %3609 = vmatprep.subr.bf16.mxu0 0
        %3610 = vmatpush1.bf16.msra.mxu0 %v3367
        %3611 = vmatprep.subr.bf16.mxu0 0
        %3612 = vmatpush1.bf16.msra.mxu0 %v3368
        %3613 = vmatprep.subr.bf16.mxu0 0
        %3614 = vmatpush1.bf16.msra.mxu0 %v3369
        %3615 = vmatprep.subr.bf16.mxu0 0
        %3616 = vmatpush1.bf16.msra.mxu0 %v3370
        %3617 = vmatprep.subr.bf16.mxu0 0
        %3618 = vmatpush1.bf16.msra.mxu0 %v3371
        %3619 = vmatprep.subr.bf16.mxu0 0
        %3620 = vmatpush1.bf16.msra.mxu0 %v3372
        %3621 = vmatprep.subr.bf16.mxu0 0
        %3622 = vmatpush1.bf16.msra.mxu0 %v3373
        %3623 = vmatprep.subr.bf16.mxu0 0
        %3624 = vmatpush1.bf16.msra.mxu0 %v3374
        %3625 = vmatprep.subr.bf16.mxu0 0
        %3626 = vmatpush1.bf16.msra.mxu0 %v3375
        %3627 = vmatprep.subr.bf16.mxu0 0
        %3628 = vmatpush1.bf16.msra.mxu0 %v3376
        %3629 = vmatprep.subr.bf16.mxu0 0
        %3630 = vmatpush1.bf16.msra.mxu0 %v3377
        %3631 = vmatprep.subr.bf16.mxu0 0
        %3632 = vmatpush1.bf16.msra.mxu0 %v3378
        %3633 = vmatprep.subr.bf16.mxu0 0
        %3634 = vmatpush1.bf16.msra.mxu0 %v3379
        %3635 = vmatprep.subr.bf16.mxu0 0
        %3636 = vmatpush1.bf16.msra.mxu0 %v3380
        %3637 = vmatprep.subr.bf16.mxu0 0
        %3638 = vmatpush1.bf16.msra.mxu0 %v3381
        %3639 = vmatprep.subr.bf16.mxu0 0
        %3640 = vmatpush1.bf16.msra.mxu0 %v3382
        %3641 = vmatprep.mubr.bf16.mxu0 %v2832
        %3642 = vmatmul.mubr.bf16.gmra.mrb[0].mxu0 %v2816
        %v3643 = vpop.f32.mrb[0].mxu0
        %v3644 = vadd.f32 %v3579, %v3643
        %v3645 = vpop.f32.mrb[0].mxu0
        %v3646 = vpop.f32.mrb[0].mxu0
        %v3647 = vadd.f32 %v3582, %v3646
        %v3648 = vpop.f32.mrb[0].mxu0
        %3649 = vmatprep.mubr.bf16.mxu0 %v2833
        %3650 = vmatmul.mubr.bf16.gmra.mrb[0].mxu0 %v2817
        %v3651 = vpop.f32.mrb[0].mxu0
        %v3652 = vadd.f32 %v3587, %v3651
        %v3653 = vpop.f32.mrb[0].mxu0
        %v3654 = vpop.f32.mrb[0].mxu0
        %v3655 = vadd.f32 %v3590, %v3654
        %v3656 = vpop.f32.mrb[0].mxu0
        %3657 = vmatprep.mubr.bf16.mxu0 %v2834
        %3658 = vmatmul.mubr.bf16.gmra.mrb[0].mxu0 %v2818
        %v3659 = vpop.f32.mrb[0].mxu0
        %v3660 = vadd.f32 %v3595, %v3659
        %v3661 = vpop.f32.mrb[0].mxu0
        %v3662 = vpop.f32.mrb[0].mxu0
        %v3663 = vadd.f32 %v3598, %v3662
        %v3664 = vpop.f32.mrb[0].mxu0
        %3665 = vmatprep.mubr.bf16.mxu0 %v2835
        %3666 = vmatmul.mubr.bf16.gmra.mrb[0].mxu0 %v2819
        %v3667 = vpop.f32.mrb[0].mxu0
        %v3668 = vadd.f32 %v3603, %v3667
        %v3669 = vpop.f32.mrb[0].mxu0
        %v3670 = vpop.f32.mrb[0].mxu0
        %v3671 = vadd.f32 %v3606, %v3670
        %v3672 = vpop.f32.mrb[0].mxu0
        %3673 = vdwg.mxu0
        %3674 = vmatprep.subr.bf16.mxu0 0
        %3675 = vmatpush1.bf16.msra.mxu0 %v3383
        %3676 = vmatprep.subr.bf16.mxu0 0
        %3677 = vmatpush1.bf16.msra.mxu0 %v3384
        %3678 = vmatprep.subr.bf16.mxu0 0
        %3679 = vmatpush1.bf16.msra.mxu0 %v3385
        %3680 = vmatprep.subr.bf16.mxu0 0
        %3681 = vmatpush1.bf16.msra.mxu0 %v3386
        %3682 = vmatprep.subr.bf16.mxu0 0
        %3683 = vmatpush1.bf16.msra.mxu0 %v3387
        %3684 = vmatprep.subr.bf16.mxu0 0
        %3685 = vmatpush1.bf16.msra.mxu0 %v3388
        %3686 = vmatprep.subr.bf16.mxu0 0
        %3687 = vmatpush1.bf16.msra.mxu0 %v3389
        %3688 = vmatprep.subr.bf16.mxu0 0
        %3689 = vmatpush1.bf16.msra.mxu0 %v3390
        %3690 = vmatprep.subr.bf16.mxu0 0
        %3691 = vmatpush1.bf16.msra.mxu0 %v3391
        %3692 = vmatprep.subr.bf16.mxu0 0
        %3693 = vmatpush1.bf16.msra.mxu0 %v3392
        %3694 = vmatprep.subr.bf16.mxu0 0
        %3695 = vmatpush1.bf16.msra.mxu0 %v3393
        %3696 = vmatprep.subr.bf16.mxu0 0
        %3697 = vmatpush1.bf16.msra.mxu0 %v3394
        %3698 = vmatprep.subr.bf16.mxu0 0
        %3699 = vmatpush1.bf16.msra.mxu0 %v3395
        %3700 = vmatprep.subr.bf16.mxu0 0
        %3701 = vmatpush1.bf16.msra.mxu0 %v3396
        %3702 = vmatprep.subr.bf16.mxu0 0
        %3703 = vmatpush1.bf16.msra.mxu0 %v3397
        %3704 = vmatprep.subr.bf16.mxu0 0
        %3705 = vmatpush1.bf16.msra.mxu0 %v3398
        %3706 = vmatprep.mubr.bf16.mxu0 %v2872
        %3707 = vmatmul.mubr.bf16.gmra.mrb[0].mxu0 %v2856
        %v3708 = vpop.f32.mrb[0].mxu0
        %v3709 = vadd.f32 %v3644, %v3708
        %v3710 = vpop.f32.mrb[0].mxu0
        %v3711 = vpop.f32.mrb[0].mxu0
        %v3712 = vadd.f32 %v3647, %v3711
        %v3713 = vpop.f32.mrb[0].mxu0
        %3714 = vmatprep.mubr.bf16.mxu0 %v2873
        %3715 = vmatmul.mubr.bf16.gmra.mrb[0].mxu0 %v2857
        %v3716 = vpop.f32.mrb[0].mxu0
        %v3717 = vadd.f32 %v3652, %v3716
        %v3718 = vpop.f32.mrb[0].mxu0
        %v3719 = vpop.f32.mrb[0].mxu0
        %v3720 = vadd.f32 %v3655, %v3719
        %v3721 = vpop.f32.mrb[0].mxu0
        %3722 = vmatprep.mubr.bf16.mxu0 %v2874
        %3723 = vmatmul.mubr.bf16.gmra.mrb[0].mxu0 %v2858
        %v3724 = vpop.f32.mrb[0].mxu0
        %v3725 = vadd.f32 %v3660, %v3724
        %v3726 = vpop.f32.mrb[0].mxu0
        %v3727 = vpop.f32.mrb[0].mxu0
        %v3728 = vadd.f32 %v3663, %v3727
        %v3729 = vpop.f32.mrb[0].mxu0
        %3730 = vmatprep.mubr.bf16.mxu0 %v2875
        %3731 = vmatmul.mubr.bf16.gmra.mrb[0].mxu0 %v2859
        %v3732 = vpop.f32.mrb[0].mxu0
        %v3733 = vadd.f32 %v3668, %v3732
        %v3734 = vpop.f32.mrb[0].mxu0
        %v3735 = vpop.f32.mrb[0].mxu0
        %v3736 = vadd.f32 %v3671, %v3735
        %v3737 = vpop.f32.mrb[0].mxu0
        %3738 = vdwg.mxu0
        %3739 = vmatprep.subr.bf16.mxu0 0
        %3740 = vmatpush1.bf16.msra.mxu0 %v3399
        %3741 = vmatprep.subr.bf16.mxu0 0
        %3742 = vmatpush1.bf16.msra.mxu0 %v3400
        %3743 = vmatprep.subr.bf16.mxu0 0
        %3744 = vmatpush1.bf16.msra.mxu0 %v3401
        %3745 = vmatprep.subr.bf16.mxu0 0
        %3746 = vmatpush1.bf16.msra.mxu0 %v3402
        %3747 = vmatprep.subr.bf16.mxu0 0
        %3748 = vmatpush1.bf16.msra.mxu0 %v3403
        %3749 = vmatprep.subr.bf16.mxu0 0
        %3750 = vmatpush1.bf16.msra.mxu0 %v3404
        %3751 = vmatprep.subr.bf16.mxu0 0
        %3752 = vmatpush1.bf16.msra.mxu0 %v3405
        %3753 = vmatprep.subr.bf16.mxu0 0
        %3754 = vmatpush1.bf16.msra.mxu0 %v3406
        %3755 = vmatprep.subr.bf16.mxu0 0
        %3756 = vmatpush1.bf16.msra.mxu0 0
        %3757 = vmatprep.subr.bf16.mxu0 0
        %3758 = vmatpush1.bf16.msra.mxu0 0
        %3759 = vmatprep.subr.bf16.mxu0 0
        %3760 = vmatpush1.bf16.msra.mxu0 0
        %3761 = vmatprep.subr.bf16.mxu0 0
        %3762 = vmatpush1.bf16.msra.mxu0 0
        %3763 = vmatprep.subr.bf16.mxu0 0
        %3764 = vmatpush1.bf16.msra.mxu0 0
        %3765 = vmatprep.subr.bf16.mxu0 0
        %3766 = vmatpush1.bf16.msra.mxu0 0
        %3767 = vmatprep.subr.bf16.mxu0 0
        %3768 = vmatpush1.bf16.msra.mxu0 0
        %3769 = vmatprep.subr.bf16.mxu0 0
        %3770 = vmatpush1.bf16.msra.mxu0 0
        %3771 = vmatprep.mubr.bf16.mxu0 0
        %3772 = vmatmul.mubr.bf16.gmra.mrb[0].mxu0 %v2888
        %v3773 = vpop.f32.mrb[0].mxu0
        %v3774 = vadd.f32 %v3709, %v3773
        %v3775 = vpop.f32.mrb[0].mxu0
        %v3776 = vpop.f32.mrb[0].mxu0
        %v3777 = vadd.f32 %v3712, %v3776
        %v3778 = vpop.f32.mrb[0].mxu0
        %3779 = vmatprep.mubr.bf16.mxu0 0
        %3780 = vmatmul.mubr.bf16.gmra.mrb[0].mxu0 %v2889
        %v3781 = vpop.f32.mrb[0].mxu0
        %v3782 = vadd.f32 %v3717, %v3781
        %v3783 = vpop.f32.mrb[0].mxu0
        %v3784 = vpop.f32.mrb[0].mxu0
        %v3785 = vadd.f32 %v3720, %v3784
        %v3786 = vpop.f32.mrb[0].mxu0
        %3787 = vmatprep.mubr.bf16.mxu0 0
        %3788 = vmatmul.mubr.bf16.gmra.mrb[0].mxu0 %v2890
        %v3789 = vpop.f32.mrb[0].mxu0
        %v3790 = vadd.f32 %v3725, %v3789
        %v3791 = vpop.f32.mrb[0].mxu0
        %v3792 = vpop.f32.mrb[0].mxu0
        %v3793 = vadd.f32 %v3728, %v3792
        %v3794 = vpop.f32.mrb[0].mxu0
        %3795 = vmatprep.mubr.bf16.mxu0 0
        %3796 = vmatmul.mubr.bf16.gmra.mrb[0].mxu0 %v2891
        %v3797 = vpop.f32.mrb[0].mxu0
        %v3798 = vadd.f32 %v3733, %v3797
        %v3799 = vpop.f32.mrb[0].mxu0
        %v3800 = vpop.f32.mrb[0].mxu0
        %v3801 = vadd.f32 %v3736, %v3800
        %v3802 = vpop.f32.mrb[0].mxu0
        %3803 = vdwg.mxu0
        %v3804 = vadd.f32 %v3774, %v2142
        %v3805 = vadd.f32 %v3777, %v2145
        %v3806 = vadd.f32 %v3782, %v2150
        %v3807 = vadd.f32 %v3785, %v2153
        %v3808 = vadd.f32 %v3790, %v2158
        %v3809 = vadd.f32 %v3793, %v2161
        %v3810 = vadd.f32 %v3798, %v2166
        %v3811 = vadd.f32 %v3801, %v2169
        %v3812 = vmax.f32 %v3804, 0.0
        %v3813 = vmax.f32 %v3805, 0.0
        %v3814 = vmax.f32 %v3806, 0.0
        %v3815 = vmax.f32 %v3807, 0.0
        %v3816 = vmax.f32 %v3808, 0.0
        %v3817 = vmax.f32 %v3809, 0.0
        %v3818 = vmax.f32 %v3810, 0.0
        %v3819 = vmax.f32 %v3811, 0.0
        %3820 = vst [vmem:[%s286] sm:$0xff] %v3812
        %3821 = vst [vmem:[%s286 + $0x8] sm:$0xff] %v3813
        %3822 = vst [vmem:[%s286 + $0x10] sm:$0xff] %v3814
        %3823 = vst [vmem:[%s286 + $0x18] sm:$0xff] %v3815
        %3824 = vst [vmem:[%s286 + $0x20] sm:$0xff] %v3816
        %3825 = vst [vmem:[%s286 + $0x28] sm:$0xff] %v3817
        %3826 = vst [vmem:[%s286 + $0x30] sm:$0xff] %v3818
        %3827 = vst [vmem:[%s286 + $0x38] sm:$0xff] %v3819
        %s3828 = sand.u32 %s182, 1
        %s3829 = scalar_lea.sflag [#allocation5], %s3828
        %s3830 = sand.u32 %s182, 1
        %s3831 = smul.addr %s3830, 64
        %s3832 = scalar_lea.vmem [#allocation6], %s3831
        // Predicated region
        $region53: #{tpu_custom_call.1} parent=47 // pred_check
          %p3833 = pneg %p192
        $region54: #{tpu_custom_call.1} parent=47 // pred_check_branch
          %3835 = sbr.rel (%p3833) target = $region56
        $region55: #{tpu_custom_call.1} parent=47 // pred_region
          %s3837 = ssub.s32 1024, 1024
          %3838 = vsyncadd %s3829, %s3837
          %s3839 = smul.addr %s22, 8
          %s3840 = smul.addr %s3839, 128
          %s3841 = scalar_lea.hbm %s7, %s3840
          %s3842 = sshll.u32 %s3832, 4
          %s3843 = int_to_ptr.vmem [resolvable:$true] %s3842
          %3848 = dma.vmem_to_hbm [thread:$0]  %s3843, 1024, %s3841, %s3829, 128, 128, 8
        $region56: #{tpu_custom_call.1} parent=47 // pred_fallthru
          _
      $region48: #{tpu_custom_call.1} parent=5 // pred_fallthru
        _
      %p3849 = scmp.le.s32.totalorder 2, %s17
      // Predicated region
      $region57: #{tpu_custom_call.1} parent=5 // pred_check
        %p3850 = pneg %p3849
      $region58: #{tpu_custom_call.1} parent=5 // pred_check_branch
        %3852 = sbr.rel (%p3850) target = $region60
      $region59: #{tpu_custom_call.1} parent=5 // pred_region
        %s3853 = ssub.s32 %s17, 2
        // Predicated region
        $region61: #{tpu_custom_call.1} parent=59 // pred_check
          %p3854 = pneg %p198
        $region62: #{tpu_custom_call.1} parent=59 // pred_check_branch
          %3856 = sbr.rel (%p3854) target = $region64
        $region63: #{tpu_custom_call.1} parent=59 // pred_region
          %s3857 = sand.u32 %s183, 1
          %s3858 = scalar_lea.sflag [#allocation5], %s3857
          %s3859 = sand.u32 %s183, 1
          %s3860 = smul.addr %s3859, 64
          %s3861 = scalar_lea.vmem [#allocation6], %s3860
          %3862 = dma.done %s3858, 1024
        $region64: #{tpu_custom_call.1} parent=59 // pred_fallthru
          _
      $region60: #{tpu_custom_call.1} parent=5 // pred_fallthru
        _
    $region6: #{tpu_custom_call.1} parent=1 // loop_footer
      %s21 = sadd.s32 1, %s17
    $region7: #{tpu_custom_call.1} parent=1 // loop_footer_branch
      %16 = sbr.rel target = $region3
    $region8: #{tpu_custom_call.1} parent=1 // loop_exit
      _
    %3863 = vsyncpa [#allocation4], 1
    %s3864 = scalar_lea.sflag [#allocation4], 1
    %3865 = vsyncpa %s3864, 1
    %3866 = vsyncpa [#allocation5], 1
    %s3867 = scalar_lea.sflag [#allocation5], 1
    %3868 = vsyncpa %s3867, 1

</llo_original>
